<compile_context>
chip_gen: v6e
topology: v6e:2x2x1
jax: 0.10.0
libtpu: 0.0.40
codegen_flags: <defaults>
</compile_context>

<pallas_src>
import functools

import jax
import jax.numpy as jnp
from jax.experimental import pallas as pl
from jax.experimental.pallas import tpu as pltpu

D_MODEL = 32
N_HEADS = 4
D_HEAD = D_MODEL // N_HEADS
D_FF = 64
EPS = 1e-6          # LayerNormalization eps from the reference implementation
LANES = 128

# ---- bf16 weight slab layout: (W_ROWS, 128), each weight at [row:row+r, 0:c] ----
W_SA_QKV = 0        # (32, 96)  W_q | W_k | W_v   (self-attention)
W_SA_O   = 32       # (32, 32)  W_o               (self-attention)
W_CA_Q   = 64       # (32, 32)  W_q               (cross-attention)
W_CA_KV  = 96       # (32, 64)  W_k | W_v         (cross-attention)
W_CA_O   = 128      # (32, 32)  W_o               (cross-attention)
W_FF1    = 160      # (32, 64)  FFN linear 1
W_FF2    = 192      # (64, 32)  FFN linear 2
W_ROWS   = 256

# ---- f32 vector slab layout: (V_ROWS, 128), one parameter vector per row ----
V_LN0_A, V_LN0_B = 0, 1
V_SA_BQKV = 2       # 96 lanes
V_SA_BO = 3
V_LN1_A, V_LN1_B = 4, 5
V_CA_BQ = 6
V_CA_BKV = 7        # 64 lanes
V_CA_BO = 8
V_LN2_A, V_LN2_B = 9, 10
V_FF_B1 = 11        # 64 lanes
V_FF_B2 = 12
V_ROWS = 16


# --------------------------------------------------------------------------
# In-kernel helpers (operate on loaded VMEM values)
# --------------------------------------------------------------------------
def _layer_norm(t, alpha, beta):
    # Reference: alpha * (x - mean) / (std + eps) + bias, with *unbiased* std
    # (torch.Tensor.std default).  Divide goes through the EUP reciprocal.
    mean = jnp.mean(t, axis=-1, keepdims=True)
    d = t - mean
    var = jnp.sum(d * d, axis=-1, keepdims=True) * (1.0 / (t.shape[-1] - 1))
    inv = pl.reciprocal(jnp.sqrt(var) + EPS, approx=True)
    return alpha * d * inv + beta


def _mha(q, k, v, masks, w_o, b_o, B, S_q, S_kv):
    """Multi-head attention + output projection, batch/head loops fully unrolled.

    q: (B*S_q, D) f32, k/v: (B*S_kv, D) f32, masks: (B, S_q, S_kv) (0 = masked),
    w_o: (D, D) bf16, b_o: (1, D) f32.  The per-head context is folded straight into the
    output projection so intermediates stay (S, D)-shaped; no (8,8) tiles are stored.
    """
    scale = 1.0 / (D_HEAD ** 0.5)
    outs = []
    for b in range(B):                                     # unrolled (B = 2)
        # Additive mask: 0 where keep, -1e9 where masked (equivalent to
        # masked_fill(mask == 0, -1e9) for the 0/1 masks of the reference).
        bias = (masks[b].astype(jnp.float32) - 1.0) * 1e9   # (S_q, S_kv)
        qb = q[b * S_q:(b + 1) * S_q].astype(jnp.bfloat16)
        kb = k[b * S_kv:(b + 1) * S_kv].astype(jnp.bfloat16)
        vb = v[b * S_kv:(b + 1) * S_kv].astype(jnp.bfloat16)
        acc = jnp.zeros((S_q, D_MODEL), jnp.float32)
        for h in range(N_HEADS):                            # unrolled (N_HEADS = 4)
            lo = h * D_HEAD
            # scores = q_h @ k_h^T  (contract last dims; bf16 in, f32 accumulate)
            s = jax.lax.dot_general(qb[:, lo:lo + D_HEAD], kb[:, lo:lo + D_HEAD],
                                    (((1,), (1,)), ((), ())),
                                    preferred_element_type=jnp.float32)
            s = s * scale + bias
            s = s - jnp.max(s, axis=-1, keepdims=True)
            p = jnp.exp(s)
            p = p * pl.reciprocal(jnp.sum(p, axis=-1, keepdims=True), approx=True)
            ctx = jnp.dot(p.astype(jnp.bfloat16), vb[:, lo:lo + D_HEAD],
                          preferred_element_type=jnp.float32)            # (S_q, D_HEAD)
            acc = acc + jnp.dot(ctx.astype(jnp.bfloat16), w_o[lo:lo + D_HEAD, :],
                                preferred_element_type=jnp.float32)      # (S_q, D)
        outs.append(acc)
    out = jnp.concatenate(outs, axis=0) if B > 1 else outs[0]
    return out + b_o


# --------------------------------------------------------------------------
# Fused decoder-block kernel: one invocation, whole batch.
# --------------------------------------------------------------------------
def _decoder_block_kernel(x_ref, enc_ref, tmask_ref, smask_ref, w_ref, v_ref, o_ref,
                          *, B, S_tgt, S_src):
    D = D_MODEL
    x = x_ref[...]                    # (B*S_tgt, D) f32
    enc = enc_ref[...]                # (B*S_src, D) f32
    tmask = tmask_ref[...]            # (B, S_tgt, S_tgt)
    smask = smask_ref[...]            # (B, S_tgt, S_src)

    def vrow(row, n):                 # (1, n) f32 parameter vector
        return v_ref[row:row + 1, 0:n]

    def wmat(row, r, c):              # (r, c) bf16 weight matrix
        return w_ref[row:row + r, 0:c]

    # --- residual_connections[0]: x + self_attn(norm(x), norm(x), norm(x), tgt_mask)
    h = _layer_norm(x, vrow(V_LN0_A, D), vrow(V_LN0_B, D))
    qkv = jnp.dot(h.astype(jnp.bfloat16), wmat(W_SA_QKV, D, 3 * D),
                  preferred_element_type=jnp.float32) + vrow(V_SA_BQKV, 3 * D)
    x = x + _mha(qkv[:, 0:D], qkv[:, D:2 * D], qkv[:, 2 * D:3 * D], tmask,
                 wmat(W_SA_O, D, D), vrow(V_SA_BO, D), B, S_tgt, S_tgt)

    # --- residual_connections[1]: x + cross_attn(norm(x), enc, enc, src_mask)
    h = _layer_norm(x, vrow(V_LN1_A, D), vrow(V_LN1_B, D))
    q = jnp.dot(h.astype(jnp.bfloat16), wmat(W_CA_Q, D, D),
                preferred_element_type=jnp.float32) + vrow(V_CA_BQ, D)
    kv = jnp.dot(enc.astype(jnp.bfloat16), wmat(W_CA_KV, D, 2 * D),
                 preferred_element_type=jnp.float32) + vrow(V_CA_BKV, 2 * D)
    x = x + _mha(q, kv[:, 0:D], kv[:, D:2 * D], smask,
                 wmat(W_CA_O, D, D), vrow(V_CA_BO, D), B, S_tgt, S_src)

    # --- residual_connections[2]: x + ffn(norm(x))   (linear -> ReLU -> linear)
    h = _layer_norm(x, vrow(V_LN2_A, D), vrow(V_LN2_B, D))
    f = jnp.dot(h.astype(jnp.bfloat16), wmat(W_FF1, D, D_FF),
                preferred_element_type=jnp.float32) + vrow(V_FF_B1, D_FF)
    f = jnp.maximum(f, 0.0)
    x = x + jnp.dot(f.astype(jnp.bfloat16), wmat(W_FF2, D_FF, D),
                    preferred_element_type=jnp.float32) + vrow(V_FF_B2, D)

    o_ref[...] = x


def decoder_block(x, encoder_output, src_mask, tgt_mask, w_slab, v_slab):
    B, S_tgt, D = x.shape
    S_src = encoder_output.shape[1]
    assert D == D_MODEL
    assert w_slab.shape == (W_ROWS, LANES) and v_slab.shape == (V_ROWS, LANES)

    x2 = x.reshape(B * S_tgt, D).astype(jnp.float32)
    enc2 = encoder_output.reshape(B * S_src, D).astype(jnp.float32)
    tmask = tgt_mask.reshape(B, S_tgt, S_tgt).astype(jnp.float32)
    smask = src_mask.reshape(B, S_tgt, S_src).astype(jnp.float32)

    kernel = functools.partial(_decoder_block_kernel, B=B, S_tgt=S_tgt, S_src=S_src)

    # Advisory cost hint for XLA's scheduler (cheap, helps when stacked N layers deep).
    def mm(m, k, n):
        return 2 * m * k * n
    bs, be = B * S_tgt, B * S_src
    flops = (mm(bs, D, 3 * D) + mm(bs, D, D) + mm(be, D, 2 * D) + 2 * mm(bs, D, D)
             + B * N_HEADS * (mm(S_tgt, D_HEAD, S_tgt) + mm(S_tgt, S_tgt, D_HEAD))
             + B * N_HEADS * (mm(S_tgt, D_HEAD, S_src) + mm(S_tgt, S_src, D_HEAD))
             + mm(bs, D, D_FF) + mm(bs, D_FF, D))
    transcendentals = B * N_HEADS * S_tgt * (S_tgt + S_src) + 9 * bs
    bytes_accessed = (x2.size + enc2.size + tmask.size + smask.size + v_slab.size
                      + bs * D) * 4 + w_slab.size * 2

    vmem = pl.BlockSpec(memory_space=pltpu.MemorySpace.VMEM)
    out = pl.pallas_call(
        kernel,
        out_shape=jax.ShapeDtypeStruct((B * S_tgt, D), jnp.float32),
        in_specs=[vmem] * 6,
        out_specs=vmem,
        cost_estimate=pl.CostEstimate(flops=flops, transcendentals=transcendentals,
                                      bytes_accessed=bytes_accessed),
    )(x2, enc2, tmask, smask, w_slab, v_slab)
    return out.reshape(B, S_tgt, D)


# --------------------------------------------------------------------------
# Parameter init + one-time prepack into the two slabs
# --------------------------------------------------------------------------
def init_params(key):
    def attn_params(k):
        ks = jax.random.split(k, 4)
        p = {}
        for name, kk in zip(("q", "k", "v", "o"), ks):
            p["w_" + name] = (jax.random.normal(kk, (D_MODEL, D_MODEL), jnp.float32)
                              * (1.0 / D_MODEL ** 0.5))
            p["b_" + name] = jnp.zeros((D_MODEL,), jnp.float32)
        return p

    k_sa, k_ca, k_f1, k_f2 = jax.random.split(key, 4)
    return {
        "self_attn": attn_params(k_sa),
        "cross_attn": attn_params(k_ca),
        "ffn": {
            "w1": jax.random.normal(k_f1, (D_MODEL, D_FF), jnp.float32) * (1.0 / D_MODEL ** 0.5),
            "b1": jnp.zeros((D_FF,), jnp.float32),
            "w2": jax.random.normal(k_f2, (D_FF, D_MODEL), jnp.float32) * (1.0 / D_FF ** 0.5),
            "b2": jnp.zeros((D_MODEL,), jnp.float32),
        },
        "ln0_a": jnp.ones((D_MODEL,), jnp.float32), "ln0_b": jnp.zeros((D_MODEL,), jnp.float32),
        "ln1_a": jnp.ones((D_MODEL,), jnp.float32), "ln1_b": jnp.zeros((D_MODEL,), jnp.float32),
        "ln2_a": jnp.ones((D_MODEL,), jnp.float32), "ln2_b": jnp.zeros((D_MODEL,), jnp.float32),
    }


def prepack_params(params):
    """One-time packing: bf16 weight slab (W_ROWS,128) + f32 vector slab (V_ROWS,128)."""
    sa, ca, ff = params["self_attn"], params["cross_attn"], params["ffn"]

    w = jnp.zeros((W_ROWS, LANES), jnp.float32)

    def put(slab, row, mat):
        r, c = mat.shape
        return slab.at[row:row + r, 0:c].set(mat)

    w = put(w, W_SA_QKV, jnp.concatenate([sa["w_q"], sa["w_k"], sa["w_v"]], axis=1))
    w = put(w, W_SA_O, sa["w_o"])
    w = put(w, W_CA_Q, ca["w_q"])
    w = put(w, W_CA_KV, jnp.concatenate([ca["w_k"], ca["w_v"]], axis=1))
    w = put(w, W_CA_O, ca["w_o"])
    w = put(w, W_FF1, ff["w1"])
    w = put(w, W_FF2, ff["w2"])

    v = jnp.zeros((V_ROWS, LANES), jnp.float32)

    def putv(slab, row, vec):
        return slab.at[row, 0:vec.shape[0]].set(vec)

    v = putv(v, V_LN0_A, params["ln0_a"]); v = putv(v, V_LN0_B, params["ln0_b"])
    v = putv(v, V_SA_BQKV, jnp.concatenate([sa["b_q"], sa["b_k"], sa["b_v"]]))
    v = putv(v, V_SA_BO, sa["b_o"])
    v = putv(v, V_LN1_A, params["ln1_a"]); v = putv(v, V_LN1_B, params["ln1_b"])
    v = putv(v, V_CA_BQ, ca["b_q"])
    v = putv(v, V_CA_BKV, jnp.concatenate([ca["b_k"], ca["b_v"]]))
    v = putv(v, V_CA_BO, ca["b_o"])
    v = putv(v, V_LN2_A, params["ln2_a"]); v = putv(v, V_LN2_B, params["ln2_b"])
    v = putv(v, V_FF_B1, ff["b1"]); v = putv(v, V_FF_B2, ff["b2"])

    return w.astype(jnp.bfloat16), v


if __name__ == "__main__":
    key = jax.random.PRNGKey(0)
    k_params, k_x, k_enc = jax.random.split(key, 3)

    B, S_TGT, S_SRC = 2, 8, 8
    params = init_params(k_params)
    w_slab, v_slab = prepack_params(params)

    x = jax.random.normal(k_x, (B, S_TGT, D_MODEL), jnp.float32)
    encoder_output = jax.random.normal(k_enc, (B, S_SRC, D_MODEL), jnp.float32)
    # causal target mask (B, 1, S_tgt, S_tgt); full-attend source mask (B, 1, S_tgt, S_src)
    tgt_mask = jnp.broadcast_to(
        jnp.tril(jnp.ones((S_TGT, S_TGT), jnp.float32))[None, None],
        (B, 1, S_TGT, S_TGT))
    src_mask = jnp.ones((B, 1, S_TGT, S_SRC), jnp.float32)

    fwd = jax.jit(functools.partial(decoder_block, w_slab=w_slab, v_slab=v_slab))
    out = fwd(x, encoder_output, src_mask, tgt_mask)
    jax.block_until_ready(out)
    assert out.shape == (B, S_TGT, D_MODEL)
    print("KERNEL_OK")
</pallas_src>

<mosaic_0001>
module attributes {stable_mosaic.version = 11 : i64} {
  func.func @_decoder_block_kernel(%arg0: memref<16x32xf32, #tpu.memory_space<vmem>>, %arg1: memref<16x32xf32, #tpu.memory_space<vmem>>, %arg2: memref<2x8x8xf32, #tpu.memory_space<vmem>>, %arg3: memref<2x8x8xf32, #tpu.memory_space<vmem>>, %arg4: memref<256x128xbf16, #tpu.memory_space<vmem>>, %arg5: memref<16x128xf32, #tpu.memory_space<vmem>>, %arg6: memref<16x32xf32, #tpu.memory_space<vmem>>) attributes {dimension_semantics = [], scalar_prefetch = 0 : i64, scratch_operands = 0 : i64, tpu.core_type = #tpu.core_type<tc>} {
    %c0 = arith.constant 0 : index
    %c0_0 = arith.constant 0 : index
    %0 = vector.load %arg0[%c0, %c0_0] : memref<16x32xf32, #tpu.memory_space<vmem>>, vector<16x32xf32>
    %c0_1 = arith.constant 0 : index
    %c0_2 = arith.constant 0 : index
    %1 = vector.load %arg1[%c0_1, %c0_2] : memref<16x32xf32, #tpu.memory_space<vmem>>, vector<16x32xf32>
    %c0_3 = arith.constant 0 : index
    %c0_4 = arith.constant 0 : index
    %c0_5 = arith.constant 0 : index
    %2 = vector.load %arg2[%c0_3, %c0_4, %c0_5] : memref<2x8x8xf32, #tpu.memory_space<vmem>>, vector<2x8x8xf32>
    %c0_6 = arith.constant 0 : index
    %c0_7 = arith.constant 0 : index
    %c0_8 = arith.constant 0 : index
    %3 = vector.load %arg3[%c0_6, %c0_7, %c0_8] : memref<2x8x8xf32, #tpu.memory_space<vmem>>, vector<2x8x8xf32>
    %c0_9 = arith.constant 0 : index
    %c0_10 = arith.constant 0 : index
    %4 = vector.load %arg5[%c0_9, %c0_10] : memref<16x128xf32, #tpu.memory_space<vmem>>, vector<1x32xf32>
    %c1 = arith.constant 1 : index
    %c0_11 = arith.constant 0 : index
    %5 = vector.load %arg5[%c1, %c0_11] : memref<16x128xf32, #tpu.memory_space<vmem>>, vector<1x32xf32>
    %cst = arith.constant dense<0.000000e+00> : vector<16xf32>
    %6 = vector.multi_reduction <add>, %0, %cst [1] : vector<16x32xf32> to vector<16xf32>
    %7 = vector.shape_cast %6 : vector<16xf32> to vector<16x1xf32>
    %cst_12 = arith.constant 3.200000e+01 : f32
    %8 = vector.broadcast %cst_12 : f32 to vector<16x1xf32>
    %9 = arith.divf %7, %8 : vector<16x1xf32>
    %10 = vector.broadcast %9 : vector<16x1xf32> to vector<16x32xf32>
    %11 = arith.subf %0, %10 : vector<16x32xf32>
    %12 = arith.mulf %11, %11 : vector<16x32xf32>
    %cst_13 = arith.constant dense<0.000000e+00> : vector<16xf32>
    %13 = vector.multi_reduction <add>, %12, %cst_13 [1] : vector<16x32xf32> to vector<16xf32>
    %14 = vector.shape_cast %13 : vector<16xf32> to vector<16x1xf32>
    %cst_14 = arith.constant 0.0322580636 : f32
    %15 = vector.broadcast %cst_14 : f32 to vector<16x1xf32>
    %16 = arith.mulf %14, %15 : vector<16x1xf32>
    %17 = math.sqrt %16 : vector<16x1xf32>
    %cst_15 = arith.constant 9.99999997E-7 : f32
    %18 = vector.broadcast %cst_15 : f32 to vector<16x1xf32>
    %19 = arith.addf %17, %18 : vector<16x1xf32>
    %20 = tpu.reciprocal %19 {approx = true} : vector<16x1xf32> -> vector<16x1xf32>
    %21 = vector.broadcast %4 : vector<1x32xf32> to vector<16x32xf32>
    %22 = arith.mulf %21, %11 : vector<16x32xf32>
    %23 = vector.broadcast %20 : vector<16x1xf32> to vector<16x32xf32>
    %24 = arith.mulf %22, %23 : vector<16x32xf32>
    %25 = vector.broadcast %5 : vector<1x32xf32> to vector<16x32xf32>
    %26 = arith.addf %24, %25 : vector<16x32xf32>
    %27 = arith.truncf %26 : vector<16x32xf32> to vector<16x32xbf16>
    %c0_16 = arith.constant 0 : index
    %c0_17 = arith.constant 0 : index
    %28 = vector.load %arg4[%c0_16, %c0_17] : memref<256x128xbf16, #tpu.memory_space<vmem>>, vector<32x96xbf16>
    %cst_18 = arith.constant dense<0.000000e+00> : vector<16x96xf32>
    %29 = tpu.matmul %27, %28, %cst_18 {dimension_numbers = #tpu.dot_dimension_numbers<[1], [0], [0], [1], [0, 0, 1, 1], [], []>} : vector<16x32xbf16>, vector<32x96xbf16>, vector<16x96xf32> -> vector<16x96xf32>
    %c2 = arith.constant 2 : index
    %c0_19 = arith.constant 0 : index
    %30 = vector.load %arg5[%c2, %c0_19] : memref<16x128xf32, #tpu.memory_space<vmem>>, vector<1x96xf32>
    %31 = vector.broadcast %30 : vector<1x96xf32> to vector<16x96xf32>
    %32 = arith.addf %29, %31 : vector<16x96xf32>
    %33 = vector.extract_strided_slice %32 {offsets = [0, 0], sizes = [16, 32], strides = [1, 1]} : vector<16x96xf32> to vector<16x32xf32>
    %34 = vector.extract_strided_slice %32 {offsets = [0, 32], sizes = [16, 32], strides = [1, 1]} : vector<16x96xf32> to vector<16x32xf32>
    %35 = vector.extract_strided_slice %32 {offsets = [0, 64], sizes = [16, 32], strides = [1, 1]} : vector<16x96xf32> to vector<16x32xf32>
    %c32 = arith.constant 32 : index
    %c0_20 = arith.constant 0 : index
    %36 = vector.load %arg4[%c32, %c0_20] : memref<256x128xbf16, #tpu.memory_space<vmem>>, vector<32x32xbf16>
    %c3 = arith.constant 3 : index
    %c0_21 = arith.constant 0 : index
    %37 = vector.load %arg5[%c3, %c0_21] : memref<16x128xf32, #tpu.memory_space<vmem>>, vector<1x32xf32>
    %38 = vector.extract_strided_slice %2 {offsets = [0, 0, 0], sizes = [1, 8, 8], strides = [1, 1, 1]} : vector<2x8x8xf32> to vector<1x8x8xf32>
    %39 = vector.shape_cast %38 : vector<1x8x8xf32> to vector<8x8xf32>
    %cst_22 = arith.constant 1.000000e+00 : f32
    %40 = vector.broadcast %cst_22 : f32 to vector<8x8xf32>
    %41 = arith.subf %39, %40 : vector<8x8xf32>
    %cst_23 = arith.constant 1.000000e+09 : f32
    %42 = vector.broadcast %cst_23 : f32 to vector<8x8xf32>
    %43 = arith.mulf %41, %42 : vector<8x8xf32>
    %44 = vector.extract_strided_slice %33 {offsets = [0, 0], sizes = [8, 32], strides = [1, 1]} : vector<16x32xf32> to vector<8x32xf32>
    %45 = arith.truncf %44 : vector<8x32xf32> to vector<8x32xbf16>
    %46 = vector.extract_strided_slice %34 {offsets = [0, 0], sizes = [8, 32], strides = [1, 1]} : vector<16x32xf32> to vector<8x32xf32>
    %47 = arith.truncf %46 : vector<8x32xf32> to vector<8x32xbf16>
    %48 = vector.extract_strided_slice %35 {offsets = [0, 0], sizes = [8, 32], strides = [1, 1]} : vector<16x32xf32> to vector<8x32xf32>
    %49 = arith.truncf %48 : vector<8x32xf32> to vector<8x32xbf16>
    %cst_24 = arith.constant 0.000000e+00 : f32
    %50 = vector.broadcast %cst_24 : f32 to vector<8x32xf32>
    %51 = vector.extract_strided_slice %45 {offsets = [0, 0], sizes = [8, 8], strides = [1, 1]} : vector<8x32xbf16> to vector<8x8xbf16>
    %52 = vector.extract_strided_slice %47 {offsets = [0, 0], sizes = [8, 8], strides = [1, 1]} : vector<8x32xbf16> to vector<8x8xbf16>
    %cst_25 = arith.constant dense<0.000000e+00> : vector<8x8xf32>
    %53 = tpu.matmul %51, %52, %cst_25 {dimension_numbers = #tpu.dot_dimension_numbers<[1], [1], [0], [0], [0, 0, 1, 0], [], []>} : vector<8x8xbf16>, vector<8x8xbf16>, vector<8x8xf32> -> vector<8x8xf32>
    %cst_26 = arith.constant 0.353553385 : f32
    %54 = vector.broadcast %cst_26 : f32 to vector<8x8xf32>
    %55 = arith.mulf %53, %54 : vector<8x8xf32>
    %56 = arith.addf %55, %43 : vector<8x8xf32>
    %cst_27 = arith.constant dense<0xFF800000> : vector<8xf32>
    %57 = vector.multi_reduction <maximumf>, %56, %cst_27 [1] : vector<8x8xf32> to vector<8xf32>
    %58 = vector.shape_cast %57 : vector<8xf32> to vector<8x1xf32>
    %59 = vector.broadcast %58 : vector<8x1xf32> to vector<8x8xf32>
    %60 = arith.subf %56, %59 : vector<8x8xf32>
    %61 = math.exp %60 : vector<8x8xf32>
    %cst_28 = arith.constant dense<0.000000e+00> : vector<8xf32>
    %62 = vector.multi_reduction <add>, %61, %cst_28 [1] : vector<8x8xf32> to vector<8xf32>
    %63 = vector.shape_cast %62 : vector<8xf32> to vector<8x1xf32>
    %64 = tpu.reciprocal %63 {approx = true} : vector<8x1xf32> -> vector<8x1xf32>
    %65 = vector.broadcast %64 : vector<8x1xf32> to vector<8x8xf32>
    %66 = arith.mulf %61, %65 : vector<8x8xf32>
    %67 = arith.truncf %66 : vector<8x8xf32> to vector<8x8xbf16>
    %68 = vector.extract_strided_slice %49 {offsets = [0, 0], sizes = [8, 8], strides = [1, 1]} : vector<8x32xbf16> to vector<8x8xbf16>
    %cst_29 = arith.constant dense<0.000000e+00> : vector<8x8xf32>
    %69 = tpu.matmul %67, %68, %cst_29 {dimension_numbers = #tpu.dot_dimension_numbers<[1], [0], [0], [1], [0, 0, 1, 1], [], []>} : vector<8x8xbf16>, vector<8x8xbf16>, vector<8x8xf32> -> vector<8x8xf32>
    %70 = arith.truncf %69 : vector<8x8xf32> to vector<8x8xbf16>
    %71 = vector.extract_strided_slice %36 {offsets = [0, 0], sizes = [8, 32], strides = [1, 1]} : vector<32x32xbf16> to vector<8x32xbf16>
    %cst_30 = arith.constant dense<0.000000e+00> : vector<8x32xf32>
    %72 = tpu.matmul %70, %71, %cst_30 {dimension_numbers = #tpu.dot_dimension_numbers<[1], [0], [0], [1], [0, 0, 1, 1], [], []>} : vector<8x8xbf16>, vector<8x32xbf16>, vector<8x32xf32> -> vector<8x32xf32>
    %73 = arith.addf %50, %72 : vector<8x32xf32>
    %74 = vector.extract_strided_slice %45 {offsets = [0, 8], sizes = [8, 8], strides = [1, 1]} : vector<8x32xbf16> to vector<8x8xbf16>
    %75 = vector.extract_strided_slice %47 {offsets = [0, 8], sizes = [8, 8], strides = [1, 1]} : vector<8x32xbf16> to vector<8x8xbf16>
    %cst_31 = arith.constant dense<0.000000e+00> : vector<8x8xf32>
    %76 = tpu.matmul %74, %75, %cst_31 {dimension_numbers = #tpu.dot_dimension_numbers<[1], [1], [0], [0], [0, 0, 1, 0], [], []>} : vector<8x8xbf16>, vector<8x8xbf16>, vector<8x8xf32> -> vector<8x8xf32>
    %cst_32 = arith.constant 0.353553385 : f32
    %77 = vector.broadcast %cst_32 : f32 to vector<8x8xf32>
    %78 = arith.mulf %76, %77 : vector<8x8xf32>
    %79 = arith.addf %78, %43 : vector<8x8xf32>
    %cst_33 = arith.constant dense<0xFF800000> : vector<8xf32>
    %80 = vector.multi_reduction <maximumf>, %79, %cst_33 [1] : vector<8x8xf32> to vector<8xf32>
    %81 = vector.shape_cast %80 : vector<8xf32> to vector<8x1xf32>
    %82 = vector.broadcast %81 : vector<8x1xf32> to vector<8x8xf32>
    %83 = arith.subf %79, %82 : vector<8x8xf32>
    %84 = math.exp %83 : vector<8x8xf32>
    %cst_34 = arith.constant dense<0.000000e+00> : vector<8xf32>
    %85 = vector.multi_reduction <add>, %84, %cst_34 [1] : vector<8x8xf32> to vector<8xf32>
    %86 = vector.shape_cast %85 : vector<8xf32> to vector<8x1xf32>
    %87 = tpu.reciprocal %86 {approx = true} : vector<8x1xf32> -> vector<8x1xf32>
    %88 = vector.broadcast %87 : vector<8x1xf32> to vector<8x8xf32>
    %89 = arith.mulf %84, %88 : vector<8x8xf32>
    %90 = arith.truncf %89 : vector<8x8xf32> to vector<8x8xbf16>
    %91 = vector.extract_strided_slice %49 {offsets = [0, 8], sizes = [8, 8], strides = [1, 1]} : vector<8x32xbf16> to vector<8x8xbf16>
    %cst_35 = arith.constant dense<0.000000e+00> : vector<8x8xf32>
    %92 = tpu.matmul %90, %91, %cst_35 {dimension_numbers = #tpu.dot_dimension_numbers<[1], [0], [0], [1], [0, 0, 1, 1], [], []>} : vector<8x8xbf16>, vector<8x8xbf16>, vector<8x8xf32> -> vector<8x8xf32>
    %93 = arith.truncf %92 : vector<8x8xf32> to vector<8x8xbf16>
    %94 = vector.extract_strided_slice %36 {offsets = [8, 0], sizes = [8, 32], strides = [1, 1]} : vector<32x32xbf16> to vector<8x32xbf16>
    %cst_36 = arith.constant dense<0.000000e+00> : vector<8x32xf32>
    %95 = tpu.matmul %93, %94, %cst_36 {dimension_numbers = #tpu.dot_dimension_numbers<[1], [0], [0], [1], [0, 0, 1, 1], [], []>} : vector<8x8xbf16>, vector<8x32xbf16>, vector<8x32xf32> -> vector<8x32xf32>
    %96 = arith.addf %73, %95 : vector<8x32xf32>
    %97 = vector.extract_strided_slice %45 {offsets = [0, 16], sizes = [8, 8], strides = [1, 1]} : vector<8x32xbf16> to vector<8x8xbf16>
    %98 = vector.extract_strided_slice %47 {offsets = [0, 16], sizes = [8, 8], strides = [1, 1]} : vector<8x32xbf16> to vector<8x8xbf16>
    %cst_37 = arith.constant dense<0.000000e+00> : vector<8x8xf32>
    %99 = tpu.matmul %97, %98, %cst_37 {dimension_numbers = #tpu.dot_dimension_numbers<[1], [1], [0], [0], [0, 0, 1, 0], [], []>} : vector<8x8xbf16>, vector<8x8xbf16>, vector<8x8xf32> -> vector<8x8xf32>
    %cst_38 = arith.constant 0.353553385 : f32
    %100 = vector.broadcast %cst_38 : f32 to vector<8x8xf32>
    %101 = arith.mulf %99, %100 : vector<8x8xf32>
    %102 = arith.addf %101, %43 : vector<8x8xf32>
    %cst_39 = arith.constant dense<0xFF800000> : vector<8xf32>
    %103 = vector.multi_reduction <maximumf>, %102, %cst_39 [1] : vector<8x8xf32> to vector<8xf32>
    %104 = vector.shape_cast %103 : vector<8xf32> to vector<8x1xf32>
    %105 = vector.broadcast %104 : vector<8x1xf32> to vector<8x8xf32>
    %106 = arith.subf %102, %105 : vector<8x8xf32>
    %107 = math.exp %106 : vector<8x8xf32>
    %cst_40 = arith.constant dense<0.000000e+00> : vector<8xf32>
    %108 = vector.multi_reduction <add>, %107, %cst_40 [1] : vector<8x8xf32> to vector<8xf32>
    %109 = vector.shape_cast %108 : vector<8xf32> to vector<8x1xf32>
    %110 = tpu.reciprocal %109 {approx = true} : vector<8x1xf32> -> vector<8x1xf32>
    %111 = vector.broadcast %110 : vector<8x1xf32> to vector<8x8xf32>
    %112 = arith.mulf %107, %111 : vector<8x8xf32>
    %113 = arith.truncf %112 : vector<8x8xf32> to vector<8x8xbf16>
    %114 = vector.extract_strided_slice %49 {offsets = [0, 16], sizes = [8, 8], strides = [1, 1]} : vector<8x32xbf16> to vector<8x8xbf16>
    %cst_41 = arith.constant dense<0.000000e+00> : vector<8x8xf32>
    %115 = tpu.matmul %113, %114, %cst_41 {dimension_numbers = #tpu.dot_dimension_numbers<[1], [0], [0], [1], [0, 0, 1, 1], [], []>} : vector<8x8xbf16>, vector<8x8xbf16>, vector<8x8xf32> -> vector<8x8xf32>
    %116 = arith.truncf %115 : vector<8x8xf32> to vector<8x8xbf16>
    %117 = vector.extract_strided_slice %36 {offsets = [16, 0], sizes = [8, 32], strides = [1, 1]} : vector<32x32xbf16> to vector<8x32xbf16>
    %cst_42 = arith.constant dense<0.000000e+00> : vector<8x32xf32>
    %118 = tpu.matmul %116, %117, %cst_42 {dimension_numbers = #tpu.dot_dimension_numbers<[1], [0], [0], [1], [0, 0, 1, 1], [], []>} : vector<8x8xbf16>, vector<8x32xbf16>, vector<8x32xf32> -> vector<8x32xf32>
    %119 = arith.addf %96, %118 : vector<8x32xf32>
    %120 = vector.extract_strided_slice %45 {offsets = [0, 24], sizes = [8, 8], strides = [1, 1]} : vector<8x32xbf16> to vector<8x8xbf16>
    %121 = vector.extract_strided_slice %47 {offsets = [0, 24], sizes = [8, 8], strides = [1, 1]} : vector<8x32xbf16> to vector<8x8xbf16>
    %cst_43 = arith.constant dense<0.000000e+00> : vector<8x8xf32>
    %122 = tpu.matmul %120, %121, %cst_43 {dimension_numbers = #tpu.dot_dimension_numbers<[1], [1], [0], [0], [0, 0, 1, 0], [], []>} : vector<8x8xbf16>, vector<8x8xbf16>, vector<8x8xf32> -> vector<8x8xf32>
    %cst_44 = arith.constant 0.353553385 : f32
    %123 = vector.broadcast %cst_44 : f32 to vector<8x8xf32>
    %124 = arith.mulf %122, %123 : vector<8x8xf32>
    %125 = arith.addf %124, %43 : vector<8x8xf32>
    %cst_45 = arith.constant dense<0xFF800000> : vector<8xf32>
    %126 = vector.multi_reduction <maximumf>, %125, %cst_45 [1] : vector<8x8xf32> to vector<8xf32>
    %127 = vector.shape_cast %126 : vector<8xf32> to vector<8x1xf32>
    %128 = vector.broadcast %127 : vector<8x1xf32> to vector<8x8xf32>
    %129 = arith.subf %125, %128 : vector<8x8xf32>
    %130 = math.exp %129 : vector<8x8xf32>
    %cst_46 = arith.constant dense<0.000000e+00> : vector<8xf32>
    %131 = vector.multi_reduction <add>, %130, %cst_46 [1] : vector<8x8xf32> to vector<8xf32>
    %132 = vector.shape_cast %131 : vector<8xf32> to vector<8x1xf32>
    %133 = tpu.reciprocal %132 {approx = true} : vector<8x1xf32> -> vector<8x1xf32>
    %134 = vector.broadcast %133 : vector<8x1xf32> to vector<8x8xf32>
    %135 = arith.mulf %130, %134 : vector<8x8xf32>
    %136 = arith.truncf %135 : vector<8x8xf32> to vector<8x8xbf16>
    %137 = vector.extract_strided_slice %49 {offsets = [0, 24], sizes = [8, 8], strides = [1, 1]} : vector<8x32xbf16> to vector<8x8xbf16>
    %cst_47 = arith.constant dense<0.000000e+00> : vector<8x8xf32>
    %138 = tpu.matmul %136, %137, %cst_47 {dimension_numbers = #tpu.dot_dimension_numbers<[1], [0], [0], [1], [0, 0, 1, 1], [], []>} : vector<8x8xbf16>, vector<8x8xbf16>, vector<8x8xf32> -> vector<8x8xf32>
    %139 = arith.truncf %138 : vector<8x8xf32> to vector<8x8xbf16>
    %140 = vector.extract_strided_slice %36 {offsets = [24, 0], sizes = [8, 32], strides = [1, 1]} : vector<32x32xbf16> to vector<8x32xbf16>
    %cst_48 = arith.constant dense<0.000000e+00> : vector<8x32xf32>
    %141 = tpu.matmul %139, %140, %cst_48 {dimension_numbers = #tpu.dot_dimension_numbers<[1], [0], [0], [1], [0, 0, 1, 1], [], []>} : vector<8x8xbf16>, vector<8x32xbf16>, vector<8x32xf32> -> vector<8x32xf32>
    %142 = arith.addf %119, %141 : vector<8x32xf32>
    %143 = vector.extract_strided_slice %2 {offsets = [1, 0, 0], sizes = [1, 8, 8], strides = [1, 1, 1]} : vector<2x8x8xf32> to vector<1x8x8xf32>
    %144 = vector.shape_cast %143 : vector<1x8x8xf32> to vector<8x8xf32>
    %cst_49 = arith.constant 1.000000e+00 : f32
    %145 = vector.broadcast %cst_49 : f32 to vector<8x8xf32>
    %146 = arith.subf %144, %145 : vector<8x8xf32>
    %cst_50 = arith.constant 1.000000e+09 : f32
    %147 = vector.broadcast %cst_50 : f32 to vector<8x8xf32>
    %148 = arith.mulf %146, %147 : vector<8x8xf32>
    %149 = vector.extract_strided_slice %33 {offsets = [8, 0], sizes = [8, 32], strides = [1, 1]} : vector<16x32xf32> to vector<8x32xf32>
    %150 = arith.truncf %149 : vector<8x32xf32> to vector<8x32xbf16>
    %151 = vector.extract_strided_slice %34 {offsets = [8, 0], sizes = [8, 32], strides = [1, 1]} : vector<16x32xf32> to vector<8x32xf32>
    %152 = arith.truncf %151 : vector<8x32xf32> to vector<8x32xbf16>
    %153 = vector.extract_strided_slice %35 {offsets = [8, 0], sizes = [8, 32], strides = [1, 1]} : vector<16x32xf32> to vector<8x32xf32>
    %154 = arith.truncf %153 : vector<8x32xf32> to vector<8x32xbf16>
    %cst_51 = arith.constant 0.000000e+00 : f32
    %155 = vector.broadcast %cst_51 : f32 to vector<8x32xf32>
    %156 = vector.extract_strided_slice %150 {offsets = [0, 0], sizes = [8, 8], strides = [1, 1]} : vector<8x32xbf16> to vector<8x8xbf16>
    %157 = vector.extract_strided_slice %152 {offsets = [0, 0], sizes = [8, 8], strides = [1, 1]} : vector<8x32xbf16> to vector<8x8xbf16>
    %cst_52 = arith.constant dense<0.000000e+00> : vector<8x8xf32>
    %158 = tpu.matmul %156, %157, %cst_52 {dimension_numbers = #tpu.dot_dimension_numbers<[1], [1], [0], [0], [0, 0, 1, 0], [], []>} : vector<8x8xbf16>, vector<8x8xbf16>, vector<8x8xf32> -> vector<8x8xf32>
    %cst_53 = arith.constant 0.353553385 : f32
    %159 = vector.broadcast %cst_53 : f32 to vector<8x8xf32>
    %160 = arith.mulf %158, %159 : vector<8x8xf32>
    %161 = arith.addf %160, %148 : vector<8x8xf32>
    %cst_54 = arith.constant dense<0xFF800000> : vector<8xf32>
    %162 = vector.multi_reduction <maximumf>, %161, %cst_54 [1] : vector<8x8xf32> to vector<8xf32>
    %163 = vector.shape_cast %162 : vector<8xf32> to vector<8x1xf32>
    %164 = vector.broadcast %163 : vector<8x1xf32> to vector<8x8xf32>
    %165 = arith.subf %161, %164 : vector<8x8xf32>
    %166 = math.exp %165 : vector<8x8xf32>
    %cst_55 = arith.constant dense<0.000000e+00> : vector<8xf32>
    %167 = vector.multi_reduction <add>, %166, %cst_55 [1] : vector<8x8xf32> to vector<8xf32>
    %168 = vector.shape_cast %167 : vector<8xf32> to vector<8x1xf32>
    %169 = tpu.reciprocal %168 {approx = true} : vector<8x1xf32> -> vector<8x1xf32>
    %170 = vector.broadcast %169 : vector<8x1xf32> to vector<8x8xf32>
    %171 = arith.mulf %166, %170 : vector<8x8xf32>
    %172 = arith.truncf %171 : vector<8x8xf32> to vector<8x8xbf16>
    %173 = vector.extract_strided_slice %154 {offsets = [0, 0], sizes = [8, 8], strides = [1, 1]} : vector<8x32xbf16> to vector<8x8xbf16>
    %cst_56 = arith.constant dense<0.000000e+00> : vector<8x8xf32>
    %174 = tpu.matmul %172, %173, %cst_56 {dimension_numbers = #tpu.dot_dimension_numbers<[1], [0], [0], [1], [0, 0, 1, 1], [], []>} : vector<8x8xbf16>, vector<8x8xbf16>, vector<8x8xf32> -> vector<8x8xf32>
    %175 = arith.truncf %174 : vector<8x8xf32> to vector<8x8xbf16>
    %176 = vector.extract_strided_slice %36 {offsets = [0, 0], sizes = [8, 32], strides = [1, 1]} : vector<32x32xbf16> to vector<8x32xbf16>
    %cst_57 = arith.constant dense<0.000000e+00> : vector<8x32xf32>
    %177 = tpu.matmul %175, %176, %cst_57 {dimension_numbers = #tpu.dot_dimension_numbers<[1], [0], [0], [1], [0, 0, 1, 1], [], []>} : vector<8x8xbf16>, vector<8x32xbf16>, vector<8x32xf32> -> vector<8x32xf32>
    %178 = arith.addf %155, %177 : vector<8x32xf32>
    %179 = vector.extract_strided_slice %150 {offsets = [0, 8], sizes = [8, 8], strides = [1, 1]} : vector<8x32xbf16> to vector<8x8xbf16>
    %180 = vector.extract_strided_slice %152 {offsets = [0, 8], sizes = [8, 8], strides = [1, 1]} : vector<8x32xbf16> to vector<8x8xbf16>
    %cst_58 = arith.constant dense<0.000000e+00> : vector<8x8xf32>
    %181 = tpu.matmul %179, %180, %cst_58 {dimension_numbers = #tpu.dot_dimension_numbers<[1], [1], [0], [0], [0, 0, 1, 0], [], []>} : vector<8x8xbf16>, vector<8x8xbf16>, vector<8x8xf32> -> vector<8x8xf32>
    %cst_59 = arith.constant 0.353553385 : f32
    %182 = vector.broadcast %cst_59 : f32 to vector<8x8xf32>
    %183 = arith.mulf %181, %182 : vector<8x8xf32>
    %184 = arith.addf %183, %148 : vector<8x8xf32>
    %cst_60 = arith.constant dense<0xFF800000> : vector<8xf32>
    %185 = vector.multi_reduction <maximumf>, %184, %cst_60 [1] : vector<8x8xf32> to vector<8xf32>
    %186 = vector.shape_cast %185 : vector<8xf32> to vector<8x1xf32>
    %187 = vector.broadcast %186 : vector<8x1xf32> to vector<8x8xf32>
    %188 = arith.subf %184, %187 : vector<8x8xf32>
    %189 = math.exp %188 : vector<8x8xf32>
    %cst_61 = arith.constant dense<0.000000e+00> : vector<8xf32>
    %190 = vector.multi_reduction <add>, %189, %cst_61 [1] : vector<8x8xf32> to vector<8xf32>
    %191 = vector.shape_cast %190 : vector<8xf32> to vector<8x1xf32>
    %192 = tpu.reciprocal %191 {approx = true} : vector<8x1xf32> -> vector<8x1xf32>
    %193 = vector.broadcast %192 : vector<8x1xf32> to vector<8x8xf32>
    %194 = arith.mulf %189, %193 : vector<8x8xf32>
    %195 = arith.truncf %194 : vector<8x8xf32> to vector<8x8xbf16>
    %196 = vector.extract_strided_slice %154 {offsets = [0, 8], sizes = [8, 8], strides = [1, 1]} : vector<8x32xbf16> to vector<8x8xbf16>
    %cst_62 = arith.constant dense<0.000000e+00> : vector<8x8xf32>
    %197 = tpu.matmul %195, %196, %cst_62 {dimension_numbers = #tpu.dot_dimension_numbers<[1], [0], [0], [1], [0, 0, 1, 1], [], []>} : vector<8x8xbf16>, vector<8x8xbf16>, vector<8x8xf32> -> vector<8x8xf32>
    %198 = arith.truncf %197 : vector<8x8xf32> to vector<8x8xbf16>
    %199 = vector.extract_strided_slice %36 {offsets = [8, 0], sizes = [8, 32], strides = [1, 1]} : vector<32x32xbf16> to vector<8x32xbf16>
    %cst_63 = arith.constant dense<0.000000e+00> : vector<8x32xf32>
    %200 = tpu.matmul %198, %199, %cst_63 {dimension_numbers = #tpu.dot_dimension_numbers<[1], [0], [0], [1], [0, 0, 1, 1], [], []>} : vector<8x8xbf16>, vector<8x32xbf16>, vector<8x32xf32> -> vector<8x32xf32>
    %201 = arith.addf %178, %200 : vector<8x32xf32>
    %202 = vector.extract_strided_slice %150 {offsets = [0, 16], sizes = [8, 8], strides = [1, 1]} : vector<8x32xbf16> to vector<8x8xbf16>
    %203 = vector.extract_strided_slice %152 {offsets = [0, 16], sizes = [8, 8], strides = [1, 1]} : vector<8x32xbf16> to vector<8x8xbf16>
    %cst_64 = arith.constant dense<0.000000e+00> : vector<8x8xf32>
    %204 = tpu.matmul %202, %203, %cst_64 {dimension_numbers = #tpu.dot_dimension_numbers<[1], [1], [0], [0], [0, 0, 1, 0], [], []>} : vector<8x8xbf16>, vector<8x8xbf16>, vector<8x8xf32> -> vector<8x8xf32>
    %cst_65 = arith.constant 0.353553385 : f32
    %205 = vector.broadcast %cst_65 : f32 to vector<8x8xf32>
    %206 = arith.mulf %204, %205 : vector<8x8xf32>
    %207 = arith.addf %206, %148 : vector<8x8xf32>
    %cst_66 = arith.constant dense<0xFF800000> : vector<8xf32>
    %208 = vector.multi_reduction <maximumf>, %207, %cst_66 [1] : vector<8x8xf32> to vector<8xf32>
    %209 = vector.shape_cast %208 : vector<8xf32> to vector<8x1xf32>
    %210 = vector.broadcast %209 : vector<8x1xf32> to vector<8x8xf32>
    %211 = arith.subf %207, %210 : vector<8x8xf32>
    %212 = math.exp %211 : vector<8x8xf32>
    %cst_67 = arith.constant dense<0.000000e+00> : vector<8xf32>
    %213 = vector.multi_reduction <add>, %212, %cst_67 [1] : vector<8x8xf32> to vector<8xf32>
    %214 = vector.shape_cast %213 : vector<8xf32> to vector<8x1xf32>
    %215 = tpu.reciprocal %214 {approx = true} : vector<8x1xf32> -> vector<8x1xf32>
    %216 = vector.broadcast %215 : vector<8x1xf32> to vector<8x8xf32>
    %217 = arith.mulf %212, %216 : vector<8x8xf32>
    %218 = arith.truncf %217 : vector<8x8xf32> to vector<8x8xbf16>
    %219 = vector.extract_strided_slice %154 {offsets = [0, 16], sizes = [8, 8], strides = [1, 1]} : vector<8x32xbf16> to vector<8x8xbf16>
    %cst_68 = arith.constant dense<0.000000e+00> : vector<8x8xf32>
    %220 = tpu.matmul %218, %219, %cst_68 {dimension_numbers = #tpu.dot_dimension_numbers<[1], [0], [0], [1], [0, 0, 1, 1], [], []>} : vector<8x8xbf16>, vector<8x8xbf16>, vector<8x8xf32> -> vector<8x8xf32>
    %221 = arith.truncf %220 : vector<8x8xf32> to vector<8x8xbf16>
    %222 = vector.extract_strided_slice %36 {offsets = [16, 0], sizes = [8, 32], strides = [1, 1]} : vector<32x32xbf16> to vector<8x32xbf16>
    %cst_69 = arith.constant dense<0.000000e+00> : vector<8x32xf32>
    %223 = tpu.matmul %221, %222, %cst_69 {dimension_numbers = #tpu.dot_dimension_numbers<[1], [0], [0], [1], [0, 0, 1, 1], [], []>} : vector<8x8xbf16>, vector<8x32xbf16>, vector<8x32xf32> -> vector<8x32xf32>
    %224 = arith.addf %201, %223 : vector<8x32xf32>
    %225 = vector.extract_strided_slice %150 {offsets = [0, 24], sizes = [8, 8], strides = [1, 1]} : vector<8x32xbf16> to vector<8x8xbf16>
    %226 = vector.extract_strided_slice %152 {offsets = [0, 24], sizes = [8, 8], strides = [1, 1]} : vector<8x32xbf16> to vector<8x8xbf16>
    %cst_70 = arith.constant dense<0.000000e+00> : vector<8x8xf32>
    %227 = tpu.matmul %225, %226, %cst_70 {dimension_numbers = #tpu.dot_dimension_numbers<[1], [1], [0], [0], [0, 0, 1, 0], [], []>} : vector<8x8xbf16>, vector<8x8xbf16>, vector<8x8xf32> -> vector<8x8xf32>
    %cst_71 = arith.constant 0.353553385 : f32
    %228 = vector.broadcast %cst_71 : f32 to vector<8x8xf32>
    %229 = arith.mulf %227, %228 : vector<8x8xf32>
    %230 = arith.addf %229, %148 : vector<8x8xf32>
    %cst_72 = arith.constant dense<0xFF800000> : vector<8xf32>
    %231 = vector.multi_reduction <maximumf>, %230, %cst_72 [1] : vector<8x8xf32> to vector<8xf32>
    %232 = vector.shape_cast %231 : vector<8xf32> to vector<8x1xf32>
    %233 = vector.broadcast %232 : vector<8x1xf32> to vector<8x8xf32>
    %234 = arith.subf %230, %233 : vector<8x8xf32>
    %235 = math.exp %234 : vector<8x8xf32>
    %cst_73 = arith.constant dense<0.000000e+00> : vector<8xf32>
    %236 = vector.multi_reduction <add>, %235, %cst_73 [1] : vector<8x8xf32> to vector<8xf32>
    %237 = vector.shape_cast %236 : vector<8xf32> to vector<8x1xf32>
    %238 = tpu.reciprocal %237 {approx = true} : vector<8x1xf32> -> vector<8x1xf32>
    %239 = vector.broadcast %238 : vector<8x1xf32> to vector<8x8xf32>
    %240 = arith.mulf %235, %239 : vector<8x8xf32>
    %241 = arith.truncf %240 : vector<8x8xf32> to vector<8x8xbf16>
    %242 = vector.extract_strided_slice %154 {offsets = [0, 24], sizes = [8, 8], strides = [1, 1]} : vector<8x32xbf16> to vector<8x8xbf16>
    %cst_74 = arith.constant dense<0.000000e+00> : vector<8x8xf32>
    %243 = tpu.matmul %241, %242, %cst_74 {dimension_numbers = #tpu.dot_dimension_numbers<[1], [0], [0], [1], [0, 0, 1, 1], [], []>} : vector<8x8xbf16>, vector<8x8xbf16>, vector<8x8xf32> -> vector<8x8xf32>
    %244 = arith.truncf %243 : vector<8x8xf32> to vector<8x8xbf16>
    %245 = vector.extract_strided_slice %36 {offsets = [24, 0], sizes = [8, 32], strides = [1, 1]} : vector<32x32xbf16> to vector<8x32xbf16>
    %cst_75 = arith.constant dense<0.000000e+00> : vector<8x32xf32>
    %246 = tpu.matmul %244, %245, %cst_75 {dimension_numbers = #tpu.dot_dimension_numbers<[1], [0], [0], [1], [0, 0, 1, 1], [], []>} : vector<8x8xbf16>, vector<8x32xbf16>, vector<8x32xf32> -> vector<8x32xf32>
    %247 = arith.addf %224, %246 : vector<8x32xf32>
    %248 = tpu.concatenate %142, %247 in 0 : vector<8x32xf32>, vector<8x32xf32> -> vector<16x32xf32>
    %249 = vector.broadcast %37 : vector<1x32xf32> to vector<16x32xf32>
    %250 = arith.addf %248, %249 : vector<16x32xf32>
    %251 = arith.addf %0, %250 : vector<16x32xf32>
    %c4 = arith.constant 4 : index
    %c0_76 = arith.constant 0 : index
    %252 = vector.load %arg5[%c4, %c0_76] : memref<16x128xf32, #tpu.memory_space<vmem>>, vector<1x32xf32>
    %c5 = arith.constant 5 : index
    %c0_77 = arith.constant 0 : index
    %253 = vector.load %arg5[%c5, %c0_77] : memref<16x128xf32, #tpu.memory_space<vmem>>, vector<1x32xf32>
    %cst_78 = arith.constant dense<0.000000e+00> : vector<16xf32>
    %254 = vector.multi_reduction <add>, %251, %cst_78 [1] : vector<16x32xf32> to vector<16xf32>
    %255 = vector.shape_cast %254 : vector<16xf32> to vector<16x1xf32>
    %cst_79 = arith.constant 3.200000e+01 : f32
    %256 = vector.broadcast %cst_79 : f32 to vector<16x1xf32>
    %257 = arith.divf %255, %256 : vector<16x1xf32>
    %258 = vector.broadcast %257 : vector<16x1xf32> to vector<16x32xf32>
    %259 = arith.subf %251, %258 : vector<16x32xf32>
    %260 = arith.mulf %259, %259 : vector<16x32xf32>
    %cst_80 = arith.constant dense<0.000000e+00> : vector<16xf32>
    %261 = vector.multi_reduction <add>, %260, %cst_80 [1] : vector<16x32xf32> to vector<16xf32>
    %262 = vector.shape_cast %261 : vector<16xf32> to vector<16x1xf32>
    %cst_81 = arith.constant 0.0322580636 : f32
    %263 = vector.broadcast %cst_81 : f32 to vector<16x1xf32>
    %264 = arith.mulf %262, %263 : vector<16x1xf32>
    %265 = math.sqrt %264 : vector<16x1xf32>
    %cst_82 = arith.constant 9.99999997E-7 : f32
    %266 = vector.broadcast %cst_82 : f32 to vector<16x1xf32>
    %267 = arith.addf %265, %266 : vector<16x1xf32>
    %268 = tpu.reciprocal %267 {approx = true} : vector<16x1xf32> -> vector<16x1xf32>
    %269 = vector.broadcast %252 : vector<1x32xf32> to vector<16x32xf32>
    %270 = arith.mulf %269, %259 : vector<16x32xf32>
    %271 = vector.broadcast %268 : vector<16x1xf32> to vector<16x32xf32>
    %272 = arith.mulf %270, %271 : vector<16x32xf32>
    %273 = vector.broadcast %253 : vector<1x32xf32> to vector<16x32xf32>
    %274 = arith.addf %272, %273 : vector<16x32xf32>
    %275 = arith.truncf %274 : vector<16x32xf32> to vector<16x32xbf16>
    %c64 = arith.constant 64 : index
    %c0_83 = arith.constant 0 : index
    %276 = vector.load %arg4[%c64, %c0_83] : memref<256x128xbf16, #tpu.memory_space<vmem>>, vector<32x32xbf16>
    %cst_84 = arith.constant dense<0.000000e+00> : vector<16x32xf32>
    %277 = tpu.matmul %275, %276, %cst_84 {dimension_numbers = #tpu.dot_dimension_numbers<[1], [0], [0], [1], [0, 0, 1, 1], [], []>} : vector<16x32xbf16>, vector<32x32xbf16>, vector<16x32xf32> -> vector<16x32xf32>
    %c6 = arith.constant 6 : index
    %c0_85 = arith.constant 0 : index
    %278 = vector.load %arg5[%c6, %c0_85] : memref<16x128xf32, #tpu.memory_space<vmem>>, vector<1x32xf32>
    %279 = vector.broadcast %278 : vector<1x32xf32> to vector<16x32xf32>
    %280 = arith.addf %277, %279 : vector<16x32xf32>
    %281 = arith.truncf %1 : vector<16x32xf32> to vector<16x32xbf16>
    %c96 = arith.constant 96 : index
    %c0_86 = arith.constant 0 : index
    %282 = vector.load %arg4[%c96, %c0_86] : memref<256x128xbf16, #tpu.memory_space<vmem>>, vector<32x64xbf16>
    %cst_87 = arith.constant dense<0.000000e+00> : vector<16x64xf32>
    %283 = tpu.matmul %281, %282, %cst_87 {dimension_numbers = #tpu.dot_dimension_numbers<[1], [0], [0], [1], [0, 0, 1, 1], [], []>} : vector<16x32xbf16>, vector<32x64xbf16>, vector<16x64xf32> -> vector<16x64xf32>
    %c7 = arith.constant 7 : index
    %c0_88 = arith.constant 0 : index
    %284 = vector.load %arg5[%c7, %c0_88] : memref<16x128xf32, #tpu.memory_space<vmem>>, vector<1x64xf32>
    %285 = vector.broadcast %284 : vector<1x64xf32> to vector<16x64xf32>
    %286 = arith.addf %283, %285 : vector<16x64xf32>
    %287 = vector.extract_strided_slice %286 {offsets = [0, 0], sizes = [16, 32], strides = [1, 1]} : vector<16x64xf32> to vector<16x32xf32>
    %288 = vector.extract_strided_slice %286 {offsets = [0, 32], sizes = [16, 32], strides = [1, 1]} : vector<16x64xf32> to vector<16x32xf32>
    %c128 = arith.constant 128 : index
    %c0_89 = arith.constant 0 : index
    %289 = vector.load %arg4[%c128, %c0_89] : memref<256x128xbf16, #tpu.memory_space<vmem>>, vector<32x32xbf16>
    %c8 = arith.constant 8 : index
    %c0_90 = arith.constant 0 : index
    %290 = vector.load %arg5[%c8, %c0_90] : memref<16x128xf32, #tpu.memory_space<vmem>>, vector<1x32xf32>
    %291 = vector.extract_strided_slice %3 {offsets = [0, 0, 0], sizes = [1, 8, 8], strides = [1, 1, 1]} : vector<2x8x8xf32> to vector<1x8x8xf32>
    %292 = vector.shape_cast %291 : vector<1x8x8xf32> to vector<8x8xf32>
    %cst_91 = arith.constant 1.000000e+00 : f32
    %293 = vector.broadcast %cst_91 : f32 to vector<8x8xf32>
    %294 = arith.subf %292, %293 : vector<8x8xf32>
    %cst_92 = arith.constant 1.000000e+09 : f32
    %295 = vector.broadcast %cst_92 : f32 to vector<8x8xf32>
    %296 = arith.mulf %294, %295 : vector<8x8xf32>
    %297 = vector.extract_strided_slice %280 {offsets = [0, 0], sizes = [8, 32], strides = [1, 1]} : vector<16x32xf32> to vector<8x32xf32>
    %298 = arith.truncf %297 : vector<8x32xf32> to vector<8x32xbf16>
    %299 = vector.extract_strided_slice %287 {offsets = [0, 0], sizes = [8, 32], strides = [1, 1]} : vector<16x32xf32> to vector<8x32xf32>
    %300 = arith.truncf %299 : vector<8x32xf32> to vector<8x32xbf16>
    %301 = vector.extract_strided_slice %288 {offsets = [0, 0], sizes = [8, 32], strides = [1, 1]} : vector<16x32xf32> to vector<8x32xf32>
    %302 = arith.truncf %301 : vector<8x32xf32> to vector<8x32xbf16>
    %cst_93 = arith.constant 0.000000e+00 : f32
    %303 = vector.broadcast %cst_93 : f32 to vector<8x32xf32>
    %304 = vector.extract_strided_slice %298 {offsets = [0, 0], sizes = [8, 8], strides = [1, 1]} : vector<8x32xbf16> to vector<8x8xbf16>
    %305 = vector.extract_strided_slice %300 {offsets = [0, 0], sizes = [8, 8], strides = [1, 1]} : vector<8x32xbf16> to vector<8x8xbf16>
    %cst_94 = arith.constant dense<0.000000e+00> : vector<8x8xf32>
    %306 = tpu.matmul %304, %305, %cst_94 {dimension_numbers = #tpu.dot_dimension_numbers<[1], [1], [0], [0], [0, 0, 1, 0], [], []>} : vector<8x8xbf16>, vector<8x8xbf16>, vector<8x8xf32> -> vector<8x8xf32>
    %cst_95 = arith.constant 0.353553385 : f32
    %307 = vector.broadcast %cst_95 : f32 to vector<8x8xf32>
    %308 = arith.mulf %306, %307 : vector<8x8xf32>
    %309 = arith.addf %308, %296 : vector<8x8xf32>
    %cst_96 = arith.constant dense<0xFF800000> : vector<8xf32>
    %310 = vector.multi_reduction <maximumf>, %309, %cst_96 [1] : vector<8x8xf32> to vector<8xf32>
    %311 = vector.shape_cast %310 : vector<8xf32> to vector<8x1xf32>
    %312 = vector.broadcast %311 : vector<8x1xf32> to vector<8x8xf32>
    %313 = arith.subf %309, %312 : vector<8x8xf32>
    %314 = math.exp %313 : vector<8x8xf32>
    %cst_97 = arith.constant dense<0.000000e+00> : vector<8xf32>
    %315 = vector.multi_reduction <add>, %314, %cst_97 [1] : vector<8x8xf32> to vector<8xf32>
    %316 = vector.shape_cast %315 : vector<8xf32> to vector<8x1xf32>
    %317 = tpu.reciprocal %316 {approx = true} : vector<8x1xf32> -> vector<8x1xf32>
    %318 = vector.broadcast %317 : vector<8x1xf32> to vector<8x8xf32>
    %319 = arith.mulf %314, %318 : vector<8x8xf32>
    %320 = arith.truncf %319 : vector<8x8xf32> to vector<8x8xbf16>
    %321 = vector.extract_strided_slice %302 {offsets = [0, 0], sizes = [8, 8], strides = [1, 1]} : vector<8x32xbf16> to vector<8x8xbf16>
    %cst_98 = arith.constant dense<0.000000e+00> : vector<8x8xf32>
    %322 = tpu.matmul %320, %321, %cst_98 {dimension_numbers = #tpu.dot_dimension_numbers<[1], [0], [0], [1], [0, 0, 1, 1], [], []>} : vector<8x8xbf16>, vector<8x8xbf16>, vector<8x8xf32> -> vector<8x8xf32>
    %323 = arith.truncf %322 : vector<8x8xf32> to vector<8x8xbf16>
    %324 = vector.extract_strided_slice %289 {offsets = [0, 0], sizes = [8, 32], strides = [1, 1]} : vector<32x32xbf16> to vector<8x32xbf16>
    %cst_99 = arith.constant dense<0.000000e+00> : vector<8x32xf32>
    %325 = tpu.matmul %323, %324, %cst_99 {dimension_numbers = #tpu.dot_dimension_numbers<[1], [0], [0], [1], [0, 0, 1, 1], [], []>} : vector<8x8xbf16>, vector<8x32xbf16>, vector<8x32xf32> -> vector<8x32xf32>
    %326 = arith.addf %303, %325 : vector<8x32xf32>
    %327 = vector.extract_strided_slice %298 {offsets = [0, 8], sizes = [8, 8], strides = [1, 1]} : vector<8x32xbf16> to vector<8x8xbf16>
    %328 = vector.extract_strided_slice %300 {offsets = [0, 8], sizes = [8, 8], strides = [1, 1]} : vector<8x32xbf16> to vector<8x8xbf16>
    %cst_100 = arith.constant dense<0.000000e+00> : vector<8x8xf32>
    %329 = tpu.matmul %327, %328, %cst_100 {dimension_numbers = #tpu.dot_dimension_numbers<[1], [1], [0], [0], [0, 0, 1, 0], [], []>} : vector<8x8xbf16>, vector<8x8xbf16>, vector<8x8xf32> -> vector<8x8xf32>
    %cst_101 = arith.constant 0.353553385 : f32
    %330 = vector.broadcast %cst_101 : f32 to vector<8x8xf32>
    %331 = arith.mulf %329, %330 : vector<8x8xf32>
    %332 = arith.addf %331, %296 : vector<8x8xf32>
    %cst_102 = arith.constant dense<0xFF800000> : vector<8xf32>
    %333 = vector.multi_reduction <maximumf>, %332, %cst_102 [1] : vector<8x8xf32> to vector<8xf32>
    %334 = vector.shape_cast %333 : vector<8xf32> to vector<8x1xf32>
    %335 = vector.broadcast %334 : vector<8x1xf32> to vector<8x8xf32>
    %336 = arith.subf %332, %335 : vector<8x8xf32>
    %337 = math.exp %336 : vector<8x8xf32>
    %cst_103 = arith.constant dense<0.000000e+00> : vector<8xf32>
    %338 = vector.multi_reduction <add>, %337, %cst_103 [1] : vector<8x8xf32> to vector<8xf32>
    %339 = vector.shape_cast %338 : vector<8xf32> to vector<8x1xf32>
    %340 = tpu.reciprocal %339 {approx = true} : vector<8x1xf32> -> vector<8x1xf32>
    %341 = vector.broadcast %340 : vector<8x1xf32> to vector<8x8xf32>
    %342 = arith.mulf %337, %341 : vector<8x8xf32>
    %343 = arith.truncf %342 : vector<8x8xf32> to vector<8x8xbf16>
    %344 = vector.extract_strided_slice %302 {offsets = [0, 8], sizes = [8, 8], strides = [1, 1]} : vector<8x32xbf16> to vector<8x8xbf16>
    %cst_104 = arith.constant dense<0.000000e+00> : vector<8x8xf32>
    %345 = tpu.matmul %343, %344, %cst_104 {dimension_numbers = #tpu.dot_dimension_numbers<[1], [0], [0], [1], [0, 0, 1, 1], [], []>} : vector<8x8xbf16>, vector<8x8xbf16>, vector<8x8xf32> -> vector<8x8xf32>
    %346 = arith.truncf %345 : vector<8x8xf32> to vector<8x8xbf16>
    %347 = vector.extract_strided_slice %289 {offsets = [8, 0], sizes = [8, 32], strides = [1, 1]} : vector<32x32xbf16> to vector<8x32xbf16>
    %cst_105 = arith.constant dense<0.000000e+00> : vector<8x32xf32>
    %348 = tpu.matmul %346, %347, %cst_105 {dimension_numbers = #tpu.dot_dimension_numbers<[1], [0], [0], [1], [0, 0, 1, 1], [], []>} : vector<8x8xbf16>, vector<8x32xbf16>, vector<8x32xf32> -> vector<8x32xf32>
    %349 = arith.addf %326, %348 : vector<8x32xf32>
    %350 = vector.extract_strided_slice %298 {offsets = [0, 16], sizes = [8, 8], strides = [1, 1]} : vector<8x32xbf16> to vector<8x8xbf16>
    %351 = vector.extract_strided_slice %300 {offsets = [0, 16], sizes = [8, 8], strides = [1, 1]} : vector<8x32xbf16> to vector<8x8xbf16>
    %cst_106 = arith.constant dense<0.000000e+00> : vector<8x8xf32>
    %352 = tpu.matmul %350, %351, %cst_106 {dimension_numbers = #tpu.dot_dimension_numbers<[1], [1], [0], [0], [0, 0, 1, 0], [], []>} : vector<8x8xbf16>, vector<8x8xbf16>, vector<8x8xf32> -> vector<8x8xf32>
    %cst_107 = arith.constant 0.353553385 : f32
    %353 = vector.broadcast %cst_107 : f32 to vector<8x8xf32>
    %354 = arith.mulf %352, %353 : vector<8x8xf32>
    %355 = arith.addf %354, %296 : vector<8x8xf32>
    %cst_108 = arith.constant dense<0xFF800000> : vector<8xf32>
    %356 = vector.multi_reduction <maximumf>, %355, %cst_108 [1] : vector<8x8xf32> to vector<8xf32>
    %357 = vector.shape_cast %356 : vector<8xf32> to vector<8x1xf32>
    %358 = vector.broadcast %357 : vector<8x1xf32> to vector<8x8xf32>
    %359 = arith.subf %355, %358 : vector<8x8xf32>
    %360 = math.exp %359 : vector<8x8xf32>
    %cst_109 = arith.constant dense<0.000000e+00> : vector<8xf32>
    %361 = vector.multi_reduction <add>, %360, %cst_109 [1] : vector<8x8xf32> to vector<8xf32>
    %362 = vector.shape_cast %361 : vector<8xf32> to vector<8x1xf32>
    %363 = tpu.reciprocal %362 {approx = true} : vector<8x1xf32> -> vector<8x1xf32>
    %364 = vector.broadcast %363 : vector<8x1xf32> to vector<8x8xf32>
    %365 = arith.mulf %360, %364 : vector<8x8xf32>
    %366 = arith.truncf %365 : vector<8x8xf32> to vector<8x8xbf16>
    %367 = vector.extract_strided_slice %302 {offsets = [0, 16], sizes = [8, 8], strides = [1, 1]} : vector<8x32xbf16> to vector<8x8xbf16>
    %cst_110 = arith.constant dense<0.000000e+00> : vector<8x8xf32>
    %368 = tpu.matmul %366, %367, %cst_110 {dimension_numbers = #tpu.dot_dimension_numbers<[1], [0], [0], [1], [0, 0, 1, 1], [], []>} : vector<8x8xbf16>, vector<8x8xbf16>, vector<8x8xf32> -> vector<8x8xf32>
    %369 = arith.truncf %368 : vector<8x8xf32> to vector<8x8xbf16>
    %370 = vector.extract_strided_slice %289 {offsets = [16, 0], sizes = [8, 32], strides = [1, 1]} : vector<32x32xbf16> to vector<8x32xbf16>
    %cst_111 = arith.constant dense<0.000000e+00> : vector<8x32xf32>
    %371 = tpu.matmul %369, %370, %cst_111 {dimension_numbers = #tpu.dot_dimension_numbers<[1], [0], [0], [1], [0, 0, 1, 1], [], []>} : vector<8x8xbf16>, vector<8x32xbf16>, vector<8x32xf32> -> vector<8x32xf32>
    %372 = arith.addf %349, %371 : vector<8x32xf32>
    %373 = vector.extract_strided_slice %298 {offsets = [0, 24], sizes = [8, 8], strides = [1, 1]} : vector<8x32xbf16> to vector<8x8xbf16>
    %374 = vector.extract_strided_slice %300 {offsets = [0, 24], sizes = [8, 8], strides = [1, 1]} : vector<8x32xbf16> to vector<8x8xbf16>
    %cst_112 = arith.constant dense<0.000000e+00> : vector<8x8xf32>
    %375 = tpu.matmul %373, %374, %cst_112 {dimension_numbers = #tpu.dot_dimension_numbers<[1], [1], [0], [0], [0, 0, 1, 0], [], []>} : vector<8x8xbf16>, vector<8x8xbf16>, vector<8x8xf32> -> vector<8x8xf32>
    %cst_113 = arith.constant 0.353553385 : f32
    %376 = vector.broadcast %cst_113 : f32 to vector<8x8xf32>
    %377 = arith.mulf %375, %376 : vector<8x8xf32>
    %378 = arith.addf %377, %296 : vector<8x8xf32>
    %cst_114 = arith.constant dense<0xFF800000> : vector<8xf32>
    %379 = vector.multi_reduction <maximumf>, %378, %cst_114 [1] : vector<8x8xf32> to vector<8xf32>
    %380 = vector.shape_cast %379 : vector<8xf32> to vector<8x1xf32>
    %381 = vector.broadcast %380 : vector<8x1xf32> to vector<8x8xf32>
    %382 = arith.subf %378, %381 : vector<8x8xf32>
    %383 = math.exp %382 : vector<8x8xf32>
    %cst_115 = arith.constant dense<0.000000e+00> : vector<8xf32>
    %384 = vector.multi_reduction <add>, %383, %cst_115 [1] : vector<8x8xf32> to vector<8xf32>
    %385 = vector.shape_cast %384 : vector<8xf32> to vector<8x1xf32>
    %386 = tpu.reciprocal %385 {approx = true} : vector<8x1xf32> -> vector<8x1xf32>
    %387 = vector.broadcast %386 : vector<8x1xf32> to vector<8x8xf32>
    %388 = arith.mulf %383, %387 : vector<8x8xf32>
    %389 = arith.truncf %388 : vector<8x8xf32> to vector<8x8xbf16>
    %390 = vector.extract_strided_slice %302 {offsets = [0, 24], sizes = [8, 8], strides = [1, 1]} : vector<8x32xbf16> to vector<8x8xbf16>
    %cst_116 = arith.constant dense<0.000000e+00> : vector<8x8xf32>
    %391 = tpu.matmul %389, %390, %cst_116 {dimension_numbers = #tpu.dot_dimension_numbers<[1], [0], [0], [1], [0, 0, 1, 1], [], []>} : vector<8x8xbf16>, vector<8x8xbf16>, vector<8x8xf32> -> vector<8x8xf32>
    %392 = arith.truncf %391 : vector<8x8xf32> to vector<8x8xbf16>
    %393 = vector.extract_strided_slice %289 {offsets = [24, 0], sizes = [8, 32], strides = [1, 1]} : vector<32x32xbf16> to vector<8x32xbf16>
    %cst_117 = arith.constant dense<0.000000e+00> : vector<8x32xf32>
    %394 = tpu.matmul %392, %393, %cst_117 {dimension_numbers = #tpu.dot_dimension_numbers<[1], [0], [0], [1], [0, 0, 1, 1], [], []>} : vector<8x8xbf16>, vector<8x32xbf16>, vector<8x32xf32> -> vector<8x32xf32>
    %395 = arith.addf %372, %394 : vector<8x32xf32>
    %396 = vector.extract_strided_slice %3 {offsets = [1, 0, 0], sizes = [1, 8, 8], strides = [1, 1, 1]} : vector<2x8x8xf32> to vector<1x8x8xf32>
    %397 = vector.shape_cast %396 : vector<1x8x8xf32> to vector<8x8xf32>
    %cst_118 = arith.constant 1.000000e+00 : f32
    %398 = vector.broadcast %cst_118 : f32 to vector<8x8xf32>
    %399 = arith.subf %397, %398 : vector<8x8xf32>
    %cst_119 = arith.constant 1.000000e+09 : f32
    %400 = vector.broadcast %cst_119 : f32 to vector<8x8xf32>
    %401 = arith.mulf %399, %400 : vector<8x8xf32>
    %402 = vector.extract_strided_slice %280 {offsets = [8, 0], sizes = [8, 32], strides = [1, 1]} : vector<16x32xf32> to vector<8x32xf32>
    %403 = arith.truncf %402 : vector<8x32xf32> to vector<8x32xbf16>
    %404 = vector.extract_strided_slice %287 {offsets = [8, 0], sizes = [8, 32], strides = [1, 1]} : vector<16x32xf32> to vector<8x32xf32>
    %405 = arith.truncf %404 : vector<8x32xf32> to vector<8x32xbf16>
    %406 = vector.extract_strided_slice %288 {offsets = [8, 0], sizes = [8, 32], strides = [1, 1]} : vector<16x32xf32> to vector<8x32xf32>
    %407 = arith.truncf %406 : vector<8x32xf32> to vector<8x32xbf16>
    %cst_120 = arith.constant 0.000000e+00 : f32
    %408 = vector.broadcast %cst_120 : f32 to vector<8x32xf32>
    %409 = vector.extract_strided_slice %403 {offsets = [0, 0], sizes = [8, 8], strides = [1, 1]} : vector<8x32xbf16> to vector<8x8xbf16>
    %410 = vector.extract_strided_slice %405 {offsets = [0, 0], sizes = [8, 8], strides = [1, 1]} : vector<8x32xbf16> to vector<8x8xbf16>
    %cst_121 = arith.constant dense<0.000000e+00> : vector<8x8xf32>
    %411 = tpu.matmul %409, %410, %cst_121 {dimension_numbers = #tpu.dot_dimension_numbers<[1], [1], [0], [0], [0, 0, 1, 0], [], []>} : vector<8x8xbf16>, vector<8x8xbf16>, vector<8x8xf32> -> vector<8x8xf32>
    %cst_122 = arith.constant 0.353553385 : f32
    %412 = vector.broadcast %cst_122 : f32 to vector<8x8xf32>
    %413 = arith.mulf %411, %412 : vector<8x8xf32>
    %414 = arith.addf %413, %401 : vector<8x8xf32>
    %cst_123 = arith.constant dense<0xFF800000> : vector<8xf32>
    %415 = vector.multi_reduction <maximumf>, %414, %cst_123 [1] : vector<8x8xf32> to vector<8xf32>
    %416 = vector.shape_cast %415 : vector<8xf32> to vector<8x1xf32>
    %417 = vector.broadcast %416 : vector<8x1xf32> to vector<8x8xf32>
    %418 = arith.subf %414, %417 : vector<8x8xf32>
    %419 = math.exp %418 : vector<8x8xf32>
    %cst_124 = arith.constant dense<0.000000e+00> : vector<8xf32>
    %420 = vector.multi_reduction <add>, %419, %cst_124 [1] : vector<8x8xf32> to vector<8xf32>
    %421 = vector.shape_cast %420 : vector<8xf32> to vector<8x1xf32>
    %422 = tpu.reciprocal %421 {approx = true} : vector<8x1xf32> -> vector<8x1xf32>
    %423 = vector.broadcast %422 : vector<8x1xf32> to vector<8x8xf32>
    %424 = arith.mulf %419, %423 : vector<8x8xf32>
    %425 = arith.truncf %424 : vector<8x8xf32> to vector<8x8xbf16>
    %426 = vector.extract_strided_slice %407 {offsets = [0, 0], sizes = [8, 8], strides = [1, 1]} : vector<8x32xbf16> to vector<8x8xbf16>
    %cst_125 = arith.constant dense<0.000000e+00> : vector<8x8xf32>
    %427 = tpu.matmul %425, %426, %cst_125 {dimension_numbers = #tpu.dot_dimension_numbers<[1], [0], [0], [1], [0, 0, 1, 1], [], []>} : vector<8x8xbf16>, vector<8x8xbf16>, vector<8x8xf32> -> vector<8x8xf32>
    %428 = arith.truncf %427 : vector<8x8xf32> to vector<8x8xbf16>
    %429 = vector.extract_strided_slice %289 {offsets = [0, 0], sizes = [8, 32], strides = [1, 1]} : vector<32x32xbf16> to vector<8x32xbf16>
    %cst_126 = arith.constant dense<0.000000e+00> : vector<8x32xf32>
    %430 = tpu.matmul %428, %429, %cst_126 {dimension_numbers = #tpu.dot_dimension_numbers<[1], [0], [0], [1], [0, 0, 1, 1], [], []>} : vector<8x8xbf16>, vector<8x32xbf16>, vector<8x32xf32> -> vector<8x32xf32>
    %431 = arith.addf %408, %430 : vector<8x32xf32>
    %432 = vector.extract_strided_slice %403 {offsets = [0, 8], sizes = [8, 8], strides = [1, 1]} : vector<8x32xbf16> to vector<8x8xbf16>
    %433 = vector.extract_strided_slice %405 {offsets = [0, 8], sizes = [8, 8], strides = [1, 1]} : vector<8x32xbf16> to vector<8x8xbf16>
    %cst_127 = arith.constant dense<0.000000e+00> : vector<8x8xf32>
    %434 = tpu.matmul %432, %433, %cst_127 {dimension_numbers = #tpu.dot_dimension_numbers<[1], [1], [0], [0], [0, 0, 1, 0], [], []>} : vector<8x8xbf16>, vector<8x8xbf16>, vector<8x8xf32> -> vector<8x8xf32>
    %cst_128 = arith.constant 0.353553385 : f32
    %435 = vector.broadcast %cst_128 : f32 to vector<8x8xf32>
    %436 = arith.mulf %434, %435 : vector<8x8xf32>
    %437 = arith.addf %436, %401 : vector<8x8xf32>
    %cst_129 = arith.constant dense<0xFF800000> : vector<8xf32>
    %438 = vector.multi_reduction <maximumf>, %437, %cst_129 [1] : vector<8x8xf32> to vector<8xf32>
    %439 = vector.shape_cast %438 : vector<8xf32> to vector<8x1xf32>
    %440 = vector.broadcast %439 : vector<8x1xf32> to vector<8x8xf32>
    %441 = arith.subf %437, %440 : vector<8x8xf32>
    %442 = math.exp %441 : vector<8x8xf32>
    %cst_130 = arith.constant dense<0.000000e+00> : vector<8xf32>
    %443 = vector.multi_reduction <add>, %442, %cst_130 [1] : vector<8x8xf32> to vector<8xf32>
    %444 = vector.shape_cast %443 : vector<8xf32> to vector<8x1xf32>
    %445 = tpu.reciprocal %444 {approx = true} : vector<8x1xf32> -> vector<8x1xf32>
    %446 = vector.broadcast %445 : vector<8x1xf32> to vector<8x8xf32>
    %447 = arith.mulf %442, %446 : vector<8x8xf32>
    %448 = arith.truncf %447 : vector<8x8xf32> to vector<8x8xbf16>
    %449 = vector.extract_strided_slice %407 {offsets = [0, 8], sizes = [8, 8], strides = [1, 1]} : vector<8x32xbf16> to vector<8x8xbf16>
    %cst_131 = arith.constant dense<0.000000e+00> : vector<8x8xf32>
    %450 = tpu.matmul %448, %449, %cst_131 {dimension_numbers = #tpu.dot_dimension_numbers<[1], [0], [0], [1], [0, 0, 1, 1], [], []>} : vector<8x8xbf16>, vector<8x8xbf16>, vector<8x8xf32> -> vector<8x8xf32>
    %451 = arith.truncf %450 : vector<8x8xf32> to vector<8x8xbf16>
    %452 = vector.extract_strided_slice %289 {offsets = [8, 0], sizes = [8, 32], strides = [1, 1]} : vector<32x32xbf16> to vector<8x32xbf16>
    %cst_132 = arith.constant dense<0.000000e+00> : vector<8x32xf32>
    %453 = tpu.matmul %451, %452, %cst_132 {dimension_numbers = #tpu.dot_dimension_numbers<[1], [0], [0], [1], [0, 0, 1, 1], [], []>} : vector<8x8xbf16>, vector<8x32xbf16>, vector<8x32xf32> -> vector<8x32xf32>
    %454 = arith.addf %431, %453 : vector<8x32xf32>
    %455 = vector.extract_strided_slice %403 {offsets = [0, 16], sizes = [8, 8], strides = [1, 1]} : vector<8x32xbf16> to vector<8x8xbf16>
    %456 = vector.extract_strided_slice %405 {offsets = [0, 16], sizes = [8, 8], strides = [1, 1]} : vector<8x32xbf16> to vector<8x8xbf16>
    %cst_133 = arith.constant dense<0.000000e+00> : vector<8x8xf32>
    %457 = tpu.matmul %455, %456, %cst_133 {dimension_numbers = #tpu.dot_dimension_numbers<[1], [1], [0], [0], [0, 0, 1, 0], [], []>} : vector<8x8xbf16>, vector<8x8xbf16>, vector<8x8xf32> -> vector<8x8xf32>
    %cst_134 = arith.constant 0.353553385 : f32
    %458 = vector.broadcast %cst_134 : f32 to vector<8x8xf32>
    %459 = arith.mulf %457, %458 : vector<8x8xf32>
    %460 = arith.addf %459, %401 : vector<8x8xf32>
    %cst_135 = arith.constant dense<0xFF800000> : vector<8xf32>
    %461 = vector.multi_reduction <maximumf>, %460, %cst_135 [1] : vector<8x8xf32> to vector<8xf32>
    %462 = vector.shape_cast %461 : vector<8xf32> to vector<8x1xf32>
    %463 = vector.broadcast %462 : vector<8x1xf32> to vector<8x8xf32>
    %464 = arith.subf %460, %463 : vector<8x8xf32>
    %465 = math.exp %464 : vector<8x8xf32>
    %cst_136 = arith.constant dense<0.000000e+00> : vector<8xf32>
    %466 = vector.multi_reduction <add>, %465, %cst_136 [1] : vector<8x8xf32> to vector<8xf32>
    %467 = vector.shape_cast %466 : vector<8xf32> to vector<8x1xf32>
    %468 = tpu.reciprocal %467 {approx = true} : vector<8x1xf32> -> vector<8x1xf32>
    %469 = vector.broadcast %468 : vector<8x1xf32> to vector<8x8xf32>
    %470 = arith.mulf %465, %469 : vector<8x8xf32>
    %471 = arith.truncf %470 : vector<8x8xf32> to vector<8x8xbf16>
    %472 = vector.extract_strided_slice %407 {offsets = [0, 16], sizes = [8, 8], strides = [1, 1]} : vector<8x32xbf16> to vector<8x8xbf16>
    %cst_137 = arith.constant dense<0.000000e+00> : vector<8x8xf32>
    %473 = tpu.matmul %471, %472, %cst_137 {dimension_numbers = #tpu.dot_dimension_numbers<[1], [0], [0], [1], [0, 0, 1, 1], [], []>} : vector<8x8xbf16>, vector<8x8xbf16>, vector<8x8xf32> -> vector<8x8xf32>
    %474 = arith.truncf %473 : vector<8x8xf32> to vector<8x8xbf16>
    %475 = vector.extract_strided_slice %289 {offsets = [16, 0], sizes = [8, 32], strides = [1, 1]} : vector<32x32xbf16> to vector<8x32xbf16>
    %cst_138 = arith.constant dense<0.000000e+00> : vector<8x32xf32>
    %476 = tpu.matmul %474, %475, %cst_138 {dimension_numbers = #tpu.dot_dimension_numbers<[1], [0], [0], [1], [0, 0, 1, 1], [], []>} : vector<8x8xbf16>, vector<8x32xbf16>, vector<8x32xf32> -> vector<8x32xf32>
    %477 = arith.addf %454, %476 : vector<8x32xf32>
    %478 = vector.extract_strided_slice %403 {offsets = [0, 24], sizes = [8, 8], strides = [1, 1]} : vector<8x32xbf16> to vector<8x8xbf16>
    %479 = vector.extract_strided_slice %405 {offsets = [0, 24], sizes = [8, 8], strides = [1, 1]} : vector<8x32xbf16> to vector<8x8xbf16>
    %cst_139 = arith.constant dense<0.000000e+00> : vector<8x8xf32>
    %480 = tpu.matmul %478, %479, %cst_139 {dimension_numbers = #tpu.dot_dimension_numbers<[1], [1], [0], [0], [0, 0, 1, 0], [], []>} : vector<8x8xbf16>, vector<8x8xbf16>, vector<8x8xf32> -> vector<8x8xf32>
    %cst_140 = arith.constant 0.353553385 : f32
    %481 = vector.broadcast %cst_140 : f32 to vector<8x8xf32>
    %482 = arith.mulf %480, %481 : vector<8x8xf32>
    %483 = arith.addf %482, %401 : vector<8x8xf32>
    %cst_141 = arith.constant dense<0xFF800000> : vector<8xf32>
    %484 = vector.multi_reduction <maximumf>, %483, %cst_141 [1] : vector<8x8xf32> to vector<8xf32>
    %485 = vector.shape_cast %484 : vector<8xf32> to vector<8x1xf32>
    %486 = vector.broadcast %485 : vector<8x1xf32> to vector<8x8xf32>
    %487 = arith.subf %483, %486 : vector<8x8xf32>
    %488 = math.exp %487 : vector<8x8xf32>
    %cst_142 = arith.constant dense<0.000000e+00> : vector<8xf32>
    %489 = vector.multi_reduction <add>, %488, %cst_142 [1] : vector<8x8xf32> to vector<8xf32>
    %490 = vector.shape_cast %489 : vector<8xf32> to vector<8x1xf32>
    %491 = tpu.reciprocal %490 {approx = true} : vector<8x1xf32> -> vector<8x1xf32>
    %492 = vector.broadcast %491 : vector<8x1xf32> to vector<8x8xf32>
    %493 = arith.mulf %488, %492 : vector<8x8xf32>
    %494 = arith.truncf %493 : vector<8x8xf32> to vector<8x8xbf16>
    %495 = vector.extract_strided_slice %407 {offsets = [0, 24], sizes = [8, 8], strides = [1, 1]} : vector<8x32xbf16> to vector<8x8xbf16>
    %cst_143 = arith.constant dense<0.000000e+00> : vector<8x8xf32>
    %496 = tpu.matmul %494, %495, %cst_143 {dimension_numbers = #tpu.dot_dimension_numbers<[1], [0], [0], [1], [0, 0, 1, 1], [], []>} : vector<8x8xbf16>, vector<8x8xbf16>, vector<8x8xf32> -> vector<8x8xf32>
    %497 = arith.truncf %496 : vector<8x8xf32> to vector<8x8xbf16>
    %498 = vector.extract_strided_slice %289 {offsets = [24, 0], sizes = [8, 32], strides = [1, 1]} : vector<32x32xbf16> to vector<8x32xbf16>
    %cst_144 = arith.constant dense<0.000000e+00> : vector<8x32xf32>
    %499 = tpu.matmul %497, %498, %cst_144 {dimension_numbers = #tpu.dot_dimension_numbers<[1], [0], [0], [1], [0, 0, 1, 1], [], []>} : vector<8x8xbf16>, vector<8x32xbf16>, vector<8x32xf32> -> vector<8x32xf32>
    %500 = arith.addf %477, %499 : vector<8x32xf32>
    %501 = tpu.concatenate %395, %500 in 0 : vector<8x32xf32>, vector<8x32xf32> -> vector<16x32xf32>
    %502 = vector.broadcast %290 : vector<1x32xf32> to vector<16x32xf32>
    %503 = arith.addf %501, %502 : vector<16x32xf32>
    %504 = arith.addf %251, %503 : vector<16x32xf32>
    %c9 = arith.constant 9 : index
    %c0_145 = arith.constant 0 : index
    %505 = vector.load %arg5[%c9, %c0_145] : memref<16x128xf32, #tpu.memory_space<vmem>>, vector<1x32xf32>
    %c10 = arith.constant 10 : index
    %c0_146 = arith.constant 0 : index
    %506 = vector.load %arg5[%c10, %c0_146] : memref<16x128xf32, #tpu.memory_space<vmem>>, vector<1x32xf32>
    %cst_147 = arith.constant dense<0.000000e+00> : vector<16xf32>
    %507 = vector.multi_reduction <add>, %504, %cst_147 [1] : vector<16x32xf32> to vector<16xf32>
    %508 = vector.shape_cast %507 : vector<16xf32> to vector<16x1xf32>
    %cst_148 = arith.constant 3.200000e+01 : f32
    %509 = vector.broadcast %cst_148 : f32 to vector<16x1xf32>
    %510 = arith.divf %508, %509 : vector<16x1xf32>
    %511 = vector.broadcast %510 : vector<16x1xf32> to vector<16x32xf32>
    %512 = arith.subf %504, %511 : vector<16x32xf32>
    %513 = arith.mulf %512, %512 : vector<16x32xf32>
    %cst_149 = arith.constant dense<0.000000e+00> : vector<16xf32>
    %514 = vector.multi_reduction <add>, %513, %cst_149 [1] : vector<16x32xf32> to vector<16xf32>
    %515 = vector.shape_cast %514 : vector<16xf32> to vector<16x1xf32>
    %cst_150 = arith.constant 0.0322580636 : f32
    %516 = vector.broadcast %cst_150 : f32 to vector<16x1xf32>
    %517 = arith.mulf %515, %516 : vector<16x1xf32>
    %518 = math.sqrt %517 : vector<16x1xf32>
    %cst_151 = arith.constant 9.99999997E-7 : f32
    %519 = vector.broadcast %cst_151 : f32 to vector<16x1xf32>
    %520 = arith.addf %518, %519 : vector<16x1xf32>
    %521 = tpu.reciprocal %520 {approx = true} : vector<16x1xf32> -> vector<16x1xf32>
    %522 = vector.broadcast %505 : vector<1x32xf32> to vector<16x32xf32>
    %523 = arith.mulf %522, %512 : vector<16x32xf32>
    %524 = vector.broadcast %521 : vector<16x1xf32> to vector<16x32xf32>
    %525 = arith.mulf %523, %524 : vector<16x32xf32>
    %526 = vector.broadcast %506 : vector<1x32xf32> to vector<16x32xf32>
    %527 = arith.addf %525, %526 : vector<16x32xf32>
    %528 = arith.truncf %527 : vector<16x32xf32> to vector<16x32xbf16>
    %c160 = arith.constant 160 : index
    %c0_152 = arith.constant 0 : index
    %529 = vector.load %arg4[%c160, %c0_152] : memref<256x128xbf16, #tpu.memory_space<vmem>>, vector<32x64xbf16>
    %cst_153 = arith.constant dense<0.000000e+00> : vector<16x64xf32>
    %530 = tpu.matmul %528, %529, %cst_153 {dimension_numbers = #tpu.dot_dimension_numbers<[1], [0], [0], [1], [0, 0, 1, 1], [], []>} : vector<16x32xbf16>, vector<32x64xbf16>, vector<16x64xf32> -> vector<16x64xf32>
    %c11 = arith.constant 11 : index
    %c0_154 = arith.constant 0 : index
    %531 = vector.load %arg5[%c11, %c0_154] : memref<16x128xf32, #tpu.memory_space<vmem>>, vector<1x64xf32>
    %532 = vector.broadcast %531 : vector<1x64xf32> to vector<16x64xf32>
    %533 = arith.addf %530, %532 : vector<16x64xf32>
    %cst_155 = arith.constant 0.000000e+00 : f32
    %534 = vector.broadcast %cst_155 : f32 to vector<16x64xf32>
    %535 = arith.maximumf %533, %534 : vector<16x64xf32>
    %536 = arith.truncf %535 : vector<16x64xf32> to vector<16x64xbf16>
    %c192 = arith.constant 192 : index
    %c0_156 = arith.constant 0 : index
    %537 = vector.load %arg4[%c192, %c0_156] : memref<256x128xbf16, #tpu.memory_space<vmem>>, vector<64x32xbf16>
    %cst_157 = arith.constant dense<0.000000e+00> : vector<16x32xf32>
    %538 = tpu.matmul %536, %537, %cst_157 {dimension_numbers = #tpu.dot_dimension_numbers<[1], [0], [0], [1], [0, 0, 1, 1], [], []>} : vector<16x64xbf16>, vector<64x32xbf16>, vector<16x32xf32> -> vector<16x32xf32>
    %539 = arith.addf %504, %538 : vector<16x32xf32>
    %c12 = arith.constant 12 : index
    %c0_158 = arith.constant 0 : index
    %540 = vector.load %arg5[%c12, %c0_158] : memref<16x128xf32, #tpu.memory_space<vmem>>, vector<1x32xf32>
    %541 = vector.broadcast %540 : vector<1x32xf32> to vector<16x32xf32>
    %542 = arith.addf %539, %541 : vector<16x32xf32>
    %c0_159 = arith.constant 0 : index
    %c0_160 = arith.constant 0 : index
    %543 = vector.load %arg6[%c0_159, %c0_160] : memref<16x32xf32, #tpu.memory_space<vmem>>, vector<16x32xf32>
    tpu.vector_store %arg6[%c0_159, %c0_160], %542 {strides = array<i32>} : memref<16x32xf32, #tpu.memory_space<vmem>>, vector<16x32xf32>,
    return
  }
}

</mosaic_0001>

<llo_original>
// kernel: decoder_block.1
$region0: #{decoder_block.1}
  #allocation0 [shape = 'u32[]', space=smem, size = 0x4, offset = 0x4, fixed_abs, tag = 'smem constant byte address 0x4 - core index']
  #allocation1 [shape = 'u32[144,128]{1,0:T(1,128)}', space=vmem, size = 0x12000, scoped, tag = 'internal scratch']
  %s0 = inlined_call_operand.hbm [shape: f32[16,32], index: 0, kind: input, shape index: {}]
  %s1 = inlined_call_operand.hbm [shape: f32[16,32], index: 1, kind: input, shape index: {}]
  %s2 = inlined_call_operand.hbm [shape: f32[2,8,8], index: 2, kind: input, shape index: {}]
  %s3 = inlined_call_operand.hbm [shape: f32[2,8,8], index: 3, kind: input, shape index: {}]
  %s4 = inlined_call_operand.hbm [shape: bf16[256,128], index: 4, kind: input, shape index: {}]
  %s5 = inlined_call_operand.vmem [shape: f32[16,128], index: 5, kind: input, shape index: {}]
  %s6 = inlined_call_operand.hbm [shape: f32[16,32], index: 6, kind: output, shape index: {}]
  %s7 = sld [smem:[#allocation0]]
  $region54: #{decoder_block.1} parent=0
    _
  %s9 = ssub.s32 1, %s7
  %s10 = scalar_select 0, %s9, %s7
  $region1: #{decoder_block.1} parent=0
    #allocation2 [shape = 'u8[8192]{0}', space=vmem, size = 0x2000, scoped, tag = 'input window, operand 0, single buffered']
    #allocation3 [shape = 's32[1]{0}', space=sflag, size = 0x4, scoped, tag = 'scoped memory for decoder_block.1']
    #allocation4 [shape = 's32[1]{0}', space=sflag, size = 0x4, scoped, tag = 'scoped memory for decoder_block.1']
    #allocation5 [shape = 'u8[8192]{0}', space=vmem, size = 0x2000, scoped, tag = 'input window, operand 1, single buffered']
    #allocation6 [shape = 's32[1]{0}', space=sflag, size = 0x4, scoped, tag = 'scoped memory for decoder_block.1']
    #allocation7 [shape = 'u8[8192]{0}', space=vmem, size = 0x2000, scoped, tag = 'input window, operand 2, single buffered']
    #allocation8 [shape = 'u8[8192]{0}', space=vmem, size = 0x2000, scoped, tag = 'input window, operand 3, single buffered']
    #allocation9 [shape = 's32[1]{0}', space=sflag, size = 0x4, scoped, tag = 'scoped memory for decoder_block.1']
    #allocation10 [shape = 'u8[65536]{0}', space=vmem, size = 0x10000, scoped, tag = 'input window, operand 4, single buffered']
    #allocation11 [shape = 'u8[8192]{0}', space=vmem, size = 0x2000, scoped, tag = 'output window, operand 0, single buffered']
    %11 = vsyncpa [#allocation3], 0
    %12 = vsyncpa [#allocation6], 0
    %13 = vsyncpa [#allocation9], 0
    %14 = vsyncpa [#allocation4], 0
    // Predicated region
    $region2: #{decoder_block.1} parent=1 // pred_check
      _
    $region3: #{decoder_block.1} parent=1 // pred_check_branch
      %16 = sbr.rel (0) target = $region5
    $region4: #{decoder_block.1} parent=1 // pred_region
      %s18 = ssub.s32 256, 256
      %19 = vsyncadd [#allocation3], %s18
      %s20 = sshll.u32 [#allocation2], 4
      %s21 = int_to_ptr.vmem [resolvable:$true] %s20
      %26 = dma.hbm_to_vmem [thread:$0]  %s0, 256, %s21, [#allocation3], 128, 128, 8
    $region5: #{decoder_block.1} parent=1 // pred_fallthru
      _
    // Predicated region
    $region6: #{decoder_block.1} parent=1 // pred_check
      _
    $region7: #{decoder_block.1} parent=1 // pred_check_branch
      %28 = sbr.rel (0) target = $region9
    $region8: #{decoder_block.1} parent=1 // pred_region
      %s30 = ssub.s32 256, 256
      %31 = vsyncadd [#allocation6], %s30
      %s32 = sshll.u32 [#allocation5], 4
      %s33 = int_to_ptr.vmem [resolvable:$true] %s32
      %38 = dma.hbm_to_vmem [thread:$0]  %s1, 256, %s33, [#allocation6], 128, 128, 8
    $region9: #{decoder_block.1} parent=1 // pred_fallthru
      _
    // Predicated region
    $region10: #{decoder_block.1} parent=1 // pred_check
      _
    $region11: #{decoder_block.1} parent=1 // pred_check_branch
      %40 = sbr.rel (0) target = $region13
    $region12: #{decoder_block.1} parent=1 // pred_region
      %s42 = ssub.s32 256, 256
      %43 = vsyncadd [#allocation6], %s42
      %s44 = sshll.u32 [#allocation7], 4
      %s45 = int_to_ptr.vmem [resolvable:$true] %s44
      %50 = dma.hbm_to_vmem [thread:$0]  %s2, 256, %s45, [#allocation6], 128, 128, 8
    $region13: #{decoder_block.1} parent=1 // pred_fallthru
      _
    // Predicated region
    $region14: #{decoder_block.1} parent=1 // pred_check
      _
    $region15: #{decoder_block.1} parent=1 // pred_check_branch
      %52 = sbr.rel (0) target = $region17
    $region16: #{decoder_block.1} parent=1 // pred_region
      %s54 = ssub.s32 256, 256
      %55 = vsyncadd [#allocation9], %s54
      %s56 = sshll.u32 [#allocation8], 4
      %s57 = int_to_ptr.vmem [resolvable:$true] %s56
      %62 = dma.hbm_to_vmem [thread:$0]  %s3, 256, %s57, [#allocation9], 128, 128, 8
    $region17: #{decoder_block.1} parent=1 // pred_fallthru
      _
    // Predicated region
    $region18: #{decoder_block.1} parent=1 // pred_check
      _
    $region19: #{decoder_block.1} parent=1 // pred_check_branch
      %64 = sbr.rel (0) target = $region21
    $region20: #{decoder_block.1} parent=1 // pred_region
      %s66 = ssub.s32 2048, 2048
      %67 = vsyncadd [#allocation9], %s66
      %s68 = sshll.u32 [#allocation10], 4
      %s69 = int_to_ptr.vmem [resolvable:$true] %s68
      %74 = dma.hbm_to_vmem [thread:$0]  %s4, 2048, %s69, [#allocation9], 64, 64, 4
    $region21: #{decoder_block.1} parent=1 // pred_fallthru
      _
    // Predicated region
    $region22: #{decoder_block.1} parent=1 // pred_check
      _
    $region23: #{decoder_block.1} parent=1 // pred_check_branch
      %76 = sbr.rel (0) target = $region25
    $region24: #{decoder_block.1} parent=1 // pred_region
      _
    $region25: #{decoder_block.1} parent=1 // pred_fallthru
      _
    // Predicated region
    $region26: #{decoder_block.1} parent=1 // pred_check
      _
    $region27: #{decoder_block.1} parent=1 // pred_check_branch
      %78 = sbr.rel (0) target = $region29
    $region28: #{decoder_block.1} parent=1 // pred_region
      %79 = dma.done [#allocation3], 256
    $region29: #{decoder_block.1} parent=1 // pred_fallthru
      _
    // Predicated region
    $region30: #{decoder_block.1} parent=1 // pred_check
      _
    $region31: #{decoder_block.1} parent=1 // pred_check_branch
      %81 = sbr.rel (0) target = $region33
    $region32: #{decoder_block.1} parent=1 // pred_region
      %82 = dma.done [#allocation6], 256
    $region33: #{decoder_block.1} parent=1 // pred_fallthru
      _
    // Predicated region
    $region34: #{decoder_block.1} parent=1 // pred_check
      _
    $region35: #{decoder_block.1} parent=1 // pred_check_branch
      %84 = sbr.rel (0) target = $region37
    $region36: #{decoder_block.1} parent=1 // pred_region
      %85 = dma.done [#allocation6], 256
    $region37: #{decoder_block.1} parent=1 // pred_fallthru
      _
    // Predicated region
    $region38: #{decoder_block.1} parent=1 // pred_check
      _
    $region39: #{decoder_block.1} parent=1 // pred_check_branch
      %87 = sbr.rel (0) target = $region41
    $region40: #{decoder_block.1} parent=1 // pred_region
      %88 = dma.done [#allocation9], 256
    $region41: #{decoder_block.1} parent=1 // pred_fallthru
      _
    // Predicated region
    $region42: #{decoder_block.1} parent=1 // pred_check
      _
    $region43: #{decoder_block.1} parent=1 // pred_check_branch
      %90 = sbr.rel (0) target = $region45
    $region44: #{decoder_block.1} parent=1 // pred_region
      %91 = dma.done [#allocation9], 2048
    $region45: #{decoder_block.1} parent=1 // pred_fallthru
      _
    %v93 = vld [vmem:[#allocation2] sm:$0xff]
    %v94 = vld [vmem:[#allocation2 + $0x8] sm:$0xff]
    %v95 = vld [vmem:[#allocation5] sm:$0xff]
    %v96 = vld [vmem:[#allocation5 + $0x8] sm:$0xff]
    %v97 = vld [vmem:[#allocation7] sm:$0xff]
    %v98 = vld [vmem:[#allocation7 + $0x8] sm:$0xff]
    %v99 = vld [vmem:[#allocation8] sm:$0xff]
    %v100 = vld [vmem:[#allocation8 + $0x8] sm:$0xff]
    %v101 = vld [vmem:[%s5] sm:$0x1]
    %v102 = vld [vmem:[%s5 + $0x1] sm:$0x1]
    %vm103 = vcmask 261120
    %v104 = vsel %vm103, %v93, 0.0
    %105 = vadd.xlane.f32.xlu0 %v104
    %v106 = vpop.xlane.xlu0 %105
    %v107 = vsel %vm103, %v94, 0.0
    %108 = vadd.xlane.f32.xlu0 %v107
    %v109 = vpop.xlane.xlu0 %108
    %v110 = vrcp.pop 32.0
    %v111 = vmul.f32 %v106, %v110
    %v112 = vmul.f32 %v109, %v110
    %v113 = vsub.f32 %v93, %v111
    %v114 = vsub.f32 %v94, %v112
    %v115 = vmul.f32 %v113, %v113
    %v116 = vmul.f32 %v114, %v114
    %v117 = vsel %vm103, %v115, 0.0
    %118 = vadd.xlane.f32.xlu0 %v117
    %v119 = vpop.xlane.xlu0 %118
    %v120 = vsel %vm103, %v116, 0.0
    %121 = vadd.xlane.f32.xlu0 %v120
    %v122 = vpop.xlane.xlu0 %121
    %v123 = vmul.f32 %v119, 0.032258064
    %v124 = vmul.f32 %v122, 0.032258064
    %v125 = vrsqrt.pop %v123
    %v126 = vmul.f32 %v123, %v125
    %vm127 = vcmp.eq.f32.partialorder %v123, inf
    %v128 = vsel %vm127, %v123, %v126
    %vm129 = vcmp.eq.f32.partialorder %v123, 0.0
    %v130 = vand.u32 %v123, 2147483648
    %v131 = vsel %vm129, %v130, %v128
    %v132 = vrsqrt.pop %v124
    %v133 = vmul.f32 %v124, %v132
    %vm134 = vcmp.eq.f32.partialorder %v124, inf
    %v135 = vsel %vm134, %v124, %v133
    %vm136 = vcmp.eq.f32.partialorder %v124, 0.0
    %v137 = vand.u32 %v124, 2147483648
    %v138 = vsel %vm136, %v137, %v135
    %v139 = vadd.f32 %v131, 1e-06
    %v140 = vadd.f32 %v138, 1e-06
    %v141 = vrcp.pop %v139
    %v142 = vrcp.pop %v140
    %v143 = vlaneseq
    %v144 = vshrl.u32 %v143, 7
    %v145 = vsub.s32 0, %v144
    %v146 = vrot.slane %v101, %v145
    %v147 = vmul.f32 %v146, %v113
    %v148 = vmul.f32 %v146, %v114
    %v149 = vmul.f32 %v147, %v141
    %v150 = vmul.f32 %v148, %v142
    %v151 = vlaneseq
    %v152 = vshrl.u32 %v151, 7
    %v153 = vsub.s32 0, %v152
    %v154 = vrot.slane %v102, %v153
    %v155 = vadd.f32 %v149, %v154
    %v156 = vadd.f32 %v150, %v154
    %v157 = vpack.c.bf16 %v156, %v155
    %v158 = vld [vmem:[#allocation10] sm:$0xf]
    %v159 = vld [vmem:[#allocation10 + $0x4] sm:$0xf]
    %v160 = vld [vmem:[#allocation10 + $0x8] sm:$0xf]
    %v161 = vld [vmem:[#allocation10 + $0xc] sm:$0xf]
    %v162 = vld [vmem:[%s5 + $0x2] sm:$0x1]
    %v163 = vlaneseq
    %v164 = vshrl.u32 %v163, 7
    %v165 = vsub.s32 0, %v164
    %v166 = vrot.slane %v162, %v165
    %v171 = vunpack.c.l.b16 %v158
    %v172 = vunpack.c.l.b16 %v159
    %v173 = vunpack.c.l.b16 %v160
    %v174 = vunpack.c.l.b16 %v161
    %v175 = vpack.c.b16 %v172, %v171
    %v176 = vpack.c.b16 %v174, %v173
    %v180 = vsel %vm103, %v157, 0
    %182 = vmatprep.subr.bf16.mxu0 0
    %183 = vmatpush1.bf16.msra.mxu0 0
    %184 = vmatprep.subr.bf16.mxu0 0
    %185 = vmatpush1.bf16.msra.mxu0 0
    %186 = vmatprep.subr.bf16.mxu0 0
    %187 = vmatpush1.bf16.msra.mxu0 0
    %188 = vmatprep.subr.bf16.mxu0 0
    %189 = vmatpush1.bf16.msra.mxu0 0
    %190 = vmatprep.subr.bf16.mxu0 0
    %191 = vmatpush1.bf16.msra.mxu0 0
    %192 = vmatprep.subr.bf16.mxu0 0
    %193 = vmatpush1.bf16.msra.mxu0 0
    %194 = vmatprep.subr.bf16.mxu0 0
    %195 = vmatpush1.bf16.msra.mxu0 %v176
    %196 = vmatprep.subr.bf16.mxu0 0
    %197 = vmatpush1.bf16.msra.mxu0 %v175
    %198 = vmatprep.subr.bf16.mxu0 0
    %199 = vmatpush2.bf16.msra.mxu0 0
    %200 = vmatprep.subr.bf16.mxu0 0
    %201 = vmatpush2.bf16.msra.mxu0 0
    %202 = vmatprep.subr.bf16.mxu0 0
    %203 = vmatpush2.bf16.msra.mxu0 0
    %204 = vmatprep.subr.bf16.mxu0 0
    %205 = vmatpush2.bf16.msra.mxu0 0
    %206 = vmatprep.subr.bf16.mxu0 0
    %207 = vmatpush2.bf16.msra.mxu0 0
    %208 = vmatprep.subr.bf16.mxu0 0
    %209 = vmatpush2.bf16.msra.mxu0 0
    %210 = vmatprep.subr.bf16.mxu0 0
    %211 = vmatpush2.bf16.msra.mxu0 0
    %212 = vmatprep.subr.bf16.mxu0 0
    %213 = vmatpush2.bf16.msra.mxu0 0
    %214 = vmatprep.mubr.bf16.mxu0 0
    %215 = vmatmul.mubr.bf16.gmra.mxu0 %v180
    %v216 = vpop.f32.mrf.mxu0
    %v217 = vadd.f32 %v166, %v216
    %v218 = vpop.f32.mrf.mxu0
    %v219 = vpop.f32.mrf.mxu0
    %v220 = vadd.f32 %v166, %v219
    %v221 = vpop.f32.mrf.mxu0
    %222 = vdwg.mxu0
    %v223 = vld [vmem:[#allocation10 + $0x10] sm:$0xf]
    %v224 = vld [vmem:[#allocation10 + $0x14] sm:$0xf]
    %v225 = vld [vmem:[#allocation10 + $0x18] sm:$0xf]
    %v226 = vld [vmem:[#allocation10 + $0x1c] sm:$0xf]
    %v227 = vld [vmem:[%s5 + $0x3] sm:$0x1]
    %v228 = vsub.f32 %v97, 1.0
    %v229 = vmul.f32 %v228, 1e+09
    %v230 = vpack.c.bf16 %v217, %v217
    %232 = vrot.lane.b32.xlu0 %v230, 96
    %v233 = vpop.permute.xlu0 %232
    %vm234 = vcmask 64512
    %v236 = vsel %vm234, %v230, 0
    %v239 = vsel %vm234, %v233, 0
    %241 = vmatprep.subr.bf16.mxu0 0
    %242 = vmatpush1.bf16.xpose.msra.mxu0 0
    %243 = vmatprep.subr.bf16.mxu0 0
    %244 = vmatpush1.bf16.xpose.msra.mxu0 0
    %245 = vmatprep.subr.bf16.mxu0 0
    %246 = vmatpush1.bf16.xpose.msra.mxu0 0
    %247 = vmatprep.subr.bf16.mxu0 0
    %248 = vmatpush1.bf16.xpose.msra.mxu0 0
    %249 = vmatprep.subr.bf16.mxu0 0
    %250 = vmatpush1.bf16.xpose.msra.mxu0 0
    %251 = vmatprep.subr.bf16.mxu0 0
    %252 = vmatpush1.bf16.xpose.msra.mxu0 0
    %253 = vmatprep.subr.bf16.mxu0 0
    %254 = vmatpush1.bf16.xpose.msra.mxu0 0
    %255 = vmatprep.subr.bf16.mxu0 0
    %256 = vmatpush1.bf16.xpose.msra.mxu0 %v239
    %257 = vmatprep.subr.bf16.mxu0 0
    %258 = vmatpush2.bf16.xpose.msra.mxu0 0
    %259 = vmatprep.subr.bf16.mxu0 0
    %260 = vmatpush2.bf16.xpose.msra.mxu0 0
    %261 = vmatprep.subr.bf16.mxu0 0
    %262 = vmatpush2.bf16.xpose.msra.mxu0 0
    %263 = vmatprep.subr.bf16.mxu0 0
    %264 = vmatpush2.bf16.xpose.msra.mxu0 0
    %265 = vmatprep.subr.bf16.mxu0 0
    %266 = vmatpush2.bf16.xpose.msra.mxu0 0
    %267 = vmatprep.subr.bf16.mxu0 0
    %268 = vmatpush2.bf16.xpose.msra.mxu0 0
    %269 = vmatprep.subr.bf16.mxu0 0
    %270 = vmatpush2.bf16.xpose.msra.mxu0 0
    %271 = vmatprep.subr.bf16.mxu0 0
    %272 = vmatpush2.bf16.xpose.msra.mxu0 0
    %273 = vmatprep.mubr.bf16.mxu0 0
    %274 = vmatmul.mubr.bf16.gmra.mxu0 %v236
    %v275 = vpop.f32.mrf.mxu0
    %v276 = vadd.f32 0.0, %v275
    %v277 = vpop.f32.mrf.mxu0
    %v278 = vpop.f32.mrf.mxu0
    %v279 = vpop.f32.mrf.mxu0
    %280 = vdwg.mxu0
    %v281 = vmul.f32 %v276, 0.35355338
    %v282 = vadd.f32 %v281, %v229
    %v283 = vsel %vm234, %v282, -inf
    %284 = vmax.xlane.f32.xlu0 %v283
    %v285 = vpop.xlane.xlu0 %284
    %v286 = vsub.f32 %v282, %v285
    %v287 = vmul.f32 %v286, 1.442695
    %v288 = vpow.pop %v287
    %v289 = vsel %vm234, %v288, 0.0
    %290 = vadd.xlane.f32.xlu0 %v289
    %v291 = vpop.xlane.xlu0 %290
    %v292 = vrcp.pop %v291
    %v293 = vmul.f32 %v288, %v292
    %v294 = vpack.c.bf16 %v293, %v293
    %295 = vrot.lane.b32.xlu0 %v230, 64
    %v296 = vpop.permute.xlu0 %295
    %v298 = vsel %vm234, %v294, 0
    %vm300 = vcmask 1043456
    %v302 = vsel %vm300, %v296, 0
    %304 = vmatprep.subr.bf16.mxu0 0
    %305 = vmatpush1.bf16.msra.mxu0 0
    %306 = vmatprep.subr.bf16.mxu0 0
    %307 = vmatpush1.bf16.msra.mxu0 0
    %308 = vmatprep.subr.bf16.mxu0 0
    %309 = vmatpush1.bf16.msra.mxu0 0
    %310 = vmatprep.subr.bf16.mxu0 0
    %311 = vmatpush1.bf16.msra.mxu0 0
    %312 = vmatprep.subr.bf16.mxu0 0
    %313 = vmatpush1.bf16.msra.mxu0 0
    %314 = vmatprep.subr.bf16.mxu0 0
    %315 = vmatpush1.bf16.msra.mxu0 0
    %316 = vmatprep.subr.bf16.mxu0 0
    %317 = vmatpush1.bf16.msra.mxu0 0
    %318 = vmatprep.subr.bf16.mxu0 0
    %319 = vmatpush1.bf16.msra.mxu0 %v302
    %320 = vmatprep.subr.bf16.mxu0 0
    %321 = vmatpush2.bf16.msra.mxu0 0
    %322 = vmatprep.subr.bf16.mxu0 0
    %323 = vmatpush2.bf16.msra.mxu0 0
    %324 = vmatprep.subr.bf16.mxu0 0
    %325 = vmatpush2.bf16.msra.mxu0 0
    %326 = vmatprep.subr.bf16.mxu0 0
    %327 = vmatpush2.bf16.msra.mxu0 0
    %328 = vmatprep.subr.bf16.mxu0 0
    %329 = vmatpush2.bf16.msra.mxu0 0
    %330 = vmatprep.subr.bf16.mxu0 0
    %331 = vmatpush2.bf16.msra.mxu0 0
    %332 = vmatprep.subr.bf16.mxu0 0
    %333 = vmatpush2.bf16.msra.mxu0 0
    %334 = vmatprep.subr.bf16.mxu0 0
    %335 = vmatpush2.bf16.msra.mxu0 0
    %336 = vmatprep.mubr.bf16.mxu0 0
    %337 = vmatmul.mubr.bf16.gmra.mxu0 %v298
    %v338 = vpop.f32.mrf.mxu0
    %v339 = vadd.f32 0.0, %v338
    %v340 = vpop.f32.mrf.mxu0
    %v341 = vpop.f32.mrf.mxu0
    %v342 = vpop.f32.mrf.mxu0
    %343 = vdwg.mxu0
    %v344 = vpack.c.bf16 %v339, %v339
    %345 = vrot.lane.b32.xlu0 %v230, 120
    %v346 = vpop.permute.xlu0 %345
    %347 = vrot.lane.b32.xlu0 %v230, 88
    %v348 = vpop.permute.xlu0 %347
    %v350 = vsel %vm234, %v346, 0
    %v353 = vsel %vm234, %v348, 0
    %355 = vmatprep.subr.bf16.mxu0 0
    %356 = vmatpush1.bf16.xpose.msra.mxu0 0
    %357 = vmatprep.subr.bf16.mxu0 0
    %358 = vmatpush1.bf16.xpose.msra.mxu0 0
    %359 = vmatprep.subr.bf16.mxu0 0
    %360 = vmatpush1.bf16.xpose.msra.mxu0 0
    %361 = vmatprep.subr.bf16.mxu0 0
    %362 = vmatpush1.bf16.xpose.msra.mxu0 0
    %363 = vmatprep.subr.bf16.mxu0 0
    %364 = vmatpush1.bf16.xpose.msra.mxu0 0
    %365 = vmatprep.subr.bf16.mxu0 0
    %366 = vmatpush1.bf16.xpose.msra.mxu0 0
    %367 = vmatprep.subr.bf16.mxu0 0
    %368 = vmatpush1.bf16.xpose.msra.mxu0 0
    %369 = vmatprep.subr.bf16.mxu0 0
    %370 = vmatpush1.bf16.xpose.msra.mxu0 %v353
    %371 = vmatprep.subr.bf16.mxu0 0
    %372 = vmatpush2.bf16.xpose.msra.mxu0 0
    %373 = vmatprep.subr.bf16.mxu0 0
    %374 = vmatpush2.bf16.xpose.msra.mxu0 0
    %375 = vmatprep.subr.bf16.mxu0 0
    %376 = vmatpush2.bf16.xpose.msra.mxu0 0
    %377 = vmatprep.subr.bf16.mxu0 0
    %378 = vmatpush2.bf16.xpose.msra.mxu0 0
    %379 = vmatprep.subr.bf16.mxu0 0
    %380 = vmatpush2.bf16.xpose.msra.mxu0 0
    %381 = vmatprep.subr.bf16.mxu0 0
    %382 = vmatpush2.bf16.xpose.msra.mxu0 0
    %383 = vmatprep.subr.bf16.mxu0 0
    %384 = vmatpush2.bf16.xpose.msra.mxu0 0
    %385 = vmatprep.subr.bf16.mxu0 0
    %386 = vmatpush2.bf16.xpose.msra.mxu0 0
    %387 = vmatprep.mubr.bf16.mxu0 0
    %388 = vmatmul.mubr.bf16.gmra.mxu0 %v350
    %v389 = vpop.f32.mrf.mxu0
    %v390 = vadd.f32 0.0, %v389
    %v391 = vpop.f32.mrf.mxu0
    %v392 = vpop.f32.mrf.mxu0
    %v393 = vpop.f32.mrf.mxu0
    %394 = vdwg.mxu0
    %v395 = vmul.f32 %v390, 0.35355338
    %v396 = vadd.f32 %v395, %v229
    %v397 = vsel %vm234, %v396, -inf
    %398 = vmax.xlane.f32.xlu0 %v397
    %v399 = vpop.xlane.xlu0 %398
    %v400 = vsub.f32 %v396, %v399
    %v401 = vmul.f32 %v400, 1.442695
    %v402 = vpow.pop %v401
    %v403 = vsel %vm234, %v402, 0.0
    %404 = vadd.xlane.f32.xlu0 %v403
    %v405 = vpop.xlane.xlu0 %404
    %v406 = vrcp.pop %v405
    %v407 = vmul.f32 %v402, %v406
    %v408 = vpack.c.bf16 %v407, %v407
    %409 = vrot.lane.b32.xlu0 %v230, 56
    %v410 = vpop.permute.xlu0 %409
    %v412 = vsel %vm234, %v408, 0
    %v415 = vsel %vm300, %v410, 0
    %417 = vmatprep.subr.bf16.mxu0 0
    %418 = vmatpush1.bf16.msra.mxu0 0
    %419 = vmatprep.subr.bf16.mxu0 0
    %420 = vmatpush1.bf16.msra.mxu0 0
    %421 = vmatprep.subr.bf16.mxu0 0
    %422 = vmatpush1.bf16.msra.mxu0 0
    %423 = vmatprep.subr.bf16.mxu0 0
    %424 = vmatpush1.bf16.msra.mxu0 0
    %425 = vmatprep.subr.bf16.mxu0 0
    %426 = vmatpush1.bf16.msra.mxu0 0
    %427 = vmatprep.subr.bf16.mxu0 0
    %428 = vmatpush1.bf16.msra.mxu0 0
    %429 = vmatprep.subr.bf16.mxu0 0
    %430 = vmatpush1.bf16.msra.mxu0 0
    %431 = vmatprep.subr.bf16.mxu0 0
    %432 = vmatpush1.bf16.msra.mxu0 %v415
    %433 = vmatprep.subr.bf16.mxu0 0
    %434 = vmatpush2.bf16.msra.mxu0 0
    %435 = vmatprep.subr.bf16.mxu0 0
    %436 = vmatpush2.bf16.msra.mxu0 0
    %437 = vmatprep.subr.bf16.mxu0 0
    %438 = vmatpush2.bf16.msra.mxu0 0
    %439 = vmatprep.subr.bf16.mxu0 0
    %440 = vmatpush2.bf16.msra.mxu0 0
    %441 = vmatprep.subr.bf16.mxu0 0
    %442 = vmatpush2.bf16.msra.mxu0 0
    %443 = vmatprep.subr.bf16.mxu0 0
    %444 = vmatpush2.bf16.msra.mxu0 0
    %445 = vmatprep.subr.bf16.mxu0 0
    %446 = vmatpush2.bf16.msra.mxu0 0
    %447 = vmatprep.subr.bf16.mxu0 0
    %448 = vmatpush2.bf16.msra.mxu0 0
    %449 = vmatprep.mubr.bf16.mxu0 0
    %450 = vmatmul.mubr.bf16.gmra.mxu0 %v412
    %v451 = vpop.f32.mrf.mxu0
    %v452 = vadd.f32 0.0, %v451
    %v453 = vpop.f32.mrf.mxu0
    %v454 = vpop.f32.mrf.mxu0
    %v455 = vpop.f32.mrf.mxu0
    %456 = vdwg.mxu0
    %v457 = vpack.c.bf16 %v452, %v452
    %v459 = vsel %vm234, %v457, 0
    %v462 = vsel %vm300, %v224, 0
    %464 = vmatprep.subr.bf16.mxu0 0
    %465 = vmatpush1.bf16.msra.mxu0 0
    %466 = vmatprep.subr.bf16.mxu0 0
    %467 = vmatpush1.bf16.msra.mxu0 0
    %468 = vmatprep.subr.bf16.mxu0 0
    %469 = vmatpush1.bf16.msra.mxu0 0
    %470 = vmatprep.subr.bf16.mxu0 0
    %471 = vmatpush1.bf16.msra.mxu0 0
    %472 = vmatprep.subr.bf16.mxu0 0
    %473 = vmatpush1.bf16.msra.mxu0 0
    %474 = vmatprep.subr.bf16.mxu0 0
    %475 = vmatpush1.bf16.msra.mxu0 0
    %476 = vmatprep.subr.bf16.mxu0 0
    %477 = vmatpush1.bf16.msra.mxu0 0
    %478 = vmatprep.subr.bf16.mxu0 0
    %479 = vmatpush1.bf16.msra.mxu0 %v462
    %480 = vmatprep.subr.bf16.mxu0 0
    %481 = vmatpush2.bf16.msra.mxu0 0
    %482 = vmatprep.subr.bf16.mxu0 0
    %483 = vmatpush2.bf16.msra.mxu0 0
    %484 = vmatprep.subr.bf16.mxu0 0
    %485 = vmatpush2.bf16.msra.mxu0 0
    %486 = vmatprep.subr.bf16.mxu0 0
    %487 = vmatpush2.bf16.msra.mxu0 0
    %488 = vmatprep.subr.bf16.mxu0 0
    %489 = vmatpush2.bf16.msra.mxu0 0
    %490 = vmatprep.subr.bf16.mxu0 0
    %491 = vmatpush2.bf16.msra.mxu0 0
    %492 = vmatprep.subr.bf16.mxu0 0
    %493 = vmatpush2.bf16.msra.mxu0 0
    %494 = vmatprep.subr.bf16.mxu0 0
    %495 = vmatpush2.bf16.msra.mxu0 0
    %496 = vmatprep.mubr.bf16.mxu0 0
    %497 = vmatmul.mubr.bf16.gmra.mxu0 %v459
    %v498 = vpop.f32.mrf.mxu0
    %v499 = vadd.f32 0.0, %v498
    %v500 = vpop.f32.mrf.mxu0
    %v501 = vpop.f32.mrf.mxu0
    %v502 = vpop.f32.mrf.mxu0
    %503 = vdwg.mxu0
    %v505 = vsel %vm234, %v344, 0
    %v508 = vsel %vm300, %v223, 0
    %510 = vmatprep.subr.bf16.mxu0 0
    %511 = vmatpush1.bf16.msra.mxu0 0
    %512 = vmatprep.subr.bf16.mxu0 0
    %513 = vmatpush1.bf16.msra.mxu0 0
    %514 = vmatprep.subr.bf16.mxu0 0
    %515 = vmatpush1.bf16.msra.mxu0 0
    %516 = vmatprep.subr.bf16.mxu0 0
    %517 = vmatpush1.bf16.msra.mxu0 0
    %518 = vmatprep.subr.bf16.mxu0 0
    %519 = vmatpush1.bf16.msra.mxu0 0
    %520 = vmatprep.subr.bf16.mxu0 0
    %521 = vmatpush1.bf16.msra.mxu0 0
    %522 = vmatprep.subr.bf16.mxu0 0
    %523 = vmatpush1.bf16.msra.mxu0 0
    %524 = vmatprep.subr.bf16.mxu0 0
    %525 = vmatpush1.bf16.msra.mxu0 %v508
    %526 = vmatprep.subr.bf16.mxu0 0
    %527 = vmatpush2.bf16.msra.mxu0 0
    %528 = vmatprep.subr.bf16.mxu0 0
    %529 = vmatpush2.bf16.msra.mxu0 0
    %530 = vmatprep.subr.bf16.mxu0 0
    %531 = vmatpush2.bf16.msra.mxu0 0
    %532 = vmatprep.subr.bf16.mxu0 0
    %533 = vmatpush2.bf16.msra.mxu0 0
    %534 = vmatprep.subr.bf16.mxu0 0
    %535 = vmatpush2.bf16.msra.mxu0 0
    %536 = vmatprep.subr.bf16.mxu0 0
    %537 = vmatpush2.bf16.msra.mxu0 0
    %538 = vmatprep.subr.bf16.mxu0 0
    %539 = vmatpush2.bf16.msra.mxu0 0
    %540 = vmatprep.subr.bf16.mxu0 0
    %541 = vmatpush2.bf16.msra.mxu0 0
    %542 = vmatprep.mubr.bf16.mxu0 0
    %543 = vmatmul.mubr.bf16.gmra.mxu0 %v505
    %v544 = vpop.f32.mrf.mxu0
    %v545 = vadd.f32 %v499, %v544
    %v546 = vpop.f32.mrf.mxu0
    %v547 = vpop.f32.mrf.mxu0
    %v548 = vpop.f32.mrf.mxu0
    %549 = vdwg.mxu0
    %550 = vrot.lane.b32.xlu0 %v230, 112
    %v551 = vpop.permute.xlu0 %550
    %552 = vrot.lane.b32.xlu0 %v230, 80
    %v553 = vpop.permute.xlu0 %552
    %v555 = vsel %vm234, %v551, 0
    %v558 = vsel %vm234, %v553, 0
    %560 = vmatprep.subr.bf16.mxu0 0
    %561 = vmatpush1.bf16.xpose.msra.mxu0 0
    %562 = vmatprep.subr.bf16.mxu0 0
    %563 = vmatpush1.bf16.xpose.msra.mxu0 0
    %564 = vmatprep.subr.bf16.mxu0 0
    %565 = vmatpush1.bf16.xpose.msra.mxu0 0
    %566 = vmatprep.subr.bf16.mxu0 0
    %567 = vmatpush1.bf16.xpose.msra.mxu0 0
    %568 = vmatprep.subr.bf16.mxu0 0
    %569 = vmatpush1.bf16.xpose.msra.mxu0 0
    %570 = vmatprep.subr.bf16.mxu0 0
    %571 = vmatpush1.bf16.xpose.msra.mxu0 0
    %572 = vmatprep.subr.bf16.mxu0 0
    %573 = vmatpush1.bf16.xpose.msra.mxu0 0
    %574 = vmatprep.subr.bf16.mxu0 0
    %575 = vmatpush1.bf16.xpose.msra.mxu0 %v558
    %576 = vmatprep.subr.bf16.mxu0 0
    %577 = vmatpush2.bf16.xpose.msra.mxu0 0
    %578 = vmatprep.subr.bf16.mxu0 0
    %579 = vmatpush2.bf16.xpose.msra.mxu0 0
    %580 = vmatprep.subr.bf16.mxu0 0
    %581 = vmatpush2.bf16.xpose.msra.mxu0 0
    %582 = vmatprep.subr.bf16.mxu0 0
    %583 = vmatpush2.bf16.xpose.msra.mxu0 0
    %584 = vmatprep.subr.bf16.mxu0 0
    %585 = vmatpush2.bf16.xpose.msra.mxu0 0
    %586 = vmatprep.subr.bf16.mxu0 0
    %587 = vmatpush2.bf16.xpose.msra.mxu0 0
    %588 = vmatprep.subr.bf16.mxu0 0
    %589 = vmatpush2.bf16.xpose.msra.mxu0 0
    %590 = vmatprep.subr.bf16.mxu0 0
    %591 = vmatpush2.bf16.xpose.msra.mxu0 0
    %592 = vmatprep.mubr.bf16.mxu0 0
    %593 = vmatmul.mubr.bf16.gmra.mxu0 %v555
    %v594 = vpop.f32.mrf.mxu0
    %v595 = vadd.f32 0.0, %v594
    %v596 = vpop.f32.mrf.mxu0
    %v597 = vpop.f32.mrf.mxu0
    %v598 = vpop.f32.mrf.mxu0
    %599 = vdwg.mxu0
    %v600 = vmul.f32 %v595, 0.35355338
    %v601 = vadd.f32 %v600, %v229
    %v602 = vsel %vm234, %v601, -inf
    %603 = vmax.xlane.f32.xlu0 %v602
    %v604 = vpop.xlane.xlu0 %603
    %v605 = vsub.f32 %v601, %v604
    %v606 = vmul.f32 %v605, 1.442695
    %v607 = vpow.pop %v606
    %v608 = vsel %vm234, %v607, 0.0
    %609 = vadd.xlane.f32.xlu0 %v608
    %v610 = vpop.xlane.xlu0 %609
    %v611 = vrcp.pop %v610
    %v612 = vmul.f32 %v607, %v611
    %v613 = vpack.c.bf16 %v612, %v612
    %614 = vrot.lane.b32.xlu0 %v230, 48
    %v615 = vpop.permute.xlu0 %614
    %v617 = vsel %vm234, %v613, 0
    %v620 = vsel %vm300, %v615, 0
    %622 = vmatprep.subr.bf16.mxu0 0
    %623 = vmatpush1.bf16.msra.mxu0 0
    %624 = vmatprep.subr.bf16.mxu0 0
    %625 = vmatpush1.bf16.msra.mxu0 0
    %626 = vmatprep.subr.bf16.mxu0 0
    %627 = vmatpush1.bf16.msra.mxu0 0
    %628 = vmatprep.subr.bf16.mxu0 0
    %629 = vmatpush1.bf16.msra.mxu0 0
    %630 = vmatprep.subr.bf16.mxu0 0
    %631 = vmatpush1.bf16.msra.mxu0 0
    %632 = vmatprep.subr.bf16.mxu0 0
    %633 = vmatpush1.bf16.msra.mxu0 0
    %634 = vmatprep.subr.bf16.mxu0 0
    %635 = vmatpush1.bf16.msra.mxu0 0
    %636 = vmatprep.subr.bf16.mxu0 0
    %637 = vmatpush1.bf16.msra.mxu0 %v620
    %638 = vmatprep.subr.bf16.mxu0 0
    %639 = vmatpush2.bf16.msra.mxu0 0
    %640 = vmatprep.subr.bf16.mxu0 0
    %641 = vmatpush2.bf16.msra.mxu0 0
    %642 = vmatprep.subr.bf16.mxu0 0
    %643 = vmatpush2.bf16.msra.mxu0 0
    %644 = vmatprep.subr.bf16.mxu0 0
    %645 = vmatpush2.bf16.msra.mxu0 0
    %646 = vmatprep.subr.bf16.mxu0 0
    %647 = vmatpush2.bf16.msra.mxu0 0
    %648 = vmatprep.subr.bf16.mxu0 0
    %649 = vmatpush2.bf16.msra.mxu0 0
    %650 = vmatprep.subr.bf16.mxu0 0
    %651 = vmatpush2.bf16.msra.mxu0 0
    %652 = vmatprep.subr.bf16.mxu0 0
    %653 = vmatpush2.bf16.msra.mxu0 0
    %654 = vmatprep.mubr.bf16.mxu0 0
    %655 = vmatmul.mubr.bf16.gmra.mxu0 %v617
    %v656 = vpop.f32.mrf.mxu0
    %v657 = vadd.f32 0.0, %v656
    %v658 = vpop.f32.mrf.mxu0
    %v659 = vpop.f32.mrf.mxu0
    %v660 = vpop.f32.mrf.mxu0
    %661 = vdwg.mxu0
    %v662 = vpack.c.bf16 %v657, %v657
    %v664 = vsel %vm234, %v662, 0
    %v667 = vsel %vm300, %v225, 0
    %669 = vmatprep.subr.bf16.mxu0 0
    %670 = vmatpush1.bf16.msra.mxu0 0
    %671 = vmatprep.subr.bf16.mxu0 0
    %672 = vmatpush1.bf16.msra.mxu0 0
    %673 = vmatprep.subr.bf16.mxu0 0
    %674 = vmatpush1.bf16.msra.mxu0 0
    %675 = vmatprep.subr.bf16.mxu0 0
    %676 = vmatpush1.bf16.msra.mxu0 0
    %677 = vmatprep.subr.bf16.mxu0 0
    %678 = vmatpush1.bf16.msra.mxu0 0
    %679 = vmatprep.subr.bf16.mxu0 0
    %680 = vmatpush1.bf16.msra.mxu0 0
    %681 = vmatprep.subr.bf16.mxu0 0
    %682 = vmatpush1.bf16.msra.mxu0 0
    %683 = vmatprep.subr.bf16.mxu0 0
    %684 = vmatpush1.bf16.msra.mxu0 %v667
    %685 = vmatprep.subr.bf16.mxu0 0
    %686 = vmatpush2.bf16.msra.mxu0 0
    %687 = vmatprep.subr.bf16.mxu0 0
    %688 = vmatpush2.bf16.msra.mxu0 0
    %689 = vmatprep.subr.bf16.mxu0 0
    %690 = vmatpush2.bf16.msra.mxu0 0
    %691 = vmatprep.subr.bf16.mxu0 0
    %692 = vmatpush2.bf16.msra.mxu0 0
    %693 = vmatprep.subr.bf16.mxu0 0
    %694 = vmatpush2.bf16.msra.mxu0 0
    %695 = vmatprep.subr.bf16.mxu0 0
    %696 = vmatpush2.bf16.msra.mxu0 0
    %697 = vmatprep.subr.bf16.mxu0 0
    %698 = vmatpush2.bf16.msra.mxu0 0
    %699 = vmatprep.subr.bf16.mxu0 0
    %700 = vmatpush2.bf16.msra.mxu0 0
    %701 = vmatprep.mubr.bf16.mxu0 0
    %702 = vmatmul.mubr.bf16.gmra.mxu0 %v664
    %v703 = vpop.f32.mrf.mxu0
    %v704 = vadd.f32 0.0, %v703
    %v705 = vpop.f32.mrf.mxu0
    %v706 = vpop.f32.mrf.mxu0
    %v707 = vpop.f32.mrf.mxu0
    %708 = vdwg.mxu0
    %v709 = vadd.f32 %v545, %v704
    %710 = vrot.lane.b32.xlu0 %v230, 104
    %v711 = vpop.permute.xlu0 %710
    %712 = vrot.lane.b32.xlu0 %v230, 72
    %v713 = vpop.permute.xlu0 %712
    %v715 = vsel %vm234, %v711, 0
    %v718 = vsel %vm234, %v713, 0
    %720 = vmatprep.subr.bf16.mxu0 0
    %721 = vmatpush1.bf16.xpose.msra.mxu0 0
    %722 = vmatprep.subr.bf16.mxu0 0
    %723 = vmatpush1.bf16.xpose.msra.mxu0 0
    %724 = vmatprep.subr.bf16.mxu0 0
    %725 = vmatpush1.bf16.xpose.msra.mxu0 0
    %726 = vmatprep.subr.bf16.mxu0 0
    %727 = vmatpush1.bf16.xpose.msra.mxu0 0
    %728 = vmatprep.subr.bf16.mxu0 0
    %729 = vmatpush1.bf16.xpose.msra.mxu0 0
    %730 = vmatprep.subr.bf16.mxu0 0
    %731 = vmatpush1.bf16.xpose.msra.mxu0 0
    %732 = vmatprep.subr.bf16.mxu0 0
    %733 = vmatpush1.bf16.xpose.msra.mxu0 0
    %734 = vmatprep.subr.bf16.mxu0 0
    %735 = vmatpush1.bf16.xpose.msra.mxu0 %v718
    %736 = vmatprep.subr.bf16.mxu0 0
    %737 = vmatpush2.bf16.xpose.msra.mxu0 0
    %738 = vmatprep.subr.bf16.mxu0 0
    %739 = vmatpush2.bf16.xpose.msra.mxu0 0
    %740 = vmatprep.subr.bf16.mxu0 0
    %741 = vmatpush2.bf16.xpose.msra.mxu0 0
    %742 = vmatprep.subr.bf16.mxu0 0
    %743 = vmatpush2.bf16.xpose.msra.mxu0 0
    %744 = vmatprep.subr.bf16.mxu0 0
    %745 = vmatpush2.bf16.xpose.msra.mxu0 0
    %746 = vmatprep.subr.bf16.mxu0 0
    %747 = vmatpush2.bf16.xpose.msra.mxu0 0
    %748 = vmatprep.subr.bf16.mxu0 0
    %749 = vmatpush2.bf16.xpose.msra.mxu0 0
    %750 = vmatprep.subr.bf16.mxu0 0
    %751 = vmatpush2.bf16.xpose.msra.mxu0 0
    %752 = vmatprep.mubr.bf16.mxu0 0
    %753 = vmatmul.mubr.bf16.gmra.mxu0 %v715
    %v754 = vpop.f32.mrf.mxu0
    %v755 = vadd.f32 0.0, %v754
    %v756 = vpop.f32.mrf.mxu0
    %v757 = vpop.f32.mrf.mxu0
    %v758 = vpop.f32.mrf.mxu0
    %759 = vdwg.mxu0
    %v760 = vmul.f32 %v755, 0.35355338
    %v761 = vadd.f32 %v760, %v229
    %v762 = vsel %vm234, %v761, -inf
    %763 = vmax.xlane.f32.xlu0 %v762
    %v764 = vpop.xlane.xlu0 %763
    %v765 = vsub.f32 %v761, %v764
    %v766 = vmul.f32 %v765, 1.442695
    %v767 = vpow.pop %v766
    %v768 = vsel %vm234, %v767, 0.0
    %769 = vadd.xlane.f32.xlu0 %v768
    %v770 = vpop.xlane.xlu0 %769
    %v771 = vrcp.pop %v770
    %v772 = vmul.f32 %v767, %v771
    %v773 = vpack.c.bf16 %v772, %v772
    %774 = vrot.lane.b32.xlu0 %v230, 40
    %v775 = vpop.permute.xlu0 %774
    %v777 = vsel %vm234, %v773, 0
    %v780 = vsel %vm300, %v775, 0
    %782 = vmatprep.subr.bf16.mxu0 0
    %783 = vmatpush1.bf16.msra.mxu0 0
    %784 = vmatprep.subr.bf16.mxu0 0
    %785 = vmatpush1.bf16.msra.mxu0 0
    %786 = vmatprep.subr.bf16.mxu0 0
    %787 = vmatpush1.bf16.msra.mxu0 0
    %788 = vmatprep.subr.bf16.mxu0 0
    %789 = vmatpush1.bf16.msra.mxu0 0
    %790 = vmatprep.subr.bf16.mxu0 0
    %791 = vmatpush1.bf16.msra.mxu0 0
    %792 = vmatprep.subr.bf16.mxu0 0
    %793 = vmatpush1.bf16.msra.mxu0 0
    %794 = vmatprep.subr.bf16.mxu0 0
    %795 = vmatpush1.bf16.msra.mxu0 0
    %796 = vmatprep.subr.bf16.mxu0 0
    %797 = vmatpush1.bf16.msra.mxu0 %v780
    %798 = vmatprep.subr.bf16.mxu0 0
    %799 = vmatpush2.bf16.msra.mxu0 0
    %800 = vmatprep.subr.bf16.mxu0 0
    %801 = vmatpush2.bf16.msra.mxu0 0
    %802 = vmatprep.subr.bf16.mxu0 0
    %803 = vmatpush2.bf16.msra.mxu0 0
    %804 = vmatprep.subr.bf16.mxu0 0
    %805 = vmatpush2.bf16.msra.mxu0 0
    %806 = vmatprep.subr.bf16.mxu0 0
    %807 = vmatpush2.bf16.msra.mxu0 0
    %808 = vmatprep.subr.bf16.mxu0 0
    %809 = vmatpush2.bf16.msra.mxu0 0
    %810 = vmatprep.subr.bf16.mxu0 0
    %811 = vmatpush2.bf16.msra.mxu0 0
    %812 = vmatprep.subr.bf16.mxu0 0
    %813 = vmatpush2.bf16.msra.mxu0 0
    %814 = vmatprep.mubr.bf16.mxu0 0
    %815 = vmatmul.mubr.bf16.gmra.mxu0 %v777
    %v816 = vpop.f32.mrf.mxu0
    %v817 = vadd.f32 0.0, %v816
    %v818 = vpop.f32.mrf.mxu0
    %v819 = vpop.f32.mrf.mxu0
    %v820 = vpop.f32.mrf.mxu0
    %821 = vdwg.mxu0
    %v822 = vpack.c.bf16 %v817, %v817
    %v824 = vsel %vm234, %v822, 0
    %v827 = vsel %vm300, %v226, 0
    %829 = vmatprep.subr.bf16.mxu0 0
    %830 = vmatpush1.bf16.msra.mxu0 0
    %831 = vmatprep.subr.bf16.mxu0 0
    %832 = vmatpush1.bf16.msra.mxu0 0
    %833 = vmatprep.subr.bf16.mxu0 0
    %834 = vmatpush1.bf16.msra.mxu0 0
    %835 = vmatprep.subr.bf16.mxu0 0
    %836 = vmatpush1.bf16.msra.mxu0 0
    %837 = vmatprep.subr.bf16.mxu0 0
    %838 = vmatpush1.bf16.msra.mxu0 0
    %839 = vmatprep.subr.bf16.mxu0 0
    %840 = vmatpush1.bf16.msra.mxu0 0
    %841 = vmatprep.subr.bf16.mxu0 0
    %842 = vmatpush1.bf16.msra.mxu0 0
    %843 = vmatprep.subr.bf16.mxu0 0
    %844 = vmatpush1.bf16.msra.mxu0 %v827
    %845 = vmatprep.subr.bf16.mxu0 0
    %846 = vmatpush2.bf16.msra.mxu0 0
    %847 = vmatprep.subr.bf16.mxu0 0
    %848 = vmatpush2.bf16.msra.mxu0 0
    %849 = vmatprep.subr.bf16.mxu0 0
    %850 = vmatpush2.bf16.msra.mxu0 0
    %851 = vmatprep.subr.bf16.mxu0 0
    %852 = vmatpush2.bf16.msra.mxu0 0
    %853 = vmatprep.subr.bf16.mxu0 0
    %854 = vmatpush2.bf16.msra.mxu0 0
    %855 = vmatprep.subr.bf16.mxu0 0
    %856 = vmatpush2.bf16.msra.mxu0 0
    %857 = vmatprep.subr.bf16.mxu0 0
    %858 = vmatpush2.bf16.msra.mxu0 0
    %859 = vmatprep.subr.bf16.mxu0 0
    %860 = vmatpush2.bf16.msra.mxu0 0
    %861 = vmatprep.mubr.bf16.mxu0 0
    %862 = vmatmul.mubr.bf16.gmra.mxu0 %v824
    %v863 = vpop.f32.mrf.mxu0
    %v864 = vadd.f32 0.0, %v863
    %v865 = vpop.f32.mrf.mxu0
    %v866 = vpop.f32.mrf.mxu0
    %v867 = vpop.f32.mrf.mxu0
    %868 = vdwg.mxu0
    %v869 = vadd.f32 %v709, %v864
    %v870 = vsub.f32 %v98, 1.0
    %v871 = vmul.f32 %v870, 1e+09
    %v872 = vpack.c.bf16 %v220, %v220
    %874 = vrot.lane.b32.xlu0 %v872, 96
    %v875 = vpop.permute.xlu0 %874
    %v877 = vsel %vm234, %v872, 0
    %v880 = vsel %vm234, %v875, 0
    %882 = vmatprep.subr.bf16.mxu0 0
    %883 = vmatpush1.bf16.xpose.msra.mxu0 0
    %884 = vmatprep.subr.bf16.mxu0 0
    %885 = vmatpush1.bf16.xpose.msra.mxu0 0
    %886 = vmatprep.subr.bf16.mxu0 0
    %887 = vmatpush1.bf16.xpose.msra.mxu0 0
    %888 = vmatprep.subr.bf16.mxu0 0
    %889 = vmatpush1.bf16.xpose.msra.mxu0 0
    %890 = vmatprep.subr.bf16.mxu0 0
    %891 = vmatpush1.bf16.xpose.msra.mxu0 0
    %892 = vmatprep.subr.bf16.mxu0 0
    %893 = vmatpush1.bf16.xpose.msra.mxu0 0
    %894 = vmatprep.subr.bf16.mxu0 0
    %895 = vmatpush1.bf16.xpose.msra.mxu0 0
    %896 = vmatprep.subr.bf16.mxu0 0
    %897 = vmatpush1.bf16.xpose.msra.mxu0 %v880
    %898 = vmatprep.subr.bf16.mxu0 0
    %899 = vmatpush2.bf16.xpose.msra.mxu0 0
    %900 = vmatprep.subr.bf16.mxu0 0
    %901 = vmatpush2.bf16.xpose.msra.mxu0 0
    %902 = vmatprep.subr.bf16.mxu0 0
    %903 = vmatpush2.bf16.xpose.msra.mxu0 0
    %904 = vmatprep.subr.bf16.mxu0 0
    %905 = vmatpush2.bf16.xpose.msra.mxu0 0
    %906 = vmatprep.subr.bf16.mxu0 0
    %907 = vmatpush2.bf16.xpose.msra.mxu0 0
    %908 = vmatprep.subr.bf16.mxu0 0
    %909 = vmatpush2.bf16.xpose.msra.mxu0 0
    %910 = vmatprep.subr.bf16.mxu0 0
    %911 = vmatpush2.bf16.xpose.msra.mxu0 0
    %912 = vmatprep.subr.bf16.mxu0 0
    %913 = vmatpush2.bf16.xpose.msra.mxu0 0
    %914 = vmatprep.mubr.bf16.mxu0 0
    %915 = vmatmul.mubr.bf16.gmra.mxu0 %v877
    %v916 = vpop.f32.mrf.mxu0
    %v917 = vadd.f32 0.0, %v916
    %v918 = vpop.f32.mrf.mxu0
    %v919 = vpop.f32.mrf.mxu0
    %v920 = vpop.f32.mrf.mxu0
    %921 = vdwg.mxu0
    %v922 = vmul.f32 %v917, 0.35355338
    %v923 = vadd.f32 %v922, %v871
    %v924 = vsel %vm234, %v923, -inf
    %925 = vmax.xlane.f32.xlu0 %v924
    %v926 = vpop.xlane.xlu0 %925
    %v927 = vsub.f32 %v923, %v926
    %v928 = vmul.f32 %v927, 1.442695
    %v929 = vpow.pop %v928
    %v930 = vsel %vm234, %v929, 0.0
    %931 = vadd.xlane.f32.xlu0 %v930
    %v932 = vpop.xlane.xlu0 %931
    %v933 = vrcp.pop %v932
    %v934 = vmul.f32 %v929, %v933
    %v935 = vpack.c.bf16 %v934, %v934
    %936 = vrot.lane.b32.xlu0 %v872, 64
    %v937 = vpop.permute.xlu0 %936
    %v939 = vsel %vm234, %v935, 0
    %v942 = vsel %vm300, %v937, 0
    %944 = vmatprep.subr.bf16.mxu0 0
    %945 = vmatpush1.bf16.msra.mxu0 0
    %946 = vmatprep.subr.bf16.mxu0 0
    %947 = vmatpush1.bf16.msra.mxu0 0
    %948 = vmatprep.subr.bf16.mxu0 0
    %949 = vmatpush1.bf16.msra.mxu0 0
    %950 = vmatprep.subr.bf16.mxu0 0
    %951 = vmatpush1.bf16.msra.mxu0 0
    %952 = vmatprep.subr.bf16.mxu0 0
    %953 = vmatpush1.bf16.msra.mxu0 0
    %954 = vmatprep.subr.bf16.mxu0 0
    %955 = vmatpush1.bf16.msra.mxu0 0
    %956 = vmatprep.subr.bf16.mxu0 0
    %957 = vmatpush1.bf16.msra.mxu0 0
    %958 = vmatprep.subr.bf16.mxu0 0
    %959 = vmatpush1.bf16.msra.mxu0 %v942
    %960 = vmatprep.subr.bf16.mxu0 0
    %961 = vmatpush2.bf16.msra.mxu0 0
    %962 = vmatprep.subr.bf16.mxu0 0
    %963 = vmatpush2.bf16.msra.mxu0 0
    %964 = vmatprep.subr.bf16.mxu0 0
    %965 = vmatpush2.bf16.msra.mxu0 0
    %966 = vmatprep.subr.bf16.mxu0 0
    %967 = vmatpush2.bf16.msra.mxu0 0
    %968 = vmatprep.subr.bf16.mxu0 0
    %969 = vmatpush2.bf16.msra.mxu0 0
    %970 = vmatprep.subr.bf16.mxu0 0
    %971 = vmatpush2.bf16.msra.mxu0 0
    %972 = vmatprep.subr.bf16.mxu0 0
    %973 = vmatpush2.bf16.msra.mxu0 0
    %974 = vmatprep.subr.bf16.mxu0 0
    %975 = vmatpush2.bf16.msra.mxu0 0
    %976 = vmatprep.mubr.bf16.mxu0 0
    %977 = vmatmul.mubr.bf16.gmra.mxu0 %v939
    %v978 = vpop.f32.mrf.mxu0
    %v979 = vadd.f32 0.0, %v978
    %v980 = vpop.f32.mrf.mxu0
    %v981 = vpop.f32.mrf.mxu0
    %v982 = vpop.f32.mrf.mxu0
    %983 = vdwg.mxu0
    %v984 = vpack.c.bf16 %v979, %v979
    %985 = vrot.lane.b32.xlu0 %v872, 120
    %v986 = vpop.permute.xlu0 %985
    %987 = vrot.lane.b32.xlu0 %v872, 88
    %v988 = vpop.permute.xlu0 %987
    %v990 = vsel %vm234, %v986, 0
    %v993 = vsel %vm234, %v988, 0
    %995 = vmatprep.subr.bf16.mxu0 0
    %996 = vmatpush1.bf16.xpose.msra.mxu0 0
    %997 = vmatprep.subr.bf16.mxu0 0
    %998 = vmatpush1.bf16.xpose.msra.mxu0 0
    %999 = vmatprep.subr.bf16.mxu0 0
    %1000 = vmatpush1.bf16.xpose.msra.mxu0 0
    %1001 = vmatprep.subr.bf16.mxu0 0
    %1002 = vmatpush1.bf16.xpose.msra.mxu0 0
    %1003 = vmatprep.subr.bf16.mxu0 0
    %1004 = vmatpush1.bf16.xpose.msra.mxu0 0
    %1005 = vmatprep.subr.bf16.mxu0 0
    %1006 = vmatpush1.bf16.xpose.msra.mxu0 0
    %1007 = vmatprep.subr.bf16.mxu0 0
    %1008 = vmatpush1.bf16.xpose.msra.mxu0 0
    %1009 = vmatprep.subr.bf16.mxu0 0
    %1010 = vmatpush1.bf16.xpose.msra.mxu0 %v993
    %1011 = vmatprep.subr.bf16.mxu0 0
    %1012 = vmatpush2.bf16.xpose.msra.mxu0 0
    %1013 = vmatprep.subr.bf16.mxu0 0
    %1014 = vmatpush2.bf16.xpose.msra.mxu0 0
    %1015 = vmatprep.subr.bf16.mxu0 0
    %1016 = vmatpush2.bf16.xpose.msra.mxu0 0
    %1017 = vmatprep.subr.bf16.mxu0 0
    %1018 = vmatpush2.bf16.xpose.msra.mxu0 0
    %1019 = vmatprep.subr.bf16.mxu0 0
    %1020 = vmatpush2.bf16.xpose.msra.mxu0 0
    %1021 = vmatprep.subr.bf16.mxu0 0
    %1022 = vmatpush2.bf16.xpose.msra.mxu0 0
    %1023 = vmatprep.subr.bf16.mxu0 0
    %1024 = vmatpush2.bf16.xpose.msra.mxu0 0
    %1025 = vmatprep.subr.bf16.mxu0 0
    %1026 = vmatpush2.bf16.xpose.msra.mxu0 0
    %1027 = vmatprep.mubr.bf16.mxu0 0
    %1028 = vmatmul.mubr.bf16.gmra.mxu0 %v990
    %v1029 = vpop.f32.mrf.mxu0
    %v1030 = vadd.f32 0.0, %v1029
    %v1031 = vpop.f32.mrf.mxu0
    %v1032 = vpop.f32.mrf.mxu0
    %v1033 = vpop.f32.mrf.mxu0
    %1034 = vdwg.mxu0
    %v1035 = vmul.f32 %v1030, 0.35355338
    %v1036 = vadd.f32 %v1035, %v871
    %v1037 = vsel %vm234, %v1036, -inf
    %1038 = vmax.xlane.f32.xlu0 %v1037
    %v1039 = vpop.xlane.xlu0 %1038
    %v1040 = vsub.f32 %v1036, %v1039
    %v1041 = vmul.f32 %v1040, 1.442695
    %v1042 = vpow.pop %v1041
    %v1043 = vsel %vm234, %v1042, 0.0
    %1044 = vadd.xlane.f32.xlu0 %v1043
    %v1045 = vpop.xlane.xlu0 %1044
    %v1046 = vrcp.pop %v1045
    %v1047 = vmul.f32 %v1042, %v1046
    %v1048 = vpack.c.bf16 %v1047, %v1047
    %1049 = vrot.lane.b32.xlu0 %v872, 56
    %v1050 = vpop.permute.xlu0 %1049
    %v1052 = vsel %vm234, %v1048, 0
    %v1055 = vsel %vm300, %v1050, 0
    %1057 = vmatprep.subr.bf16.mxu0 0
    %1058 = vmatpush1.bf16.msra.mxu0 0
    %1059 = vmatprep.subr.bf16.mxu0 0
    %1060 = vmatpush1.bf16.msra.mxu0 0
    %1061 = vmatprep.subr.bf16.mxu0 0
    %1062 = vmatpush1.bf16.msra.mxu0 0
    %1063 = vmatprep.subr.bf16.mxu0 0
    %1064 = vmatpush1.bf16.msra.mxu0 0
    %1065 = vmatprep.subr.bf16.mxu0 0
    %1066 = vmatpush1.bf16.msra.mxu0 0
    %1067 = vmatprep.subr.bf16.mxu0 0
    %1068 = vmatpush1.bf16.msra.mxu0 0
    %1069 = vmatprep.subr.bf16.mxu0 0
    %1070 = vmatpush1.bf16.msra.mxu0 0
    %1071 = vmatprep.subr.bf16.mxu0 0
    %1072 = vmatpush1.bf16.msra.mxu0 %v1055
    %1073 = vmatprep.subr.bf16.mxu0 0
    %1074 = vmatpush2.bf16.msra.mxu0 0
    %1075 = vmatprep.subr.bf16.mxu0 0
    %1076 = vmatpush2.bf16.msra.mxu0 0
    %1077 = vmatprep.subr.bf16.mxu0 0
    %1078 = vmatpush2.bf16.msra.mxu0 0
    %1079 = vmatprep.subr.bf16.mxu0 0
    %1080 = vmatpush2.bf16.msra.mxu0 0
    %1081 = vmatprep.subr.bf16.mxu0 0
    %1082 = vmatpush2.bf16.msra.mxu0 0
    %1083 = vmatprep.subr.bf16.mxu0 0
    %1084 = vmatpush2.bf16.msra.mxu0 0
    %1085 = vmatprep.subr.bf16.mxu0 0
    %1086 = vmatpush2.bf16.msra.mxu0 0
    %1087 = vmatprep.subr.bf16.mxu0 0
    %1088 = vmatpush2.bf16.msra.mxu0 0
    %1089 = vmatprep.mubr.bf16.mxu0 0
    %1090 = vmatmul.mubr.bf16.gmra.mxu0 %v1052
    %v1091 = vpop.f32.mrf.mxu0
    %v1092 = vadd.f32 0.0, %v1091
    %v1093 = vpop.f32.mrf.mxu0
    %v1094 = vpop.f32.mrf.mxu0
    %v1095 = vpop.f32.mrf.mxu0
    %1096 = vdwg.mxu0
    %v1097 = vpack.c.bf16 %v1092, %v1092
    %v1099 = vsel %vm234, %v1097, 0
    %1101 = vmatprep.subr.bf16.mxu0 0
    %1102 = vmatpush1.bf16.msra.mxu0 0
    %1103 = vmatprep.subr.bf16.mxu0 0
    %1104 = vmatpush1.bf16.msra.mxu0 0
    %1105 = vmatprep.subr.bf16.mxu0 0
    %1106 = vmatpush1.bf16.msra.mxu0 0
    %1107 = vmatprep.subr.bf16.mxu0 0
    %1108 = vmatpush1.bf16.msra.mxu0 0
    %1109 = vmatprep.subr.bf16.mxu0 0
    %1110 = vmatpush1.bf16.msra.mxu0 0
    %1111 = vmatprep.subr.bf16.mxu0 0
    %1112 = vmatpush1.bf16.msra.mxu0 0
    %1113 = vmatprep.subr.bf16.mxu0 0
    %1114 = vmatpush1.bf16.msra.mxu0 0
    %1115 = vmatprep.subr.bf16.mxu0 0
    %1116 = vmatpush1.bf16.msra.mxu0 %v462
    %1117 = vmatprep.subr.bf16.mxu0 0
    %1118 = vmatpush2.bf16.msra.mxu0 0
    %1119 = vmatprep.subr.bf16.mxu0 0
    %1120 = vmatpush2.bf16.msra.mxu0 0
    %1121 = vmatprep.subr.bf16.mxu0 0
    %1122 = vmatpush2.bf16.msra.mxu0 0
    %1123 = vmatprep.subr.bf16.mxu0 0
    %1124 = vmatpush2.bf16.msra.mxu0 0
    %1125 = vmatprep.subr.bf16.mxu0 0
    %1126 = vmatpush2.bf16.msra.mxu0 0
    %1127 = vmatprep.subr.bf16.mxu0 0
    %1128 = vmatpush2.bf16.msra.mxu0 0
    %1129 = vmatprep.subr.bf16.mxu0 0
    %1130 = vmatpush2.bf16.msra.mxu0 0
    %1131 = vmatprep.subr.bf16.mxu0 0
    %1132 = vmatpush2.bf16.msra.mxu0 0
    %1133 = vmatprep.mubr.bf16.mxu0 0
    %1134 = vmatmul.mubr.bf16.gmra.mxu0 %v1099
    %v1135 = vpop.f32.mrf.mxu0
    %v1136 = vadd.f32 0.0, %v1135
    %v1137 = vpop.f32.mrf.mxu0
    %v1138 = vpop.f32.mrf.mxu0
    %v1139 = vpop.f32.mrf.mxu0
    %1140 = vdwg.mxu0
    %v1142 = vsel %vm234, %v984, 0
    %1144 = vmatprep.subr.bf16.mxu0 0
    %1145 = vmatpush1.bf16.msra.mxu0 0
    %1146 = vmatprep.subr.bf16.mxu0 0
    %1147 = vmatpush1.bf16.msra.mxu0 0
    %1148 = vmatprep.subr.bf16.mxu0 0
    %1149 = vmatpush1.bf16.msra.mxu0 0
    %1150 = vmatprep.subr.bf16.mxu0 0
    %1151 = vmatpush1.bf16.msra.mxu0 0
    %1152 = vmatprep.subr.bf16.mxu0 0
    %1153 = vmatpush1.bf16.msra.mxu0 0
    %1154 = vmatprep.subr.bf16.mxu0 0
    %1155 = vmatpush1.bf16.msra.mxu0 0
    %1156 = vmatprep.subr.bf16.mxu0 0
    %1157 = vmatpush1.bf16.msra.mxu0 0
    %1158 = vmatprep.subr.bf16.mxu0 0
    %1159 = vmatpush1.bf16.msra.mxu0 %v508
    %1160 = vmatprep.subr.bf16.mxu0 0
    %1161 = vmatpush2.bf16.msra.mxu0 0
    %1162 = vmatprep.subr.bf16.mxu0 0
    %1163 = vmatpush2.bf16.msra.mxu0 0
    %1164 = vmatprep.subr.bf16.mxu0 0
    %1165 = vmatpush2.bf16.msra.mxu0 0
    %1166 = vmatprep.subr.bf16.mxu0 0
    %1167 = vmatpush2.bf16.msra.mxu0 0
    %1168 = vmatprep.subr.bf16.mxu0 0
    %1169 = vmatpush2.bf16.msra.mxu0 0
    %1170 = vmatprep.subr.bf16.mxu0 0
    %1171 = vmatpush2.bf16.msra.mxu0 0
    %1172 = vmatprep.subr.bf16.mxu0 0
    %1173 = vmatpush2.bf16.msra.mxu0 0
    %1174 = vmatprep.subr.bf16.mxu0 0
    %1175 = vmatpush2.bf16.msra.mxu0 0
    %1176 = vmatprep.mubr.bf16.mxu0 0
    %1177 = vmatmul.mubr.bf16.gmra.mxu0 %v1142
    %v1178 = vpop.f32.mrf.mxu0
    %v1179 = vadd.f32 %v1136, %v1178
    %v1180 = vpop.f32.mrf.mxu0
    %v1181 = vpop.f32.mrf.mxu0
    %v1182 = vpop.f32.mrf.mxu0
    %1183 = vdwg.mxu0
    %1184 = vrot.lane.b32.xlu0 %v872, 112
    %v1185 = vpop.permute.xlu0 %1184
    %1186 = vrot.lane.b32.xlu0 %v872, 80
    %v1187 = vpop.permute.xlu0 %1186
    %v1189 = vsel %vm234, %v1185, 0
    %v1192 = vsel %vm234, %v1187, 0
    %1194 = vmatprep.subr.bf16.mxu0 0
    %1195 = vmatpush1.bf16.xpose.msra.mxu0 0
    %1196 = vmatprep.subr.bf16.mxu0 0
    %1197 = vmatpush1.bf16.xpose.msra.mxu0 0
    %1198 = vmatprep.subr.bf16.mxu0 0
    %1199 = vmatpush1.bf16.xpose.msra.mxu0 0
    %1200 = vmatprep.subr.bf16.mxu0 0
    %1201 = vmatpush1.bf16.xpose.msra.mxu0 0
    %1202 = vmatprep.subr.bf16.mxu0 0
    %1203 = vmatpush1.bf16.xpose.msra.mxu0 0
    %1204 = vmatprep.subr.bf16.mxu0 0
    %1205 = vmatpush1.bf16.xpose.msra.mxu0 0
    %1206 = vmatprep.subr.bf16.mxu0 0
    %1207 = vmatpush1.bf16.xpose.msra.mxu0 0
    %1208 = vmatprep.subr.bf16.mxu0 0
    %1209 = vmatpush1.bf16.xpose.msra.mxu0 %v1192
    %1210 = vmatprep.subr.bf16.mxu0 0
    %1211 = vmatpush2.bf16.xpose.msra.mxu0 0
    %1212 = vmatprep.subr.bf16.mxu0 0
    %1213 = vmatpush2.bf16.xpose.msra.mxu0 0
    %1214 = vmatprep.subr.bf16.mxu0 0
    %1215 = vmatpush2.bf16.xpose.msra.mxu0 0
    %1216 = vmatprep.subr.bf16.mxu0 0
    %1217 = vmatpush2.bf16.xpose.msra.mxu0 0
    %1218 = vmatprep.subr.bf16.mxu0 0
    %1219 = vmatpush2.bf16.xpose.msra.mxu0 0
    %1220 = vmatprep.subr.bf16.mxu0 0
    %1221 = vmatpush2.bf16.xpose.msra.mxu0 0
    %1222 = vmatprep.subr.bf16.mxu0 0
    %1223 = vmatpush2.bf16.xpose.msra.mxu0 0
    %1224 = vmatprep.subr.bf16.mxu0 0
    %1225 = vmatpush2.bf16.xpose.msra.mxu0 0
    %1226 = vmatprep.mubr.bf16.mxu0 0
    %1227 = vmatmul.mubr.bf16.gmra.mxu0 %v1189
    %v1228 = vpop.f32.mrf.mxu0
    %v1229 = vadd.f32 0.0, %v1228
    %v1230 = vpop.f32.mrf.mxu0
    %v1231 = vpop.f32.mrf.mxu0
    %v1232 = vpop.f32.mrf.mxu0
    %1233 = vdwg.mxu0
    %v1234 = vmul.f32 %v1229, 0.35355338
    %v1235 = vadd.f32 %v1234, %v871
    %v1236 = vsel %vm234, %v1235, -inf
    %1237 = vmax.xlane.f32.xlu0 %v1236
    %v1238 = vpop.xlane.xlu0 %1237
    %v1239 = vsub.f32 %v1235, %v1238
    %v1240 = vmul.f32 %v1239, 1.442695
    %v1241 = vpow.pop %v1240
    %v1242 = vsel %vm234, %v1241, 0.0
    %1243 = vadd.xlane.f32.xlu0 %v1242
    %v1244 = vpop.xlane.xlu0 %1243
    %v1245 = vrcp.pop %v1244
    %v1246 = vmul.f32 %v1241, %v1245
    %v1247 = vpack.c.bf16 %v1246, %v1246
    %1248 = vrot.lane.b32.xlu0 %v872, 48
    %v1249 = vpop.permute.xlu0 %1248
    %v1251 = vsel %vm234, %v1247, 0
    %v1254 = vsel %vm300, %v1249, 0
    %1256 = vmatprep.subr.bf16.mxu0 0
    %1257 = vmatpush1.bf16.msra.mxu0 0
    %1258 = vmatprep.subr.bf16.mxu0 0
    %1259 = vmatpush1.bf16.msra.mxu0 0
    %1260 = vmatprep.subr.bf16.mxu0 0
    %1261 = vmatpush1.bf16.msra.mxu0 0
    %1262 = vmatprep.subr.bf16.mxu0 0
    %1263 = vmatpush1.bf16.msra.mxu0 0
    %1264 = vmatprep.subr.bf16.mxu0 0
    %1265 = vmatpush1.bf16.msra.mxu0 0
    %1266 = vmatprep.subr.bf16.mxu0 0
    %1267 = vmatpush1.bf16.msra.mxu0 0
    %1268 = vmatprep.subr.bf16.mxu0 0
    %1269 = vmatpush1.bf16.msra.mxu0 0
    %1270 = vmatprep.subr.bf16.mxu0 0
    %1271 = vmatpush1.bf16.msra.mxu0 %v1254
    %1272 = vmatprep.subr.bf16.mxu0 0
    %1273 = vmatpush2.bf16.msra.mxu0 0
    %1274 = vmatprep.subr.bf16.mxu0 0
    %1275 = vmatpush2.bf16.msra.mxu0 0
    %1276 = vmatprep.subr.bf16.mxu0 0
    %1277 = vmatpush2.bf16.msra.mxu0 0
    %1278 = vmatprep.subr.bf16.mxu0 0
    %1279 = vmatpush2.bf16.msra.mxu0 0
    %1280 = vmatprep.subr.bf16.mxu0 0
    %1281 = vmatpush2.bf16.msra.mxu0 0
    %1282 = vmatprep.subr.bf16.mxu0 0
    %1283 = vmatpush2.bf16.msra.mxu0 0
    %1284 = vmatprep.subr.bf16.mxu0 0
    %1285 = vmatpush2.bf16.msra.mxu0 0
    %1286 = vmatprep.subr.bf16.mxu0 0
    %1287 = vmatpush2.bf16.msra.mxu0 0
    %1288 = vmatprep.mubr.bf16.mxu0 0
    %1289 = vmatmul.mubr.bf16.gmra.mxu0 %v1251
    %v1290 = vpop.f32.mrf.mxu0
    %v1291 = vadd.f32 0.0, %v1290
    %v1292 = vpop.f32.mrf.mxu0
    %v1293 = vpop.f32.mrf.mxu0
    %v1294 = vpop.f32.mrf.mxu0
    %1295 = vdwg.mxu0
    %v1296 = vpack.c.bf16 %v1291, %v1291
    %v1298 = vsel %vm234, %v1296, 0
    %1300 = vmatprep.subr.bf16.mxu0 0
    %1301 = vmatpush1.bf16.msra.mxu0 0
    %1302 = vmatprep.subr.bf16.mxu0 0
    %1303 = vmatpush1.bf16.msra.mxu0 0
    %1304 = vmatprep.subr.bf16.mxu0 0
    %1305 = vmatpush1.bf16.msra.mxu0 0
    %1306 = vmatprep.subr.bf16.mxu0 0
    %1307 = vmatpush1.bf16.msra.mxu0 0
    %1308 = vmatprep.subr.bf16.mxu0 0
    %1309 = vmatpush1.bf16.msra.mxu0 0
    %1310 = vmatprep.subr.bf16.mxu0 0
    %1311 = vmatpush1.bf16.msra.mxu0 0
    %1312 = vmatprep.subr.bf16.mxu0 0
    %1313 = vmatpush1.bf16.msra.mxu0 0
    %1314 = vmatprep.subr.bf16.mxu0 0
    %1315 = vmatpush1.bf16.msra.mxu0 %v667
    %1316 = vmatprep.subr.bf16.mxu0 0
    %1317 = vmatpush2.bf16.msra.mxu0 0
    %1318 = vmatprep.subr.bf16.mxu0 0
    %1319 = vmatpush2.bf16.msra.mxu0 0
    %1320 = vmatprep.subr.bf16.mxu0 0
    %1321 = vmatpush2.bf16.msra.mxu0 0
    %1322 = vmatprep.subr.bf16.mxu0 0
    %1323 = vmatpush2.bf16.msra.mxu0 0
    %1324 = vmatprep.subr.bf16.mxu0 0
    %1325 = vmatpush2.bf16.msra.mxu0 0
    %1326 = vmatprep.subr.bf16.mxu0 0
    %1327 = vmatpush2.bf16.msra.mxu0 0
    %1328 = vmatprep.subr.bf16.mxu0 0
    %1329 = vmatpush2.bf16.msra.mxu0 0
    %1330 = vmatprep.subr.bf16.mxu0 0
    %1331 = vmatpush2.bf16.msra.mxu0 0
    %1332 = vmatprep.mubr.bf16.mxu0 0
    %1333 = vmatmul.mubr.bf16.gmra.mxu0 %v1298
    %v1334 = vpop.f32.mrf.mxu0
    %v1335 = vadd.f32 0.0, %v1334
    %v1336 = vpop.f32.mrf.mxu0
    %v1337 = vpop.f32.mrf.mxu0
    %v1338 = vpop.f32.mrf.mxu0
    %1339 = vdwg.mxu0
    %v1340 = vadd.f32 %v1179, %v1335
    %1341 = vrot.lane.b32.xlu0 %v872, 104
    %v1342 = vpop.permute.xlu0 %1341
    %1343 = vrot.lane.b32.xlu0 %v872, 72
    %v1344 = vpop.permute.xlu0 %1343
    %v1346 = vsel %vm234, %v1342, 0
    %v1349 = vsel %vm234, %v1344, 0
    %1351 = vmatprep.subr.bf16.mxu0 0
    %1352 = vmatpush1.bf16.xpose.msra.mxu0 0
    %1353 = vmatprep.subr.bf16.mxu0 0
    %1354 = vmatpush1.bf16.xpose.msra.mxu0 0
    %1355 = vmatprep.subr.bf16.mxu0 0
    %1356 = vmatpush1.bf16.xpose.msra.mxu0 0
    %1357 = vmatprep.subr.bf16.mxu0 0
    %1358 = vmatpush1.bf16.xpose.msra.mxu0 0
    %1359 = vmatprep.subr.bf16.mxu0 0
    %1360 = vmatpush1.bf16.xpose.msra.mxu0 0
    %1361 = vmatprep.subr.bf16.mxu0 0
    %1362 = vmatpush1.bf16.xpose.msra.mxu0 0
    %1363 = vmatprep.subr.bf16.mxu0 0
    %1364 = vmatpush1.bf16.xpose.msra.mxu0 0
    %1365 = vmatprep.subr.bf16.mxu0 0
    %1366 = vmatpush1.bf16.xpose.msra.mxu0 %v1349
    %1367 = vmatprep.subr.bf16.mxu0 0
    %1368 = vmatpush2.bf16.xpose.msra.mxu0 0
    %1369 = vmatprep.subr.bf16.mxu0 0
    %1370 = vmatpush2.bf16.xpose.msra.mxu0 0
    %1371 = vmatprep.subr.bf16.mxu0 0
    %1372 = vmatpush2.bf16.xpose.msra.mxu0 0
    %1373 = vmatprep.subr.bf16.mxu0 0
    %1374 = vmatpush2.bf16.xpose.msra.mxu0 0
    %1375 = vmatprep.subr.bf16.mxu0 0
    %1376 = vmatpush2.bf16.xpose.msra.mxu0 0
    %1377 = vmatprep.subr.bf16.mxu0 0
    %1378 = vmatpush2.bf16.xpose.msra.mxu0 0
    %1379 = vmatprep.subr.bf16.mxu0 0
    %1380 = vmatpush2.bf16.xpose.msra.mxu0 0
    %1381 = vmatprep.subr.bf16.mxu0 0
    %1382 = vmatpush2.bf16.xpose.msra.mxu0 0
    %1383 = vmatprep.mubr.bf16.mxu0 0
    %1384 = vmatmul.mubr.bf16.gmra.mxu0 %v1346
    %v1385 = vpop.f32.mrf.mxu0
    %v1386 = vadd.f32 0.0, %v1385
    %v1387 = vpop.f32.mrf.mxu0
    %v1388 = vpop.f32.mrf.mxu0
    %v1389 = vpop.f32.mrf.mxu0
    %1390 = vdwg.mxu0
    %v1391 = vmul.f32 %v1386, 0.35355338
    %v1392 = vadd.f32 %v1391, %v871
    %v1393 = vsel %vm234, %v1392, -inf
    %1394 = vmax.xlane.f32.xlu0 %v1393
    %v1395 = vpop.xlane.xlu0 %1394
    %v1396 = vsub.f32 %v1392, %v1395
    %v1397 = vmul.f32 %v1396, 1.442695
    %v1398 = vpow.pop %v1397
    %v1399 = vsel %vm234, %v1398, 0.0
    %1400 = vadd.xlane.f32.xlu0 %v1399
    %v1401 = vpop.xlane.xlu0 %1400
    %v1402 = vrcp.pop %v1401
    %v1403 = vmul.f32 %v1398, %v1402
    %v1404 = vpack.c.bf16 %v1403, %v1403
    %1405 = vrot.lane.b32.xlu0 %v872, 40
    %v1406 = vpop.permute.xlu0 %1405
    %v1408 = vsel %vm234, %v1404, 0
    %v1411 = vsel %vm300, %v1406, 0
    %1413 = vmatprep.subr.bf16.mxu0 0
    %1414 = vmatpush1.bf16.msra.mxu0 0
    %1415 = vmatprep.subr.bf16.mxu0 0
    %1416 = vmatpush1.bf16.msra.mxu0 0
    %1417 = vmatprep.subr.bf16.mxu0 0
    %1418 = vmatpush1.bf16.msra.mxu0 0
    %1419 = vmatprep.subr.bf16.mxu0 0
    %1420 = vmatpush1.bf16.msra.mxu0 0
    %1421 = vmatprep.subr.bf16.mxu0 0
    %1422 = vmatpush1.bf16.msra.mxu0 0
    %1423 = vmatprep.subr.bf16.mxu0 0
    %1424 = vmatpush1.bf16.msra.mxu0 0
    %1425 = vmatprep.subr.bf16.mxu0 0
    %1426 = vmatpush1.bf16.msra.mxu0 0
    %1427 = vmatprep.subr.bf16.mxu0 0
    %1428 = vmatpush1.bf16.msra.mxu0 %v1411
    %1429 = vmatprep.subr.bf16.mxu0 0
    %1430 = vmatpush2.bf16.msra.mxu0 0
    %1431 = vmatprep.subr.bf16.mxu0 0
    %1432 = vmatpush2.bf16.msra.mxu0 0
    %1433 = vmatprep.subr.bf16.mxu0 0
    %1434 = vmatpush2.bf16.msra.mxu0 0
    %1435 = vmatprep.subr.bf16.mxu0 0
    %1436 = vmatpush2.bf16.msra.mxu0 0
    %1437 = vmatprep.subr.bf16.mxu0 0
    %1438 = vmatpush2.bf16.msra.mxu0 0
    %1439 = vmatprep.subr.bf16.mxu0 0
    %1440 = vmatpush2.bf16.msra.mxu0 0
    %1441 = vmatprep.subr.bf16.mxu0 0
    %1442 = vmatpush2.bf16.msra.mxu0 0
    %1443 = vmatprep.subr.bf16.mxu0 0
    %1444 = vmatpush2.bf16.msra.mxu0 0
    %1445 = vmatprep.mubr.bf16.mxu0 0
    %1446 = vmatmul.mubr.bf16.gmra.mxu0 %v1408
    %v1447 = vpop.f32.mrf.mxu0
    %v1448 = vadd.f32 0.0, %v1447
    %v1449 = vpop.f32.mrf.mxu0
    %v1450 = vpop.f32.mrf.mxu0
    %v1451 = vpop.f32.mrf.mxu0
    %1452 = vdwg.mxu0
    %v1453 = vpack.c.bf16 %v1448, %v1448
    %v1455 = vsel %vm234, %v1453, 0
    %1457 = vmatprep.subr.bf16.mxu0 0
    %1458 = vmatpush1.bf16.msra.mxu0 0
    %1459 = vmatprep.subr.bf16.mxu0 0
    %1460 = vmatpush1.bf16.msra.mxu0 0
    %1461 = vmatprep.subr.bf16.mxu0 0
    %1462 = vmatpush1.bf16.msra.mxu0 0
    %1463 = vmatprep.subr.bf16.mxu0 0
    %1464 = vmatpush1.bf16.msra.mxu0 0
    %1465 = vmatprep.subr.bf16.mxu0 0
    %1466 = vmatpush1.bf16.msra.mxu0 0
    %1467 = vmatprep.subr.bf16.mxu0 0
    %1468 = vmatpush1.bf16.msra.mxu0 0
    %1469 = vmatprep.subr.bf16.mxu0 0
    %1470 = vmatpush1.bf16.msra.mxu0 0
    %1471 = vmatprep.subr.bf16.mxu0 0
    %1472 = vmatpush1.bf16.msra.mxu0 %v827
    %1473 = vmatprep.subr.bf16.mxu0 0
    %1474 = vmatpush2.bf16.msra.mxu0 0
    %1475 = vmatprep.subr.bf16.mxu0 0
    %1476 = vmatpush2.bf16.msra.mxu0 0
    %1477 = vmatprep.subr.bf16.mxu0 0
    %1478 = vmatpush2.bf16.msra.mxu0 0
    %1479 = vmatprep.subr.bf16.mxu0 0
    %1480 = vmatpush2.bf16.msra.mxu0 0
    %1481 = vmatprep.subr.bf16.mxu0 0
    %1482 = vmatpush2.bf16.msra.mxu0 0
    %1483 = vmatprep.subr.bf16.mxu0 0
    %1484 = vmatpush2.bf16.msra.mxu0 0
    %1485 = vmatprep.subr.bf16.mxu0 0
    %1486 = vmatpush2.bf16.msra.mxu0 0
    %1487 = vmatprep.subr.bf16.mxu0 0
    %1488 = vmatpush2.bf16.msra.mxu0 0
    %1489 = vmatprep.mubr.bf16.mxu0 0
    %1490 = vmatmul.mubr.bf16.gmra.mxu0 %v1455
    %v1491 = vpop.f32.mrf.mxu0
    %v1492 = vadd.f32 0.0, %v1491
    %v1493 = vpop.f32.mrf.mxu0
    %v1494 = vpop.f32.mrf.mxu0
    %v1495 = vpop.f32.mrf.mxu0
    %1496 = vdwg.mxu0
    %v1497 = vadd.f32 %v1340, %v1492
    %v1498 = vlaneseq
    %v1499 = vshrl.u32 %v1498, 7
    %v1500 = vsub.s32 0, %v1499
    %v1501 = vrot.slane %v227, %v1500
    %v1502 = vadd.f32 %v869, %v1501
    %v1503 = vadd.f32 %v1497, %v1501
    %v1504 = vadd.f32 %v93, %v1502
    %v1505 = vadd.f32 %v94, %v1503
    %v1506 = vld [vmem:[%s5 + $0x4] sm:$0x1]
    %v1507 = vld [vmem:[%s5 + $0x5] sm:$0x1]
    %v1508 = vsel %vm103, %v1504, 0.0
    %1509 = vadd.xlane.f32.xlu0 %v1508
    %v1510 = vpop.xlane.xlu0 %1509
    %v1511 = vsel %vm103, %v1505, 0.0
    %1512 = vadd.xlane.f32.xlu0 %v1511
    %v1513 = vpop.xlane.xlu0 %1512
    %v1514 = vmul.f32 %v1510, %v110
    %v1515 = vmul.f32 %v1513, %v110
    %v1516 = vsub.f32 %v1504, %v1514
    %v1517 = vsub.f32 %v1505, %v1515
    %v1518 = vmul.f32 %v1516, %v1516
    %v1519 = vmul.f32 %v1517, %v1517
    %v1520 = vsel %vm103, %v1518, 0.0
    %1521 = vadd.xlane.f32.xlu0 %v1520
    %v1522 = vpop.xlane.xlu0 %1521
    %v1523 = vsel %vm103, %v1519, 0.0
    %1524 = vadd.xlane.f32.xlu0 %v1523
    %v1525 = vpop.xlane.xlu0 %1524
    %v1526 = vmul.f32 %v1522, 0.032258064
    %v1527 = vmul.f32 %v1525, 0.032258064
    %v1528 = vrsqrt.pop %v1526
    %v1529 = vmul.f32 %v1526, %v1528
    %vm1530 = vcmp.eq.f32.partialorder %v1526, inf
    %v1531 = vsel %vm1530, %v1526, %v1529
    %vm1532 = vcmp.eq.f32.partialorder %v1526, 0.0
    %v1533 = vand.u32 %v1526, 2147483648
    %v1534 = vsel %vm1532, %v1533, %v1531
    %v1535 = vrsqrt.pop %v1527
    %v1536 = vmul.f32 %v1527, %v1535
    %vm1537 = vcmp.eq.f32.partialorder %v1527, inf
    %v1538 = vsel %vm1537, %v1527, %v1536
    %vm1539 = vcmp.eq.f32.partialorder %v1527, 0.0
    %v1540 = vand.u32 %v1527, 2147483648
    %v1541 = vsel %vm1539, %v1540, %v1538
    %v1542 = vadd.f32 %v1534, 1e-06
    %v1543 = vadd.f32 %v1541, 1e-06
    %v1544 = vrcp.pop %v1542
    %v1545 = vrcp.pop %v1543
    %v1546 = vlaneseq
    %v1547 = vshrl.u32 %v1546, 7
    %v1548 = vsub.s32 0, %v1547
    %v1549 = vrot.slane %v1506, %v1548
    %v1550 = vmul.f32 %v1549, %v1516
    %v1551 = vmul.f32 %v1549, %v1517
    %v1552 = vmul.f32 %v1550, %v1544
    %v1553 = vmul.f32 %v1551, %v1545
    %v1554 = vlaneseq
    %v1555 = vshrl.u32 %v1554, 7
    %v1556 = vsub.s32 0, %v1555
    %v1557 = vrot.slane %v1507, %v1556
    %v1558 = vadd.f32 %v1552, %v1557
    %v1559 = vadd.f32 %v1553, %v1557
    %v1560 = vpack.c.bf16 %v1559, %v1558
    %v1561 = vld [vmem:[#allocation10 + $0x20] sm:$0xf]
    %v1562 = vld [vmem:[#allocation10 + $0x24] sm:$0xf]
    %v1563 = vld [vmem:[#allocation10 + $0x28] sm:$0xf]
    %v1564 = vld [vmem:[#allocation10 + $0x2c] sm:$0xf]
    %v1565 = vld [vmem:[%s5 + $0x6] sm:$0x1]
    %v1566 = vlaneseq
    %v1567 = vshrl.u32 %v1566, 7
    %v1568 = vsub.s32 0, %v1567
    %v1569 = vrot.slane %v1565, %v1568
    %v1574 = vunpack.c.l.b16 %v1561
    %v1575 = vunpack.c.l.b16 %v1562
    %v1576 = vunpack.c.l.b16 %v1563
    %v1577 = vunpack.c.l.b16 %v1564
    %v1578 = vpack.c.b16 %v1575, %v1574
    %v1579 = vpack.c.b16 %v1577, %v1576
    %v1583 = vsel %vm103, %v1560, 0
    %1585 = vmatprep.subr.bf16.mxu0 0
    %1586 = vmatpush1.bf16.msra.mxu0 0
    %1587 = vmatprep.subr.bf16.mxu0 0
    %1588 = vmatpush1.bf16.msra.mxu0 0
    %1589 = vmatprep.subr.bf16.mxu0 0
    %1590 = vmatpush1.bf16.msra.mxu0 0
    %1591 = vmatprep.subr.bf16.mxu0 0
    %1592 = vmatpush1.bf16.msra.mxu0 0
    %1593 = vmatprep.subr.bf16.mxu0 0
    %1594 = vmatpush1.bf16.msra.mxu0 0
    %1595 = vmatprep.subr.bf16.mxu0 0
    %1596 = vmatpush1.bf16.msra.mxu0 0
    %1597 = vmatprep.subr.bf16.mxu0 0
    %1598 = vmatpush1.bf16.msra.mxu0 %v1579
    %1599 = vmatprep.subr.bf16.mxu0 0
    %1600 = vmatpush1.bf16.msra.mxu0 %v1578
    %1601 = vmatprep.subr.bf16.mxu0 0
    %1602 = vmatpush2.bf16.msra.mxu0 0
    %1603 = vmatprep.subr.bf16.mxu0 0
    %1604 = vmatpush2.bf16.msra.mxu0 0
    %1605 = vmatprep.subr.bf16.mxu0 0
    %1606 = vmatpush2.bf16.msra.mxu0 0
    %1607 = vmatprep.subr.bf16.mxu0 0
    %1608 = vmatpush2.bf16.msra.mxu0 0
    %1609 = vmatprep.subr.bf16.mxu0 0
    %1610 = vmatpush2.bf16.msra.mxu0 0
    %1611 = vmatprep.subr.bf16.mxu0 0
    %1612 = vmatpush2.bf16.msra.mxu0 0
    %1613 = vmatprep.subr.bf16.mxu0 0
    %1614 = vmatpush2.bf16.msra.mxu0 0
    %1615 = vmatprep.subr.bf16.mxu0 0
    %1616 = vmatpush2.bf16.msra.mxu0 0
    %1617 = vmatprep.mubr.bf16.mxu0 0
    %1618 = vmatmul.mubr.bf16.gmra.mxu0 %v1583
    %v1619 = vpop.f32.mrf.mxu0
    %v1620 = vadd.f32 %v1569, %v1619
    %v1621 = vpop.f32.mrf.mxu0
    %v1622 = vpop.f32.mrf.mxu0
    %v1623 = vadd.f32 %v1569, %v1622
    %v1624 = vpop.f32.mrf.mxu0
    %1625 = vdwg.mxu0
    %v1626 = vpack.c.bf16 %v96, %v95
    %v1627 = vld [vmem:[#allocation10 + $0x30] sm:$0xf]
    %v1628 = vld [vmem:[#allocation10 + $0x34] sm:$0xf]
    %v1629 = vld [vmem:[#allocation10 + $0x38] sm:$0xf]
    %v1630 = vld [vmem:[#allocation10 + $0x3c] sm:$0xf]
    %v1631 = vld [vmem:[%s5 + $0x7] sm:$0x1]
    %v1632 = vlaneseq
    %v1633 = vshrl.u32 %v1632, 7
    %v1634 = vsub.s32 0, %v1633
    %v1635 = vrot.slane %v1631, %v1634
    %v1640 = vunpack.c.l.b16 %v1627
    %v1641 = vunpack.c.l.b16 %v1628
    %v1642 = vunpack.c.l.b16 %v1629
    %v1643 = vunpack.c.l.b16 %v1630
    %v1644 = vpack.c.b16 %v1641, %v1640
    %v1645 = vpack.c.b16 %v1643, %v1642
    %v1649 = vsel %vm103, %v1626, 0
    %1651 = vmatprep.subr.bf16.mxu0 0
    %1652 = vmatpush1.bf16.msra.mxu0 0
    %1653 = vmatprep.subr.bf16.mxu0 0
    %1654 = vmatpush1.bf16.msra.mxu0 0
    %1655 = vmatprep.subr.bf16.mxu0 0
    %1656 = vmatpush1.bf16.msra.mxu0 0
    %1657 = vmatprep.subr.bf16.mxu0 0
    %1658 = vmatpush1.bf16.msra.mxu0 0
    %1659 = vmatprep.subr.bf16.mxu0 0
    %1660 = vmatpush1.bf16.msra.mxu0 0
    %1661 = vmatprep.subr.bf16.mxu0 0
    %1662 = vmatpush1.bf16.msra.mxu0 0
    %1663 = vmatprep.subr.bf16.mxu0 0
    %1664 = vmatpush1.bf16.msra.mxu0 %v1645
    %1665 = vmatprep.subr.bf16.mxu0 0
    %1666 = vmatpush1.bf16.msra.mxu0 %v1644
    %1667 = vmatprep.subr.bf16.mxu0 0
    %1668 = vmatpush2.bf16.msra.mxu0 0
    %1669 = vmatprep.subr.bf16.mxu0 0
    %1670 = vmatpush2.bf16.msra.mxu0 0
    %1671 = vmatprep.subr.bf16.mxu0 0
    %1672 = vmatpush2.bf16.msra.mxu0 0
    %1673 = vmatprep.subr.bf16.mxu0 0
    %1674 = vmatpush2.bf16.msra.mxu0 0
    %1675 = vmatprep.subr.bf16.mxu0 0
    %1676 = vmatpush2.bf16.msra.mxu0 0
    %1677 = vmatprep.subr.bf16.mxu0 0
    %1678 = vmatpush2.bf16.msra.mxu0 0
    %1679 = vmatprep.subr.bf16.mxu0 0
    %1680 = vmatpush2.bf16.msra.mxu0 0
    %1681 = vmatprep.subr.bf16.mxu0 0
    %1682 = vmatpush2.bf16.msra.mxu0 0
    %1683 = vmatprep.mubr.bf16.mxu0 0
    %1684 = vmatmul.mubr.bf16.gmra.mxu0 %v1649
    %v1685 = vpop.f32.mrf.mxu0
    %v1686 = vadd.f32 %v1635, %v1685
    %v1687 = vpop.f32.mrf.mxu0
    %v1688 = vpop.f32.mrf.mxu0
    %v1689 = vadd.f32 %v1635, %v1688
    %v1690 = vpop.f32.mrf.mxu0
    %1691 = vdwg.mxu0
    %v1692 = vld [vmem:[#allocation10 + $0x40] sm:$0xf]
    %v1693 = vld [vmem:[#allocation10 + $0x44] sm:$0xf]
    %v1694 = vld [vmem:[#allocation10 + $0x48] sm:$0xf]
    %v1695 = vld [vmem:[#allocation10 + $0x4c] sm:$0xf]
    %v1696 = vld [vmem:[%s5 + $0x8] sm:$0x1]
    %v1697 = vsub.f32 %v99, 1.0
    %v1698 = vmul.f32 %v1697, 1e+09
    %v1699 = vpack.c.bf16 %v1620, %v1620
    %v1700 = vpack.c.bf16 %v1686, %v1686
    %v1702 = vsel %vm234, %v1699, 0
    %v1705 = vsel %vm234, %v1700, 0
    %1707 = vmatprep.subr.bf16.mxu0 0
    %1708 = vmatpush1.bf16.xpose.msra.mxu0 0
    %1709 = vmatprep.subr.bf16.mxu0 0
    %1710 = vmatpush1.bf16.xpose.msra.mxu0 0
    %1711 = vmatprep.subr.bf16.mxu0 0
    %1712 = vmatpush1.bf16.xpose.msra.mxu0 0
    %1713 = vmatprep.subr.bf16.mxu0 0
    %1714 = vmatpush1.bf16.xpose.msra.mxu0 0
    %1715 = vmatprep.subr.bf16.mxu0 0
    %1716 = vmatpush1.bf16.xpose.msra.mxu0 0
    %1717 = vmatprep.subr.bf16.mxu0 0
    %1718 = vmatpush1.bf16.xpose.msra.mxu0 0
    %1719 = vmatprep.subr.bf16.mxu0 0
    %1720 = vmatpush1.bf16.xpose.msra.mxu0 0
    %1721 = vmatprep.subr.bf16.mxu0 0
    %1722 = vmatpush1.bf16.xpose.msra.mxu0 %v1705
    %1723 = vmatprep.subr.bf16.mxu0 0
    %1724 = vmatpush2.bf16.xpose.msra.mxu0 0
    %1725 = vmatprep.subr.bf16.mxu0 0
    %1726 = vmatpush2.bf16.xpose.msra.mxu0 0
    %1727 = vmatprep.subr.bf16.mxu0 0
    %1728 = vmatpush2.bf16.xpose.msra.mxu0 0
    %1729 = vmatprep.subr.bf16.mxu0 0
    %1730 = vmatpush2.bf16.xpose.msra.mxu0 0
    %1731 = vmatprep.subr.bf16.mxu0 0
    %1732 = vmatpush2.bf16.xpose.msra.mxu0 0
    %1733 = vmatprep.subr.bf16.mxu0 0
    %1734 = vmatpush2.bf16.xpose.msra.mxu0 0
    %1735 = vmatprep.subr.bf16.mxu0 0
    %1736 = vmatpush2.bf16.xpose.msra.mxu0 0
    %1737 = vmatprep.subr.bf16.mxu0 0
    %1738 = vmatpush2.bf16.xpose.msra.mxu0 0
    %1739 = vmatprep.mubr.bf16.mxu0 0
    %1740 = vmatmul.mubr.bf16.gmra.mxu0 %v1702
    %v1741 = vpop.f32.mrf.mxu0
    %v1742 = vadd.f32 0.0, %v1741
    %v1743 = vpop.f32.mrf.mxu0
    %v1744 = vpop.f32.mrf.mxu0
    %v1745 = vpop.f32.mrf.mxu0
    %1746 = vdwg.mxu0
    %v1747 = vmul.f32 %v1742, 0.35355338
    %v1748 = vadd.f32 %v1747, %v1698
    %v1749 = vsel %vm234, %v1748, -inf
    %1750 = vmax.xlane.f32.xlu0 %v1749
    %v1751 = vpop.xlane.xlu0 %1750
    %v1752 = vsub.f32 %v1748, %v1751
    %v1753 = vmul.f32 %v1752, 1.442695
    %v1754 = vpow.pop %v1753
    %v1755 = vsel %vm234, %v1754, 0.0
    %1756 = vadd.xlane.f32.xlu0 %v1755
    %v1757 = vpop.xlane.xlu0 %1756
    %v1758 = vrcp.pop %v1757
    %v1759 = vmul.f32 %v1754, %v1758
    %v1760 = vpack.c.bf16 %v1759, %v1759
    %1762 = vrot.lane.b32.xlu0 %v1700, 96
    %v1763 = vpop.permute.xlu0 %1762
    %v1765 = vsel %vm234, %v1760, 0
    %v1768 = vsel %vm300, %v1763, 0
    %1770 = vmatprep.subr.bf16.mxu0 0
    %1771 = vmatpush1.bf16.msra.mxu0 0
    %1772 = vmatprep.subr.bf16.mxu0 0
    %1773 = vmatpush1.bf16.msra.mxu0 0
    %1774 = vmatprep.subr.bf16.mxu0 0
    %1775 = vmatpush1.bf16.msra.mxu0 0
    %1776 = vmatprep.subr.bf16.mxu0 0
    %1777 = vmatpush1.bf16.msra.mxu0 0
    %1778 = vmatprep.subr.bf16.mxu0 0
    %1779 = vmatpush1.bf16.msra.mxu0 0
    %1780 = vmatprep.subr.bf16.mxu0 0
    %1781 = vmatpush1.bf16.msra.mxu0 0
    %1782 = vmatprep.subr.bf16.mxu0 0
    %1783 = vmatpush1.bf16.msra.mxu0 0
    %1784 = vmatprep.subr.bf16.mxu0 0
    %1785 = vmatpush1.bf16.msra.mxu0 %v1768
    %1786 = vmatprep.subr.bf16.mxu0 0
    %1787 = vmatpush2.bf16.msra.mxu0 0
    %1788 = vmatprep.subr.bf16.mxu0 0
    %1789 = vmatpush2.bf16.msra.mxu0 0
    %1790 = vmatprep.subr.bf16.mxu0 0
    %1791 = vmatpush2.bf16.msra.mxu0 0
    %1792 = vmatprep.subr.bf16.mxu0 0
    %1793 = vmatpush2.bf16.msra.mxu0 0
    %1794 = vmatprep.subr.bf16.mxu0 0
    %1795 = vmatpush2.bf16.msra.mxu0 0
    %1796 = vmatprep.subr.bf16.mxu0 0
    %1797 = vmatpush2.bf16.msra.mxu0 0
    %1798 = vmatprep.subr.bf16.mxu0 0
    %1799 = vmatpush2.bf16.msra.mxu0 0
    %1800 = vmatprep.subr.bf16.mxu0 0
    %1801 = vmatpush2.bf16.msra.mxu0 0
    %1802 = vmatprep.mubr.bf16.mxu0 0
    %1803 = vmatmul.mubr.bf16.gmra.mxu0 %v1765
    %v1804 = vpop.f32.mrf.mxu0
    %v1805 = vadd.f32 0.0, %v1804
    %v1806 = vpop.f32.mrf.mxu0
    %v1807 = vpop.f32.mrf.mxu0
    %v1808 = vpop.f32.mrf.mxu0
    %1809 = vdwg.mxu0
    %v1810 = vpack.c.bf16 %v1805, %v1805
    %1812 = vrot.lane.b32.xlu0 %v1699, 120
    %v1813 = vpop.permute.xlu0 %1812
    %1814 = vrot.lane.b32.xlu0 %v1700, 120
    %v1815 = vpop.permute.xlu0 %1814
    %v1817 = vsel %vm234, %v1813, 0
    %v1820 = vsel %vm234, %v1815, 0
    %1822 = vmatprep.subr.bf16.mxu0 0
    %1823 = vmatpush1.bf16.xpose.msra.mxu0 0
    %1824 = vmatprep.subr.bf16.mxu0 0
    %1825 = vmatpush1.bf16.xpose.msra.mxu0 0
    %1826 = vmatprep.subr.bf16.mxu0 0
    %1827 = vmatpush1.bf16.xpose.msra.mxu0 0
    %1828 = vmatprep.subr.bf16.mxu0 0
    %1829 = vmatpush1.bf16.xpose.msra.mxu0 0
    %1830 = vmatprep.subr.bf16.mxu0 0
    %1831 = vmatpush1.bf16.xpose.msra.mxu0 0
    %1832 = vmatprep.subr.bf16.mxu0 0
    %1833 = vmatpush1.bf16.xpose.msra.mxu0 0
    %1834 = vmatprep.subr.bf16.mxu0 0
    %1835 = vmatpush1.bf16.xpose.msra.mxu0 0
    %1836 = vmatprep.subr.bf16.mxu0 0
    %1837 = vmatpush1.bf16.xpose.msra.mxu0 %v1820
    %1838 = vmatprep.subr.bf16.mxu0 0
    %1839 = vmatpush2.bf16.xpose.msra.mxu0 0
    %1840 = vmatprep.subr.bf16.mxu0 0
    %1841 = vmatpush2.bf16.xpose.msra.mxu0 0
    %1842 = vmatprep.subr.bf16.mxu0 0
    %1843 = vmatpush2.bf16.xpose.msra.mxu0 0
    %1844 = vmatprep.subr.bf16.mxu0 0
    %1845 = vmatpush2.bf16.xpose.msra.mxu0 0
    %1846 = vmatprep.subr.bf16.mxu0 0
    %1847 = vmatpush2.bf16.xpose.msra.mxu0 0
    %1848 = vmatprep.subr.bf16.mxu0 0
    %1849 = vmatpush2.bf16.xpose.msra.mxu0 0
    %1850 = vmatprep.subr.bf16.mxu0 0
    %1851 = vmatpush2.bf16.xpose.msra.mxu0 0
    %1852 = vmatprep.subr.bf16.mxu0 0
    %1853 = vmatpush2.bf16.xpose.msra.mxu0 0
    %1854 = vmatprep.mubr.bf16.mxu0 0
    %1855 = vmatmul.mubr.bf16.gmra.mxu0 %v1817
    %v1856 = vpop.f32.mrf.mxu0
    %v1857 = vadd.f32 0.0, %v1856
    %v1858 = vpop.f32.mrf.mxu0
    %v1859 = vpop.f32.mrf.mxu0
    %v1860 = vpop.f32.mrf.mxu0
    %1861 = vdwg.mxu0
    %v1862 = vmul.f32 %v1857, 0.35355338
    %v1863 = vadd.f32 %v1862, %v1698
    %v1864 = vsel %vm234, %v1863, -inf
    %1865 = vmax.xlane.f32.xlu0 %v1864
    %v1866 = vpop.xlane.xlu0 %1865
    %v1867 = vsub.f32 %v1863, %v1866
    %v1868 = vmul.f32 %v1867, 1.442695
    %v1869 = vpow.pop %v1868
    %v1870 = vsel %vm234, %v1869, 0.0
    %1871 = vadd.xlane.f32.xlu0 %v1870
    %v1872 = vpop.xlane.xlu0 %1871
    %v1873 = vrcp.pop %v1872
    %v1874 = vmul.f32 %v1869, %v1873
    %v1875 = vpack.c.bf16 %v1874, %v1874
    %1876 = vrot.lane.b32.xlu0 %v1700, 88
    %v1877 = vpop.permute.xlu0 %1876
    %v1879 = vsel %vm234, %v1875, 0
    %v1882 = vsel %vm300, %v1877, 0
    %1884 = vmatprep.subr.bf16.mxu0 0
    %1885 = vmatpush1.bf16.msra.mxu0 0
    %1886 = vmatprep.subr.bf16.mxu0 0
    %1887 = vmatpush1.bf16.msra.mxu0 0
    %1888 = vmatprep.subr.bf16.mxu0 0
    %1889 = vmatpush1.bf16.msra.mxu0 0
    %1890 = vmatprep.subr.bf16.mxu0 0
    %1891 = vmatpush1.bf16.msra.mxu0 0
    %1892 = vmatprep.subr.bf16.mxu0 0
    %1893 = vmatpush1.bf16.msra.mxu0 0
    %1894 = vmatprep.subr.bf16.mxu0 0
    %1895 = vmatpush1.bf16.msra.mxu0 0
    %1896 = vmatprep.subr.bf16.mxu0 0
    %1897 = vmatpush1.bf16.msra.mxu0 0
    %1898 = vmatprep.subr.bf16.mxu0 0
    %1899 = vmatpush1.bf16.msra.mxu0 %v1882
    %1900 = vmatprep.subr.bf16.mxu0 0
    %1901 = vmatpush2.bf16.msra.mxu0 0
    %1902 = vmatprep.subr.bf16.mxu0 0
    %1903 = vmatpush2.bf16.msra.mxu0 0
    %1904 = vmatprep.subr.bf16.mxu0 0
    %1905 = vmatpush2.bf16.msra.mxu0 0
    %1906 = vmatprep.subr.bf16.mxu0 0
    %1907 = vmatpush2.bf16.msra.mxu0 0
    %1908 = vmatprep.subr.bf16.mxu0 0
    %1909 = vmatpush2.bf16.msra.mxu0 0
    %1910 = vmatprep.subr.bf16.mxu0 0
    %1911 = vmatpush2.bf16.msra.mxu0 0
    %1912 = vmatprep.subr.bf16.mxu0 0
    %1913 = vmatpush2.bf16.msra.mxu0 0
    %1914 = vmatprep.subr.bf16.mxu0 0
    %1915 = vmatpush2.bf16.msra.mxu0 0
    %1916 = vmatprep.mubr.bf16.mxu0 0
    %1917 = vmatmul.mubr.bf16.gmra.mxu0 %v1879
    %v1918 = vpop.f32.mrf.mxu0
    %v1919 = vadd.f32 0.0, %v1918
    %v1920 = vpop.f32.mrf.mxu0
    %v1921 = vpop.f32.mrf.mxu0
    %v1922 = vpop.f32.mrf.mxu0
    %1923 = vdwg.mxu0
    %v1924 = vpack.c.bf16 %v1919, %v1919
    %v1926 = vsel %vm234, %v1924, 0
    %v1929 = vsel %vm300, %v1693, 0
    %1931 = vmatprep.subr.bf16.mxu0 0
    %1932 = vmatpush1.bf16.msra.mxu0 0
    %1933 = vmatprep.subr.bf16.mxu0 0
    %1934 = vmatpush1.bf16.msra.mxu0 0
    %1935 = vmatprep.subr.bf16.mxu0 0
    %1936 = vmatpush1.bf16.msra.mxu0 0
    %1937 = vmatprep.subr.bf16.mxu0 0
    %1938 = vmatpush1.bf16.msra.mxu0 0
    %1939 = vmatprep.subr.bf16.mxu0 0
    %1940 = vmatpush1.bf16.msra.mxu0 0
    %1941 = vmatprep.subr.bf16.mxu0 0
    %1942 = vmatpush1.bf16.msra.mxu0 0
    %1943 = vmatprep.subr.bf16.mxu0 0
    %1944 = vmatpush1.bf16.msra.mxu0 0
    %1945 = vmatprep.subr.bf16.mxu0 0
    %1946 = vmatpush1.bf16.msra.mxu0 %v1929
    %1947 = vmatprep.subr.bf16.mxu0 0
    %1948 = vmatpush2.bf16.msra.mxu0 0
    %1949 = vmatprep.subr.bf16.mxu0 0
    %1950 = vmatpush2.bf16.msra.mxu0 0
    %1951 = vmatprep.subr.bf16.mxu0 0
    %1952 = vmatpush2.bf16.msra.mxu0 0
    %1953 = vmatprep.subr.bf16.mxu0 0
    %1954 = vmatpush2.bf16.msra.mxu0 0
    %1955 = vmatprep.subr.bf16.mxu0 0
    %1956 = vmatpush2.bf16.msra.mxu0 0
    %1957 = vmatprep.subr.bf16.mxu0 0
    %1958 = vmatpush2.bf16.msra.mxu0 0
    %1959 = vmatprep.subr.bf16.mxu0 0
    %1960 = vmatpush2.bf16.msra.mxu0 0
    %1961 = vmatprep.subr.bf16.mxu0 0
    %1962 = vmatpush2.bf16.msra.mxu0 0
    %1963 = vmatprep.mubr.bf16.mxu0 0
    %1964 = vmatmul.mubr.bf16.gmra.mxu0 %v1926
    %v1965 = vpop.f32.mrf.mxu0
    %v1966 = vadd.f32 0.0, %v1965
    %v1967 = vpop.f32.mrf.mxu0
    %v1968 = vpop.f32.mrf.mxu0
    %v1969 = vpop.f32.mrf.mxu0
    %1970 = vdwg.mxu0
    %v1972 = vsel %vm234, %v1810, 0
    %v1975 = vsel %vm300, %v1692, 0
    %1977 = vmatprep.subr.bf16.mxu0 0
    %1978 = vmatpush1.bf16.msra.mxu0 0
    %1979 = vmatprep.subr.bf16.mxu0 0
    %1980 = vmatpush1.bf16.msra.mxu0 0
    %1981 = vmatprep.subr.bf16.mxu0 0
    %1982 = vmatpush1.bf16.msra.mxu0 0
    %1983 = vmatprep.subr.bf16.mxu0 0
    %1984 = vmatpush1.bf16.msra.mxu0 0
    %1985 = vmatprep.subr.bf16.mxu0 0
    %1986 = vmatpush1.bf16.msra.mxu0 0
    %1987 = vmatprep.subr.bf16.mxu0 0
    %1988 = vmatpush1.bf16.msra.mxu0 0
    %1989 = vmatprep.subr.bf16.mxu0 0
    %1990 = vmatpush1.bf16.msra.mxu0 0
    %1991 = vmatprep.subr.bf16.mxu0 0
    %1992 = vmatpush1.bf16.msra.mxu0 %v1975
    %1993 = vmatprep.subr.bf16.mxu0 0
    %1994 = vmatpush2.bf16.msra.mxu0 0
    %1995 = vmatprep.subr.bf16.mxu0 0
    %1996 = vmatpush2.bf16.msra.mxu0 0
    %1997 = vmatprep.subr.bf16.mxu0 0
    %1998 = vmatpush2.bf16.msra.mxu0 0
    %1999 = vmatprep.subr.bf16.mxu0 0
    %2000 = vmatpush2.bf16.msra.mxu0 0
    %2001 = vmatprep.subr.bf16.mxu0 0
    %2002 = vmatpush2.bf16.msra.mxu0 0
    %2003 = vmatprep.subr.bf16.mxu0 0
    %2004 = vmatpush2.bf16.msra.mxu0 0
    %2005 = vmatprep.subr.bf16.mxu0 0
    %2006 = vmatpush2.bf16.msra.mxu0 0
    %2007 = vmatprep.subr.bf16.mxu0 0
    %2008 = vmatpush2.bf16.msra.mxu0 0
    %2009 = vmatprep.mubr.bf16.mxu0 0
    %2010 = vmatmul.mubr.bf16.gmra.mxu0 %v1972
    %v2011 = vpop.f32.mrf.mxu0
    %v2012 = vadd.f32 %v1966, %v2011
    %v2013 = vpop.f32.mrf.mxu0
    %v2014 = vpop.f32.mrf.mxu0
    %v2015 = vpop.f32.mrf.mxu0
    %2016 = vdwg.mxu0
    %2017 = vrot.lane.b32.xlu0 %v1699, 112
    %v2018 = vpop.permute.xlu0 %2017
    %2019 = vrot.lane.b32.xlu0 %v1700, 112
    %v2020 = vpop.permute.xlu0 %2019
    %v2022 = vsel %vm234, %v2018, 0
    %v2025 = vsel %vm234, %v2020, 0
    %2027 = vmatprep.subr.bf16.mxu0 0
    %2028 = vmatpush1.bf16.xpose.msra.mxu0 0
    %2029 = vmatprep.subr.bf16.mxu0 0
    %2030 = vmatpush1.bf16.xpose.msra.mxu0 0
    %2031 = vmatprep.subr.bf16.mxu0 0
    %2032 = vmatpush1.bf16.xpose.msra.mxu0 0
    %2033 = vmatprep.subr.bf16.mxu0 0
    %2034 = vmatpush1.bf16.xpose.msra.mxu0 0
    %2035 = vmatprep.subr.bf16.mxu0 0
    %2036 = vmatpush1.bf16.xpose.msra.mxu0 0
    %2037 = vmatprep.subr.bf16.mxu0 0
    %2038 = vmatpush1.bf16.xpose.msra.mxu0 0
    %2039 = vmatprep.subr.bf16.mxu0 0
    %2040 = vmatpush1.bf16.xpose.msra.mxu0 0
    %2041 = vmatprep.subr.bf16.mxu0 0
    %2042 = vmatpush1.bf16.xpose.msra.mxu0 %v2025
    %2043 = vmatprep.subr.bf16.mxu0 0
    %2044 = vmatpush2.bf16.xpose.msra.mxu0 0
    %2045 = vmatprep.subr.bf16.mxu0 0
    %2046 = vmatpush2.bf16.xpose.msra.mxu0 0
    %2047 = vmatprep.subr.bf16.mxu0 0
    %2048 = vmatpush2.bf16.xpose.msra.mxu0 0
    %2049 = vmatprep.subr.bf16.mxu0 0
    %2050 = vmatpush2.bf16.xpose.msra.mxu0 0
    %2051 = vmatprep.subr.bf16.mxu0 0
    %2052 = vmatpush2.bf16.xpose.msra.mxu0 0
    %2053 = vmatprep.subr.bf16.mxu0 0
    %2054 = vmatpush2.bf16.xpose.msra.mxu0 0
    %2055 = vmatprep.subr.bf16.mxu0 0
    %2056 = vmatpush2.bf16.xpose.msra.mxu0 0
    %2057 = vmatprep.subr.bf16.mxu0 0
    %2058 = vmatpush2.bf16.xpose.msra.mxu0 0
    %2059 = vmatprep.mubr.bf16.mxu0 0
    %2060 = vmatmul.mubr.bf16.gmra.mxu0 %v2022
    %v2061 = vpop.f32.mrf.mxu0
    %v2062 = vadd.f32 0.0, %v2061
    %v2063 = vpop.f32.mrf.mxu0
    %v2064 = vpop.f32.mrf.mxu0
    %v2065 = vpop.f32.mrf.mxu0
    %2066 = vdwg.mxu0
    %v2067 = vmul.f32 %v2062, 0.35355338
    %v2068 = vadd.f32 %v2067, %v1698
    %v2069 = vsel %vm234, %v2068, -inf
    %2070 = vmax.xlane.f32.xlu0 %v2069
    %v2071 = vpop.xlane.xlu0 %2070
    %v2072 = vsub.f32 %v2068, %v2071
    %v2073 = vmul.f32 %v2072, 1.442695
    %v2074 = vpow.pop %v2073
    %v2075 = vsel %vm234, %v2074, 0.0
    %2076 = vadd.xlane.f32.xlu0 %v2075
    %v2077 = vpop.xlane.xlu0 %2076
    %v2078 = vrcp.pop %v2077
    %v2079 = vmul.f32 %v2074, %v2078
    %v2080 = vpack.c.bf16 %v2079, %v2079
    %2081 = vrot.lane.b32.xlu0 %v1700, 80
    %v2082 = vpop.permute.xlu0 %2081
    %v2084 = vsel %vm234, %v2080, 0
    %v2087 = vsel %vm300, %v2082, 0
    %2089 = vmatprep.subr.bf16.mxu0 0
    %2090 = vmatpush1.bf16.msra.mxu0 0
    %2091 = vmatprep.subr.bf16.mxu0 0
    %2092 = vmatpush1.bf16.msra.mxu0 0
    %2093 = vmatprep.subr.bf16.mxu0 0
    %2094 = vmatpush1.bf16.msra.mxu0 0
    %2095 = vmatprep.subr.bf16.mxu0 0
    %2096 = vmatpush1.bf16.msra.mxu0 0
    %2097 = vmatprep.subr.bf16.mxu0 0
    %2098 = vmatpush1.bf16.msra.mxu0 0
    %2099 = vmatprep.subr.bf16.mxu0 0
    %2100 = vmatpush1.bf16.msra.mxu0 0
    %2101 = vmatprep.subr.bf16.mxu0 0
    %2102 = vmatpush1.bf16.msra.mxu0 0
    %2103 = vmatprep.subr.bf16.mxu0 0
    %2104 = vmatpush1.bf16.msra.mxu0 %v2087
    %2105 = vmatprep.subr.bf16.mxu0 0
    %2106 = vmatpush2.bf16.msra.mxu0 0
    %2107 = vmatprep.subr.bf16.mxu0 0
    %2108 = vmatpush2.bf16.msra.mxu0 0
    %2109 = vmatprep.subr.bf16.mxu0 0
    %2110 = vmatpush2.bf16.msra.mxu0 0
    %2111 = vmatprep.subr.bf16.mxu0 0
    %2112 = vmatpush2.bf16.msra.mxu0 0
    %2113 = vmatprep.subr.bf16.mxu0 0
    %2114 = vmatpush2.bf16.msra.mxu0 0
    %2115 = vmatprep.subr.bf16.mxu0 0
    %2116 = vmatpush2.bf16.msra.mxu0 0
    %2117 = vmatprep.subr.bf16.mxu0 0
    %2118 = vmatpush2.bf16.msra.mxu0 0
    %2119 = vmatprep.subr.bf16.mxu0 0
    %2120 = vmatpush2.bf16.msra.mxu0 0
    %2121 = vmatprep.mubr.bf16.mxu0 0
    %2122 = vmatmul.mubr.bf16.gmra.mxu0 %v2084
    %v2123 = vpop.f32.mrf.mxu0
    %v2124 = vadd.f32 0.0, %v2123
    %v2125 = vpop.f32.mrf.mxu0
    %v2126 = vpop.f32.mrf.mxu0
    %v2127 = vpop.f32.mrf.mxu0
    %2128 = vdwg.mxu0
    %v2129 = vpack.c.bf16 %v2124, %v2124
    %v2131 = vsel %vm234, %v2129, 0
    %v2134 = vsel %vm300, %v1694, 0
    %2136 = vmatprep.subr.bf16.mxu0 0
    %2137 = vmatpush1.bf16.msra.mxu0 0
    %2138 = vmatprep.subr.bf16.mxu0 0
    %2139 = vmatpush1.bf16.msra.mxu0 0
    %2140 = vmatprep.subr.bf16.mxu0 0
    %2141 = vmatpush1.bf16.msra.mxu0 0
    %2142 = vmatprep.subr.bf16.mxu0 0
    %2143 = vmatpush1.bf16.msra.mxu0 0
    %2144 = vmatprep.subr.bf16.mxu0 0
    %2145 = vmatpush1.bf16.msra.mxu0 0
    %2146 = vmatprep.subr.bf16.mxu0 0
    %2147 = vmatpush1.bf16.msra.mxu0 0
    %2148 = vmatprep.subr.bf16.mxu0 0
    %2149 = vmatpush1.bf16.msra.mxu0 0
    %2150 = vmatprep.subr.bf16.mxu0 0
    %2151 = vmatpush1.bf16.msra.mxu0 %v2134
    %2152 = vmatprep.subr.bf16.mxu0 0
    %2153 = vmatpush2.bf16.msra.mxu0 0
    %2154 = vmatprep.subr.bf16.mxu0 0
    %2155 = vmatpush2.bf16.msra.mxu0 0
    %2156 = vmatprep.subr.bf16.mxu0 0
    %2157 = vmatpush2.bf16.msra.mxu0 0
    %2158 = vmatprep.subr.bf16.mxu0 0
    %2159 = vmatpush2.bf16.msra.mxu0 0
    %2160 = vmatprep.subr.bf16.mxu0 0
    %2161 = vmatpush2.bf16.msra.mxu0 0
    %2162 = vmatprep.subr.bf16.mxu0 0
    %2163 = vmatpush2.bf16.msra.mxu0 0
    %2164 = vmatprep.subr.bf16.mxu0 0
    %2165 = vmatpush2.bf16.msra.mxu0 0
    %2166 = vmatprep.subr.bf16.mxu0 0
    %2167 = vmatpush2.bf16.msra.mxu0 0
    %2168 = vmatprep.mubr.bf16.mxu0 0
    %2169 = vmatmul.mubr.bf16.gmra.mxu0 %v2131
    %v2170 = vpop.f32.mrf.mxu0
    %v2171 = vadd.f32 0.0, %v2170
    %v2172 = vpop.f32.mrf.mxu0
    %v2173 = vpop.f32.mrf.mxu0
    %v2174 = vpop.f32.mrf.mxu0
    %2175 = vdwg.mxu0
    %v2176 = vadd.f32 %v2012, %v2171
    %2177 = vrot.lane.b32.xlu0 %v1699, 104
    %v2178 = vpop.permute.xlu0 %2177
    %2179 = vrot.lane.b32.xlu0 %v1700, 104
    %v2180 = vpop.permute.xlu0 %2179
    %v2182 = vsel %vm234, %v2178, 0
    %v2185 = vsel %vm234, %v2180, 0
    %2187 = vmatprep.subr.bf16.mxu0 0
    %2188 = vmatpush1.bf16.xpose.msra.mxu0 0
    %2189 = vmatprep.subr.bf16.mxu0 0
    %2190 = vmatpush1.bf16.xpose.msra.mxu0 0
    %2191 = vmatprep.subr.bf16.mxu0 0
    %2192 = vmatpush1.bf16.xpose.msra.mxu0 0
    %2193 = vmatprep.subr.bf16.mxu0 0
    %2194 = vmatpush1.bf16.xpose.msra.mxu0 0
    %2195 = vmatprep.subr.bf16.mxu0 0
    %2196 = vmatpush1.bf16.xpose.msra.mxu0 0
    %2197 = vmatprep.subr.bf16.mxu0 0
    %2198 = vmatpush1.bf16.xpose.msra.mxu0 0
    %2199 = vmatprep.subr.bf16.mxu0 0
    %2200 = vmatpush1.bf16.xpose.msra.mxu0 0
    %2201 = vmatprep.subr.bf16.mxu0 0
    %2202 = vmatpush1.bf16.xpose.msra.mxu0 %v2185
    %2203 = vmatprep.subr.bf16.mxu0 0
    %2204 = vmatpush2.bf16.xpose.msra.mxu0 0
    %2205 = vmatprep.subr.bf16.mxu0 0
    %2206 = vmatpush2.bf16.xpose.msra.mxu0 0
    %2207 = vmatprep.subr.bf16.mxu0 0
    %2208 = vmatpush2.bf16.xpose.msra.mxu0 0
    %2209 = vmatprep.subr.bf16.mxu0 0
    %2210 = vmatpush2.bf16.xpose.msra.mxu0 0
    %2211 = vmatprep.subr.bf16.mxu0 0
    %2212 = vmatpush2.bf16.xpose.msra.mxu0 0
    %2213 = vmatprep.subr.bf16.mxu0 0
    %2214 = vmatpush2.bf16.xpose.msra.mxu0 0
    %2215 = vmatprep.subr.bf16.mxu0 0
    %2216 = vmatpush2.bf16.xpose.msra.mxu0 0
    %2217 = vmatprep.subr.bf16.mxu0 0
    %2218 = vmatpush2.bf16.xpose.msra.mxu0 0
    %2219 = vmatprep.mubr.bf16.mxu0 0
    %2220 = vmatmul.mubr.bf16.gmra.mxu0 %v2182
    %v2221 = vpop.f32.mrf.mxu0
    %v2222 = vadd.f32 0.0, %v2221
    %v2223 = vpop.f32.mrf.mxu0
    %v2224 = vpop.f32.mrf.mxu0
    %v2225 = vpop.f32.mrf.mxu0
    %2226 = vdwg.mxu0
    %v2227 = vmul.f32 %v2222, 0.35355338
    %v2228 = vadd.f32 %v2227, %v1698
    %v2229 = vsel %vm234, %v2228, -inf
    %2230 = vmax.xlane.f32.xlu0 %v2229
    %v2231 = vpop.xlane.xlu0 %2230
    %v2232 = vsub.f32 %v2228, %v2231
    %v2233 = vmul.f32 %v2232, 1.442695
    %v2234 = vpow.pop %v2233
    %v2235 = vsel %vm234, %v2234, 0.0
    %2236 = vadd.xlane.f32.xlu0 %v2235
    %v2237 = vpop.xlane.xlu0 %2236
    %v2238 = vrcp.pop %v2237
    %v2239 = vmul.f32 %v2234, %v2238
    %v2240 = vpack.c.bf16 %v2239, %v2239
    %2241 = vrot.lane.b32.xlu0 %v1700, 72
    %v2242 = vpop.permute.xlu0 %2241
    %v2244 = vsel %vm234, %v2240, 0
    %v2247 = vsel %vm300, %v2242, 0
    %2249 = vmatprep.subr.bf16.mxu0 0
    %2250 = vmatpush1.bf16.msra.mxu0 0
    %2251 = vmatprep.subr.bf16.mxu0 0
    %2252 = vmatpush1.bf16.msra.mxu0 0
    %2253 = vmatprep.subr.bf16.mxu0 0
    %2254 = vmatpush1.bf16.msra.mxu0 0
    %2255 = vmatprep.subr.bf16.mxu0 0
    %2256 = vmatpush1.bf16.msra.mxu0 0
    %2257 = vmatprep.subr.bf16.mxu0 0
    %2258 = vmatpush1.bf16.msra.mxu0 0
    %2259 = vmatprep.subr.bf16.mxu0 0
    %2260 = vmatpush1.bf16.msra.mxu0 0
    %2261 = vmatprep.subr.bf16.mxu0 0
    %2262 = vmatpush1.bf16.msra.mxu0 0
    %2263 = vmatprep.subr.bf16.mxu0 0
    %2264 = vmatpush1.bf16.msra.mxu0 %v2247
    %2265 = vmatprep.subr.bf16.mxu0 0
    %2266 = vmatpush2.bf16.msra.mxu0 0
    %2267 = vmatprep.subr.bf16.mxu0 0
    %2268 = vmatpush2.bf16.msra.mxu0 0
    %2269 = vmatprep.subr.bf16.mxu0 0
    %2270 = vmatpush2.bf16.msra.mxu0 0
    %2271 = vmatprep.subr.bf16.mxu0 0
    %2272 = vmatpush2.bf16.msra.mxu0 0
    %2273 = vmatprep.subr.bf16.mxu0 0
    %2274 = vmatpush2.bf16.msra.mxu0 0
    %2275 = vmatprep.subr.bf16.mxu0 0
    %2276 = vmatpush2.bf16.msra.mxu0 0
    %2277 = vmatprep.subr.bf16.mxu0 0
    %2278 = vmatpush2.bf16.msra.mxu0 0
    %2279 = vmatprep.subr.bf16.mxu0 0
    %2280 = vmatpush2.bf16.msra.mxu0 0
    %2281 = vmatprep.mubr.bf16.mxu0 0
    %2282 = vmatmul.mubr.bf16.gmra.mxu0 %v2244
    %v2283 = vpop.f32.mrf.mxu0
    %v2284 = vadd.f32 0.0, %v2283
    %v2285 = vpop.f32.mrf.mxu0
    %v2286 = vpop.f32.mrf.mxu0
    %v2287 = vpop.f32.mrf.mxu0
    %2288 = vdwg.mxu0
    %v2289 = vpack.c.bf16 %v2284, %v2284
    %v2291 = vsel %vm234, %v2289, 0
    %v2294 = vsel %vm300, %v1695, 0
    %2296 = vmatprep.subr.bf16.mxu0 0
    %2297 = vmatpush1.bf16.msra.mxu0 0
    %2298 = vmatprep.subr.bf16.mxu0 0
    %2299 = vmatpush1.bf16.msra.mxu0 0
    %2300 = vmatprep.subr.bf16.mxu0 0
    %2301 = vmatpush1.bf16.msra.mxu0 0
    %2302 = vmatprep.subr.bf16.mxu0 0
    %2303 = vmatpush1.bf16.msra.mxu0 0
    %2304 = vmatprep.subr.bf16.mxu0 0
    %2305 = vmatpush1.bf16.msra.mxu0 0
    %2306 = vmatprep.subr.bf16.mxu0 0
    %2307 = vmatpush1.bf16.msra.mxu0 0
    %2308 = vmatprep.subr.bf16.mxu0 0
    %2309 = vmatpush1.bf16.msra.mxu0 0
    %2310 = vmatprep.subr.bf16.mxu0 0
    %2311 = vmatpush1.bf16.msra.mxu0 %v2294
    %2312 = vmatprep.subr.bf16.mxu0 0
    %2313 = vmatpush2.bf16.msra.mxu0 0
    %2314 = vmatprep.subr.bf16.mxu0 0
    %2315 = vmatpush2.bf16.msra.mxu0 0
    %2316 = vmatprep.subr.bf16.mxu0 0
    %2317 = vmatpush2.bf16.msra.mxu0 0
    %2318 = vmatprep.subr.bf16.mxu0 0
    %2319 = vmatpush2.bf16.msra.mxu0 0
    %2320 = vmatprep.subr.bf16.mxu0 0
    %2321 = vmatpush2.bf16.msra.mxu0 0
    %2322 = vmatprep.subr.bf16.mxu0 0
    %2323 = vmatpush2.bf16.msra.mxu0 0
    %2324 = vmatprep.subr.bf16.mxu0 0
    %2325 = vmatpush2.bf16.msra.mxu0 0
    %2326 = vmatprep.subr.bf16.mxu0 0
    %2327 = vmatpush2.bf16.msra.mxu0 0
    %2328 = vmatprep.mubr.bf16.mxu0 0
    %2329 = vmatmul.mubr.bf16.gmra.mxu0 %v2291
    %v2330 = vpop.f32.mrf.mxu0
    %v2331 = vadd.f32 0.0, %v2330
    %v2332 = vpop.f32.mrf.mxu0
    %v2333 = vpop.f32.mrf.mxu0
    %v2334 = vpop.f32.mrf.mxu0
    %2335 = vdwg.mxu0
    %v2336 = vadd.f32 %v2176, %v2331
    %v2337 = vsub.f32 %v100, 1.0
    %v2338 = vmul.f32 %v2337, 1e+09
    %v2339 = vpack.c.bf16 %v1623, %v1623
    %v2340 = vpack.c.bf16 %v1689, %v1689
    %v2342 = vsel %vm234, %v2339, 0
    %v2345 = vsel %vm234, %v2340, 0
    %2347 = vmatprep.subr.bf16.mxu0 0
    %2348 = vmatpush1.bf16.xpose.msra.mxu0 0
    %2349 = vmatprep.subr.bf16.mxu0 0
    %2350 = vmatpush1.bf16.xpose.msra.mxu0 0
    %2351 = vmatprep.subr.bf16.mxu0 0
    %2352 = vmatpush1.bf16.xpose.msra.mxu0 0
    %2353 = vmatprep.subr.bf16.mxu0 0
    %2354 = vmatpush1.bf16.xpose.msra.mxu0 0
    %2355 = vmatprep.subr.bf16.mxu0 0
    %2356 = vmatpush1.bf16.xpose.msra.mxu0 0
    %2357 = vmatprep.subr.bf16.mxu0 0
    %2358 = vmatpush1.bf16.xpose.msra.mxu0 0
    %2359 = vmatprep.subr.bf16.mxu0 0
    %2360 = vmatpush1.bf16.xpose.msra.mxu0 0
    %2361 = vmatprep.subr.bf16.mxu0 0
    %2362 = vmatpush1.bf16.xpose.msra.mxu0 %v2345
    %2363 = vmatprep.subr.bf16.mxu0 0
    %2364 = vmatpush2.bf16.xpose.msra.mxu0 0
    %2365 = vmatprep.subr.bf16.mxu0 0
    %2366 = vmatpush2.bf16.xpose.msra.mxu0 0
    %2367 = vmatprep.subr.bf16.mxu0 0
    %2368 = vmatpush2.bf16.xpose.msra.mxu0 0
    %2369 = vmatprep.subr.bf16.mxu0 0
    %2370 = vmatpush2.bf16.xpose.msra.mxu0 0
    %2371 = vmatprep.subr.bf16.mxu0 0
    %2372 = vmatpush2.bf16.xpose.msra.mxu0 0
    %2373 = vmatprep.subr.bf16.mxu0 0
    %2374 = vmatpush2.bf16.xpose.msra.mxu0 0
    %2375 = vmatprep.subr.bf16.mxu0 0
    %2376 = vmatpush2.bf16.xpose.msra.mxu0 0
    %2377 = vmatprep.subr.bf16.mxu0 0
    %2378 = vmatpush2.bf16.xpose.msra.mxu0 0
    %2379 = vmatprep.mubr.bf16.mxu0 0
    %2380 = vmatmul.mubr.bf16.gmra.mxu0 %v2342
    %v2381 = vpop.f32.mrf.mxu0
    %v2382 = vadd.f32 0.0, %v2381
    %v2383 = vpop.f32.mrf.mxu0
    %v2384 = vpop.f32.mrf.mxu0
    %v2385 = vpop.f32.mrf.mxu0
    %2386 = vdwg.mxu0
    %v2387 = vmul.f32 %v2382, 0.35355338
    %v2388 = vadd.f32 %v2387, %v2338
    %v2389 = vsel %vm234, %v2388, -inf
    %2390 = vmax.xlane.f32.xlu0 %v2389
    %v2391 = vpop.xlane.xlu0 %2390
    %v2392 = vsub.f32 %v2388, %v2391
    %v2393 = vmul.f32 %v2392, 1.442695
    %v2394 = vpow.pop %v2393
    %v2395 = vsel %vm234, %v2394, 0.0
    %2396 = vadd.xlane.f32.xlu0 %v2395
    %v2397 = vpop.xlane.xlu0 %2396
    %v2398 = vrcp.pop %v2397
    %v2399 = vmul.f32 %v2394, %v2398
    %v2400 = vpack.c.bf16 %v2399, %v2399
    %2402 = vrot.lane.b32.xlu0 %v2340, 96
    %v2403 = vpop.permute.xlu0 %2402
    %v2405 = vsel %vm234, %v2400, 0
    %v2408 = vsel %vm300, %v2403, 0
    %2410 = vmatprep.subr.bf16.mxu0 0
    %2411 = vmatpush1.bf16.msra.mxu0 0
    %2412 = vmatprep.subr.bf16.mxu0 0
    %2413 = vmatpush1.bf16.msra.mxu0 0
    %2414 = vmatprep.subr.bf16.mxu0 0
    %2415 = vmatpush1.bf16.msra.mxu0 0
    %2416 = vmatprep.subr.bf16.mxu0 0
    %2417 = vmatpush1.bf16.msra.mxu0 0
    %2418 = vmatprep.subr.bf16.mxu0 0
    %2419 = vmatpush1.bf16.msra.mxu0 0
    %2420 = vmatprep.subr.bf16.mxu0 0
    %2421 = vmatpush1.bf16.msra.mxu0 0
    %2422 = vmatprep.subr.bf16.mxu0 0
    %2423 = vmatpush1.bf16.msra.mxu0 0
    %2424 = vmatprep.subr.bf16.mxu0 0
    %2425 = vmatpush1.bf16.msra.mxu0 %v2408
    %2426 = vmatprep.subr.bf16.mxu0 0
    %2427 = vmatpush2.bf16.msra.mxu0 0
    %2428 = vmatprep.subr.bf16.mxu0 0
    %2429 = vmatpush2.bf16.msra.mxu0 0
    %2430 = vmatprep.subr.bf16.mxu0 0
    %2431 = vmatpush2.bf16.msra.mxu0 0
    %2432 = vmatprep.subr.bf16.mxu0 0
    %2433 = vmatpush2.bf16.msra.mxu0 0
    %2434 = vmatprep.subr.bf16.mxu0 0
    %2435 = vmatpush2.bf16.msra.mxu0 0
    %2436 = vmatprep.subr.bf16.mxu0 0
    %2437 = vmatpush2.bf16.msra.mxu0 0
    %2438 = vmatprep.subr.bf16.mxu0 0
    %2439 = vmatpush2.bf16.msra.mxu0 0
    %2440 = vmatprep.subr.bf16.mxu0 0
    %2441 = vmatpush2.bf16.msra.mxu0 0
    %2442 = vmatprep.mubr.bf16.mxu0 0
    %2443 = vmatmul.mubr.bf16.gmra.mxu0 %v2405
    %v2444 = vpop.f32.mrf.mxu0
    %v2445 = vadd.f32 0.0, %v2444
    %v2446 = vpop.f32.mrf.mxu0
    %v2447 = vpop.f32.mrf.mxu0
    %v2448 = vpop.f32.mrf.mxu0
    %2449 = vdwg.mxu0
    %v2450 = vpack.c.bf16 %v2445, %v2445
    %2452 = vrot.lane.b32.xlu0 %v2339, 120
    %v2453 = vpop.permute.xlu0 %2452
    %2454 = vrot.lane.b32.xlu0 %v2340, 120
    %v2455 = vpop.permute.xlu0 %2454
    %v2457 = vsel %vm234, %v2453, 0
    %v2460 = vsel %vm234, %v2455, 0
    %2462 = vmatprep.subr.bf16.mxu0 0
    %2463 = vmatpush1.bf16.xpose.msra.mxu0 0
    %2464 = vmatprep.subr.bf16.mxu0 0
    %2465 = vmatpush1.bf16.xpose.msra.mxu0 0
    %2466 = vmatprep.subr.bf16.mxu0 0
    %2467 = vmatpush1.bf16.xpose.msra.mxu0 0
    %2468 = vmatprep.subr.bf16.mxu0 0
    %2469 = vmatpush1.bf16.xpose.msra.mxu0 0
    %2470 = vmatprep.subr.bf16.mxu0 0
    %2471 = vmatpush1.bf16.xpose.msra.mxu0 0
    %2472 = vmatprep.subr.bf16.mxu0 0
    %2473 = vmatpush1.bf16.xpose.msra.mxu0 0
    %2474 = vmatprep.subr.bf16.mxu0 0
    %2475 = vmatpush1.bf16.xpose.msra.mxu0 0
    %2476 = vmatprep.subr.bf16.mxu0 0
    %2477 = vmatpush1.bf16.xpose.msra.mxu0 %v2460
    %2478 = vmatprep.subr.bf16.mxu0 0
    %2479 = vmatpush2.bf16.xpose.msra.mxu0 0
    %2480 = vmatprep.subr.bf16.mxu0 0
    %2481 = vmatpush2.bf16.xpose.msra.mxu0 0
    %2482 = vmatprep.subr.bf16.mxu0 0
    %2483 = vmatpush2.bf16.xpose.msra.mxu0 0
    %2484 = vmatprep.subr.bf16.mxu0 0
    %2485 = vmatpush2.bf16.xpose.msra.mxu0 0
    %2486 = vmatprep.subr.bf16.mxu0 0
    %2487 = vmatpush2.bf16.xpose.msra.mxu0 0
    %2488 = vmatprep.subr.bf16.mxu0 0
    %2489 = vmatpush2.bf16.xpose.msra.mxu0 0
    %2490 = vmatprep.subr.bf16.mxu0 0
    %2491 = vmatpush2.bf16.xpose.msra.mxu0 0
    %2492 = vmatprep.subr.bf16.mxu0 0
    %2493 = vmatpush2.bf16.xpose.msra.mxu0 0
    %2494 = vmatprep.mubr.bf16.mxu0 0
    %2495 = vmatmul.mubr.bf16.gmra.mxu0 %v2457
    %v2496 = vpop.f32.mrf.mxu0
    %v2497 = vadd.f32 0.0, %v2496
    %v2498 = vpop.f32.mrf.mxu0
    %v2499 = vpop.f32.mrf.mxu0
    %v2500 = vpop.f32.mrf.mxu0
    %2501 = vdwg.mxu0
    %v2502 = vmul.f32 %v2497, 0.35355338
    %v2503 = vadd.f32 %v2502, %v2338
    %v2504 = vsel %vm234, %v2503, -inf
    %2505 = vmax.xlane.f32.xlu0 %v2504
    %v2506 = vpop.xlane.xlu0 %2505
    %v2507 = vsub.f32 %v2503, %v2506
    %v2508 = vmul.f32 %v2507, 1.442695
    %v2509 = vpow.pop %v2508
    %v2510 = vsel %vm234, %v2509, 0.0
    %2511 = vadd.xlane.f32.xlu0 %v2510
    %v2512 = vpop.xlane.xlu0 %2511
    %v2513 = vrcp.pop %v2512
    %v2514 = vmul.f32 %v2509, %v2513
    %v2515 = vpack.c.bf16 %v2514, %v2514
    %2516 = vrot.lane.b32.xlu0 %v2340, 88
    %v2517 = vpop.permute.xlu0 %2516
    %v2519 = vsel %vm234, %v2515, 0
    %v2522 = vsel %vm300, %v2517, 0
    %2524 = vmatprep.subr.bf16.mxu0 0
    %2525 = vmatpush1.bf16.msra.mxu0 0
    %2526 = vmatprep.subr.bf16.mxu0 0
    %2527 = vmatpush1.bf16.msra.mxu0 0
    %2528 = vmatprep.subr.bf16.mxu0 0
    %2529 = vmatpush1.bf16.msra.mxu0 0
    %2530 = vmatprep.subr.bf16.mxu0 0
    %2531 = vmatpush1.bf16.msra.mxu0 0
    %2532 = vmatprep.subr.bf16.mxu0 0
    %2533 = vmatpush1.bf16.msra.mxu0 0
    %2534 = vmatprep.subr.bf16.mxu0 0
    %2535 = vmatpush1.bf16.msra.mxu0 0
    %2536 = vmatprep.subr.bf16.mxu0 0
    %2537 = vmatpush1.bf16.msra.mxu0 0
    %2538 = vmatprep.subr.bf16.mxu0 0
    %2539 = vmatpush1.bf16.msra.mxu0 %v2522
    %2540 = vmatprep.subr.bf16.mxu0 0
    %2541 = vmatpush2.bf16.msra.mxu0 0
    %2542 = vmatprep.subr.bf16.mxu0 0
    %2543 = vmatpush2.bf16.msra.mxu0 0
    %2544 = vmatprep.subr.bf16.mxu0 0
    %2545 = vmatpush2.bf16.msra.mxu0 0
    %2546 = vmatprep.subr.bf16.mxu0 0
    %2547 = vmatpush2.bf16.msra.mxu0 0
    %2548 = vmatprep.subr.bf16.mxu0 0
    %2549 = vmatpush2.bf16.msra.mxu0 0
    %2550 = vmatprep.subr.bf16.mxu0 0
    %2551 = vmatpush2.bf16.msra.mxu0 0
    %2552 = vmatprep.subr.bf16.mxu0 0
    %2553 = vmatpush2.bf16.msra.mxu0 0
    %2554 = vmatprep.subr.bf16.mxu0 0
    %2555 = vmatpush2.bf16.msra.mxu0 0
    %2556 = vmatprep.mubr.bf16.mxu0 0
    %2557 = vmatmul.mubr.bf16.gmra.mxu0 %v2519
    %v2558 = vpop.f32.mrf.mxu0
    %v2559 = vadd.f32 0.0, %v2558
    %v2560 = vpop.f32.mrf.mxu0
    %v2561 = vpop.f32.mrf.mxu0
    %v2562 = vpop.f32.mrf.mxu0
    %2563 = vdwg.mxu0
    %v2564 = vpack.c.bf16 %v2559, %v2559
    %v2566 = vsel %vm234, %v2564, 0
    %2568 = vmatprep.subr.bf16.mxu0 0
    %2569 = vmatpush1.bf16.msra.mxu0 0
    %2570 = vmatprep.subr.bf16.mxu0 0
    %2571 = vmatpush1.bf16.msra.mxu0 0
    %2572 = vmatprep.subr.bf16.mxu0 0
    %2573 = vmatpush1.bf16.msra.mxu0 0
    %2574 = vmatprep.subr.bf16.mxu0 0
    %2575 = vmatpush1.bf16.msra.mxu0 0
    %2576 = vmatprep.subr.bf16.mxu0 0
    %2577 = vmatpush1.bf16.msra.mxu0 0
    %2578 = vmatprep.subr.bf16.mxu0 0
    %2579 = vmatpush1.bf16.msra.mxu0 0
    %2580 = vmatprep.subr.bf16.mxu0 0
    %2581 = vmatpush1.bf16.msra.mxu0 0
    %2582 = vmatprep.subr.bf16.mxu0 0
    %2583 = vmatpush1.bf16.msra.mxu0 %v1929
    %2584 = vmatprep.subr.bf16.mxu0 0
    %2585 = vmatpush2.bf16.msra.mxu0 0
    %2586 = vmatprep.subr.bf16.mxu0 0
    %2587 = vmatpush2.bf16.msra.mxu0 0
    %2588 = vmatprep.subr.bf16.mxu0 0
    %2589 = vmatpush2.bf16.msra.mxu0 0
    %2590 = vmatprep.subr.bf16.mxu0 0
    %2591 = vmatpush2.bf16.msra.mxu0 0
    %2592 = vmatprep.subr.bf16.mxu0 0
    %2593 = vmatpush2.bf16.msra.mxu0 0
    %2594 = vmatprep.subr.bf16.mxu0 0
    %2595 = vmatpush2.bf16.msra.mxu0 0
    %2596 = vmatprep.subr.bf16.mxu0 0
    %2597 = vmatpush2.bf16.msra.mxu0 0
    %2598 = vmatprep.subr.bf16.mxu0 0
    %2599 = vmatpush2.bf16.msra.mxu0 0
    %2600 = vmatprep.mubr.bf16.mxu0 0
    %2601 = vmatmul.mubr.bf16.gmra.mxu0 %v2566
    %v2602 = vpop.f32.mrf.mxu0
    %v2603 = vadd.f32 0.0, %v2602
    %v2604 = vpop.f32.mrf.mxu0
    %v2605 = vpop.f32.mrf.mxu0
    %v2606 = vpop.f32.mrf.mxu0
    %2607 = vdwg.mxu0
    %v2609 = vsel %vm234, %v2450, 0
    %2611 = vmatprep.subr.bf16.mxu0 0
    %2612 = vmatpush1.bf16.msra.mxu0 0
    %2613 = vmatprep.subr.bf16.mxu0 0
    %2614 = vmatpush1.bf16.msra.mxu0 0
    %2615 = vmatprep.subr.bf16.mxu0 0
    %2616 = vmatpush1.bf16.msra.mxu0 0
    %2617 = vmatprep.subr.bf16.mxu0 0
    %2618 = vmatpush1.bf16.msra.mxu0 0
    %2619 = vmatprep.subr.bf16.mxu0 0
    %2620 = vmatpush1.bf16.msra.mxu0 0
    %2621 = vmatprep.subr.bf16.mxu0 0
    %2622 = vmatpush1.bf16.msra.mxu0 0
    %2623 = vmatprep.subr.bf16.mxu0 0
    %2624 = vmatpush1.bf16.msra.mxu0 0
    %2625 = vmatprep.subr.bf16.mxu0 0
    %2626 = vmatpush1.bf16.msra.mxu0 %v1975
    %2627 = vmatprep.subr.bf16.mxu0 0
    %2628 = vmatpush2.bf16.msra.mxu0 0
    %2629 = vmatprep.subr.bf16.mxu0 0
    %2630 = vmatpush2.bf16.msra.mxu0 0
    %2631 = vmatprep.subr.bf16.mxu0 0
    %2632 = vmatpush2.bf16.msra.mxu0 0
    %2633 = vmatprep.subr.bf16.mxu0 0
    %2634 = vmatpush2.bf16.msra.mxu0 0
    %2635 = vmatprep.subr.bf16.mxu0 0
    %2636 = vmatpush2.bf16.msra.mxu0 0
    %2637 = vmatprep.subr.bf16.mxu0 0
    %2638 = vmatpush2.bf16.msra.mxu0 0
    %2639 = vmatprep.subr.bf16.mxu0 0
    %2640 = vmatpush2.bf16.msra.mxu0 0
    %2641 = vmatprep.subr.bf16.mxu0 0
    %2642 = vmatpush2.bf16.msra.mxu0 0
    %2643 = vmatprep.mubr.bf16.mxu0 0
    %2644 = vmatmul.mubr.bf16.gmra.mxu0 %v2609
    %v2645 = vpop.f32.mrf.mxu0
    %v2646 = vadd.f32 %v2603, %v2645
    %v2647 = vpop.f32.mrf.mxu0
    %v2648 = vpop.f32.mrf.mxu0
    %v2649 = vpop.f32.mrf.mxu0
    %2650 = vdwg.mxu0
    %2651 = vrot.lane.b32.xlu0 %v2339, 112
    %v2652 = vpop.permute.xlu0 %2651
    %2653 = vrot.lane.b32.xlu0 %v2340, 112
    %v2654 = vpop.permute.xlu0 %2653
    %v2656 = vsel %vm234, %v2652, 0
    %v2659 = vsel %vm234, %v2654, 0
    %2661 = vmatprep.subr.bf16.mxu0 0
    %2662 = vmatpush1.bf16.xpose.msra.mxu0 0
    %2663 = vmatprep.subr.bf16.mxu0 0
    %2664 = vmatpush1.bf16.xpose.msra.mxu0 0
    %2665 = vmatprep.subr.bf16.mxu0 0
    %2666 = vmatpush1.bf16.xpose.msra.mxu0 0
    %2667 = vmatprep.subr.bf16.mxu0 0
    %2668 = vmatpush1.bf16.xpose.msra.mxu0 0
    %2669 = vmatprep.subr.bf16.mxu0 0
    %2670 = vmatpush1.bf16.xpose.msra.mxu0 0
    %2671 = vmatprep.subr.bf16.mxu0 0
    %2672 = vmatpush1.bf16.xpose.msra.mxu0 0
    %2673 = vmatprep.subr.bf16.mxu0 0
    %2674 = vmatpush1.bf16.xpose.msra.mxu0 0
    %2675 = vmatprep.subr.bf16.mxu0 0
    %2676 = vmatpush1.bf16.xpose.msra.mxu0 %v2659
    %2677 = vmatprep.subr.bf16.mxu0 0
    %2678 = vmatpush2.bf16.xpose.msra.mxu0 0
    %2679 = vmatprep.subr.bf16.mxu0 0
    %2680 = vmatpush2.bf16.xpose.msra.mxu0 0
    %2681 = vmatprep.subr.bf16.mxu0 0
    %2682 = vmatpush2.bf16.xpose.msra.mxu0 0
    %2683 = vmatprep.subr.bf16.mxu0 0
    %2684 = vmatpush2.bf16.xpose.msra.mxu0 0
    %2685 = vmatprep.subr.bf16.mxu0 0
    %2686 = vmatpush2.bf16.xpose.msra.mxu0 0
    %2687 = vmatprep.subr.bf16.mxu0 0
    %2688 = vmatpush2.bf16.xpose.msra.mxu0 0
    %2689 = vmatprep.subr.bf16.mxu0 0
    %2690 = vmatpush2.bf16.xpose.msra.mxu0 0
    %2691 = vmatprep.subr.bf16.mxu0 0
    %2692 = vmatpush2.bf16.xpose.msra.mxu0 0
    %2693 = vmatprep.mubr.bf16.mxu0 0
    %2694 = vmatmul.mubr.bf16.gmra.mxu0 %v2656
    %v2695 = vpop.f32.mrf.mxu0
    %v2696 = vadd.f32 0.0, %v2695
    %v2697 = vpop.f32.mrf.mxu0
    %v2698 = vpop.f32.mrf.mxu0
    %v2699 = vpop.f32.mrf.mxu0
    %2700 = vdwg.mxu0
    %v2701 = vmul.f32 %v2696, 0.35355338
    %v2702 = vadd.f32 %v2701, %v2338
    %v2703 = vsel %vm234, %v2702, -inf
    %2704 = vmax.xlane.f32.xlu0 %v2703
    %v2705 = vpop.xlane.xlu0 %2704
    %v2706 = vsub.f32 %v2702, %v2705
    %v2707 = vmul.f32 %v2706, 1.442695
    %v2708 = vpow.pop %v2707
    %v2709 = vsel %vm234, %v2708, 0.0
    %2710 = vadd.xlane.f32.xlu0 %v2709
    %v2711 = vpop.xlane.xlu0 %2710
    %v2712 = vrcp.pop %v2711
    %v2713 = vmul.f32 %v2708, %v2712
    %v2714 = vpack.c.bf16 %v2713, %v2713
    %2715 = vrot.lane.b32.xlu0 %v2340, 80
    %v2716 = vpop.permute.xlu0 %2715
    %v2718 = vsel %vm234, %v2714, 0
    %v2721 = vsel %vm300, %v2716, 0
    %2723 = vmatprep.subr.bf16.mxu0 0
    %2724 = vmatpush1.bf16.msra.mxu0 0
    %2725 = vmatprep.subr.bf16.mxu0 0
    %2726 = vmatpush1.bf16.msra.mxu0 0
    %2727 = vmatprep.subr.bf16.mxu0 0
    %2728 = vmatpush1.bf16.msra.mxu0 0
    %2729 = vmatprep.subr.bf16.mxu0 0
    %2730 = vmatpush1.bf16.msra.mxu0 0
    %2731 = vmatprep.subr.bf16.mxu0 0
    %2732 = vmatpush1.bf16.msra.mxu0 0
    %2733 = vmatprep.subr.bf16.mxu0 0
    %2734 = vmatpush1.bf16.msra.mxu0 0
    %2735 = vmatprep.subr.bf16.mxu0 0
    %2736 = vmatpush1.bf16.msra.mxu0 0
    %2737 = vmatprep.subr.bf16.mxu0 0
    %2738 = vmatpush1.bf16.msra.mxu0 %v2721
    %2739 = vmatprep.subr.bf16.mxu0 0
    %2740 = vmatpush2.bf16.msra.mxu0 0
    %2741 = vmatprep.subr.bf16.mxu0 0
    %2742 = vmatpush2.bf16.msra.mxu0 0
    %2743 = vmatprep.subr.bf16.mxu0 0
    %2744 = vmatpush2.bf16.msra.mxu0 0
    %2745 = vmatprep.subr.bf16.mxu0 0
    %2746 = vmatpush2.bf16.msra.mxu0 0
    %2747 = vmatprep.subr.bf16.mxu0 0
    %2748 = vmatpush2.bf16.msra.mxu0 0
    %2749 = vmatprep.subr.bf16.mxu0 0
    %2750 = vmatpush2.bf16.msra.mxu0 0
    %2751 = vmatprep.subr.bf16.mxu0 0
    %2752 = vmatpush2.bf16.msra.mxu0 0
    %2753 = vmatprep.subr.bf16.mxu0 0
    %2754 = vmatpush2.bf16.msra.mxu0 0
    %2755 = vmatprep.mubr.bf16.mxu0 0
    %2756 = vmatmul.mubr.bf16.gmra.mxu0 %v2718
    %v2757 = vpop.f32.mrf.mxu0
    %v2758 = vadd.f32 0.0, %v2757
    %v2759 = vpop.f32.mrf.mxu0
    %v2760 = vpop.f32.mrf.mxu0
    %v2761 = vpop.f32.mrf.mxu0
    %2762 = vdwg.mxu0
    %v2763 = vpack.c.bf16 %v2758, %v2758
    %v2765 = vsel %vm234, %v2763, 0
    %2767 = vmatprep.subr.bf16.mxu0 0
    %2768 = vmatpush1.bf16.msra.mxu0 0
    %2769 = vmatprep.subr.bf16.mxu0 0
    %2770 = vmatpush1.bf16.msra.mxu0 0
    %2771 = vmatprep.subr.bf16.mxu0 0
    %2772 = vmatpush1.bf16.msra.mxu0 0
    %2773 = vmatprep.subr.bf16.mxu0 0
    %2774 = vmatpush1.bf16.msra.mxu0 0
    %2775 = vmatprep.subr.bf16.mxu0 0
    %2776 = vmatpush1.bf16.msra.mxu0 0
    %2777 = vmatprep.subr.bf16.mxu0 0
    %2778 = vmatpush1.bf16.msra.mxu0 0
    %2779 = vmatprep.subr.bf16.mxu0 0
    %2780 = vmatpush1.bf16.msra.mxu0 0
    %2781 = vmatprep.subr.bf16.mxu0 0
    %2782 = vmatpush1.bf16.msra.mxu0 %v2134
    %2783 = vmatprep.subr.bf16.mxu0 0
    %2784 = vmatpush2.bf16.msra.mxu0 0
    %2785 = vmatprep.subr.bf16.mxu0 0
    %2786 = vmatpush2.bf16.msra.mxu0 0
    %2787 = vmatprep.subr.bf16.mxu0 0
    %2788 = vmatpush2.bf16.msra.mxu0 0
    %2789 = vmatprep.subr.bf16.mxu0 0
    %2790 = vmatpush2.bf16.msra.mxu0 0
    %2791 = vmatprep.subr.bf16.mxu0 0
    %2792 = vmatpush2.bf16.msra.mxu0 0
    %2793 = vmatprep.subr.bf16.mxu0 0
    %2794 = vmatpush2.bf16.msra.mxu0 0
    %2795 = vmatprep.subr.bf16.mxu0 0
    %2796 = vmatpush2.bf16.msra.mxu0 0
    %2797 = vmatprep.subr.bf16.mxu0 0
    %2798 = vmatpush2.bf16.msra.mxu0 0
    %2799 = vmatprep.mubr.bf16.mxu0 0
    %2800 = vmatmul.mubr.bf16.gmra.mxu0 %v2765
    %v2801 = vpop.f32.mrf.mxu0
    %v2802 = vadd.f32 0.0, %v2801
    %v2803 = vpop.f32.mrf.mxu0
    %v2804 = vpop.f32.mrf.mxu0
    %v2805 = vpop.f32.mrf.mxu0
    %2806 = vdwg.mxu0
    %v2807 = vadd.f32 %v2646, %v2802
    %2808 = vrot.lane.b32.xlu0 %v2339, 104
    %v2809 = vpop.permute.xlu0 %2808
    %2810 = vrot.lane.b32.xlu0 %v2340, 104
    %v2811 = vpop.permute.xlu0 %2810
    %v2813 = vsel %vm234, %v2809, 0
    %v2816 = vsel %vm234, %v2811, 0
    %2818 = vmatprep.subr.bf16.mxu0 0
    %2819 = vmatpush1.bf16.xpose.msra.mxu0 0
    %2820 = vmatprep.subr.bf16.mxu0 0
    %2821 = vmatpush1.bf16.xpose.msra.mxu0 0
    %2822 = vmatprep.subr.bf16.mxu0 0
    %2823 = vmatpush1.bf16.xpose.msra.mxu0 0
    %2824 = vmatprep.subr.bf16.mxu0 0
    %2825 = vmatpush1.bf16.xpose.msra.mxu0 0
    %2826 = vmatprep.subr.bf16.mxu0 0
    %2827 = vmatpush1.bf16.xpose.msra.mxu0 0
    %2828 = vmatprep.subr.bf16.mxu0 0
    %2829 = vmatpush1.bf16.xpose.msra.mxu0 0
    %2830 = vmatprep.subr.bf16.mxu0 0
    %2831 = vmatpush1.bf16.xpose.msra.mxu0 0
    %2832 = vmatprep.subr.bf16.mxu0 0
    %2833 = vmatpush1.bf16.xpose.msra.mxu0 %v2816
    %2834 = vmatprep.subr.bf16.mxu0 0
    %2835 = vmatpush2.bf16.xpose.msra.mxu0 0
    %2836 = vmatprep.subr.bf16.mxu0 0
    %2837 = vmatpush2.bf16.xpose.msra.mxu0 0
    %2838 = vmatprep.subr.bf16.mxu0 0
    %2839 = vmatpush2.bf16.xpose.msra.mxu0 0
    %2840 = vmatprep.subr.bf16.mxu0 0
    %2841 = vmatpush2.bf16.xpose.msra.mxu0 0
    %2842 = vmatprep.subr.bf16.mxu0 0
    %2843 = vmatpush2.bf16.xpose.msra.mxu0 0
    %2844 = vmatprep.subr.bf16.mxu0 0
    %2845 = vmatpush2.bf16.xpose.msra.mxu0 0
    %2846 = vmatprep.subr.bf16.mxu0 0
    %2847 = vmatpush2.bf16.xpose.msra.mxu0 0
    %2848 = vmatprep.subr.bf16.mxu0 0
    %2849 = vmatpush2.bf16.xpose.msra.mxu0 0
    %2850 = vmatprep.mubr.bf16.mxu0 0
    %2851 = vmatmul.mubr.bf16.gmra.mxu0 %v2813
    %v2852 = vpop.f32.mrf.mxu0
    %v2853 = vadd.f32 0.0, %v2852
    %v2854 = vpop.f32.mrf.mxu0
    %v2855 = vpop.f32.mrf.mxu0
    %v2856 = vpop.f32.mrf.mxu0
    %2857 = vdwg.mxu0
    %v2858 = vmul.f32 %v2853, 0.35355338
    %v2859 = vadd.f32 %v2858, %v2338
    %v2860 = vsel %vm234, %v2859, -inf
    %2861 = vmax.xlane.f32.xlu0 %v2860
    %v2862 = vpop.xlane.xlu0 %2861
    %v2863 = vsub.f32 %v2859, %v2862
    %v2864 = vmul.f32 %v2863, 1.442695
    %v2865 = vpow.pop %v2864
    %v2866 = vsel %vm234, %v2865, 0.0
    %2867 = vadd.xlane.f32.xlu0 %v2866
    %v2868 = vpop.xlane.xlu0 %2867
    %v2869 = vrcp.pop %v2868
    %v2870 = vmul.f32 %v2865, %v2869
    %v2871 = vpack.c.bf16 %v2870, %v2870
    %2872 = vrot.lane.b32.xlu0 %v2340, 72
    %v2873 = vpop.permute.xlu0 %2872
    %v2875 = vsel %vm234, %v2871, 0
    %v2878 = vsel %vm300, %v2873, 0
    %2880 = vmatprep.subr.bf16.mxu0 0
    %2881 = vmatpush1.bf16.msra.mxu0 0
    %2882 = vmatprep.subr.bf16.mxu0 0
    %2883 = vmatpush1.bf16.msra.mxu0 0
    %2884 = vmatprep.subr.bf16.mxu0 0
    %2885 = vmatpush1.bf16.msra.mxu0 0
    %2886 = vmatprep.subr.bf16.mxu0 0
    %2887 = vmatpush1.bf16.msra.mxu0 0
    %2888 = vmatprep.subr.bf16.mxu0 0
    %2889 = vmatpush1.bf16.msra.mxu0 0
    %2890 = vmatprep.subr.bf16.mxu0 0
    %2891 = vmatpush1.bf16.msra.mxu0 0
    %2892 = vmatprep.subr.bf16.mxu0 0
    %2893 = vmatpush1.bf16.msra.mxu0 0
    %2894 = vmatprep.subr.bf16.mxu0 0
    %2895 = vmatpush1.bf16.msra.mxu0 %v2878
    %2896 = vmatprep.subr.bf16.mxu0 0
    %2897 = vmatpush2.bf16.msra.mxu0 0
    %2898 = vmatprep.subr.bf16.mxu0 0
    %2899 = vmatpush2.bf16.msra.mxu0 0
    %2900 = vmatprep.subr.bf16.mxu0 0
    %2901 = vmatpush2.bf16.msra.mxu0 0
    %2902 = vmatprep.subr.bf16.mxu0 0
    %2903 = vmatpush2.bf16.msra.mxu0 0
    %2904 = vmatprep.subr.bf16.mxu0 0
    %2905 = vmatpush2.bf16.msra.mxu0 0
    %2906 = vmatprep.subr.bf16.mxu0 0
    %2907 = vmatpush2.bf16.msra.mxu0 0
    %2908 = vmatprep.subr.bf16.mxu0 0
    %2909 = vmatpush2.bf16.msra.mxu0 0
    %2910 = vmatprep.subr.bf16.mxu0 0
    %2911 = vmatpush2.bf16.msra.mxu0 0
    %2912 = vmatprep.mubr.bf16.mxu0 0
    %2913 = vmatmul.mubr.bf16.gmra.mxu0 %v2875
    %v2914 = vpop.f32.mrf.mxu0
    %v2915 = vadd.f32 0.0, %v2914
    %v2916 = vpop.f32.mrf.mxu0
    %v2917 = vpop.f32.mrf.mxu0
    %v2918 = vpop.f32.mrf.mxu0
    %2919 = vdwg.mxu0
    %v2920 = vpack.c.bf16 %v2915, %v2915
    %v2922 = vsel %vm234, %v2920, 0
    %2924 = vmatprep.subr.bf16.mxu0 0
    %2925 = vmatpush1.bf16.msra.mxu0 0
    %2926 = vmatprep.subr.bf16.mxu0 0
    %2927 = vmatpush1.bf16.msra.mxu0 0
    %2928 = vmatprep.subr.bf16.mxu0 0
    %2929 = vmatpush1.bf16.msra.mxu0 0
    %2930 = vmatprep.subr.bf16.mxu0 0
    %2931 = vmatpush1.bf16.msra.mxu0 0
    %2932 = vmatprep.subr.bf16.mxu0 0
    %2933 = vmatpush1.bf16.msra.mxu0 0
    %2934 = vmatprep.subr.bf16.mxu0 0
    %2935 = vmatpush1.bf16.msra.mxu0 0
    %2936 = vmatprep.subr.bf16.mxu0 0
    %2937 = vmatpush1.bf16.msra.mxu0 0
    %2938 = vmatprep.subr.bf16.mxu0 0
    %2939 = vmatpush1.bf16.msra.mxu0 %v2294
    %2940 = vmatprep.subr.bf16.mxu0 0
    %2941 = vmatpush2.bf16.msra.mxu0 0
    %2942 = vmatprep.subr.bf16.mxu0 0
    %2943 = vmatpush2.bf16.msra.mxu0 0
    %2944 = vmatprep.subr.bf16.mxu0 0
    %2945 = vmatpush2.bf16.msra.mxu0 0
    %2946 = vmatprep.subr.bf16.mxu0 0
    %2947 = vmatpush2.bf16.msra.mxu0 0
    %2948 = vmatprep.subr.bf16.mxu0 0
    %2949 = vmatpush2.bf16.msra.mxu0 0
    %2950 = vmatprep.subr.bf16.mxu0 0
    %2951 = vmatpush2.bf16.msra.mxu0 0
    %2952 = vmatprep.subr.bf16.mxu0 0
    %2953 = vmatpush2.bf16.msra.mxu0 0
    %2954 = vmatprep.subr.bf16.mxu0 0
    %2955 = vmatpush2.bf16.msra.mxu0 0
    %2956 = vmatprep.mubr.bf16.mxu0 0
    %2957 = vmatmul.mubr.bf16.gmra.mxu0 %v2922
    %v2958 = vpop.f32.mrf.mxu0
    %v2959 = vadd.f32 0.0, %v2958
    %v2960 = vpop.f32.mrf.mxu0
    %v2961 = vpop.f32.mrf.mxu0
    %v2962 = vpop.f32.mrf.mxu0
    %2963 = vdwg.mxu0
    %v2964 = vadd.f32 %v2807, %v2959
    %v2965 = vlaneseq
    %v2966 = vshrl.u32 %v2965, 7
    %v2967 = vsub.s32 0, %v2966
    %v2968 = vrot.slane %v1696, %v2967
    %v2969 = vadd.f32 %v2336, %v2968
    %v2970 = vadd.f32 %v2964, %v2968
    %v2971 = vadd.f32 %v1504, %v2969
    %v2972 = vadd.f32 %v1505, %v2970
    %v2973 = vld [vmem:[%s5 + $0x9] sm:$0x1]
    %v2974 = vld [vmem:[%s5 + $0xa] sm:$0x1]
    %v2975 = vsel %vm103, %v2971, 0.0
    %2976 = vadd.xlane.f32.xlu0 %v2975
    %v2977 = vpop.xlane.xlu0 %2976
    %v2978 = vsel %vm103, %v2972, 0.0
    %2979 = vadd.xlane.f32.xlu0 %v2978
    %v2980 = vpop.xlane.xlu0 %2979
    %v2981 = vmul.f32 %v2977, %v110
    %v2982 = vmul.f32 %v2980, %v110
    %v2983 = vsub.f32 %v2971, %v2981
    %v2984 = vsub.f32 %v2972, %v2982
    %v2985 = vmul.f32 %v2983, %v2983
    %v2986 = vmul.f32 %v2984, %v2984
    %v2987 = vsel %vm103, %v2985, 0.0
    %2988 = vadd.xlane.f32.xlu0 %v2987
    %v2989 = vpop.xlane.xlu0 %2988
    %v2990 = vsel %vm103, %v2986, 0.0
    %2991 = vadd.xlane.f32.xlu0 %v2990
    %v2992 = vpop.xlane.xlu0 %2991
    %v2993 = vmul.f32 %v2989, 0.032258064
    %v2994 = vmul.f32 %v2992, 0.032258064
    %v2995 = vrsqrt.pop %v2993
    %v2996 = vmul.f32 %v2993, %v2995
    %vm2997 = vcmp.eq.f32.partialorder %v2993, inf
    %v2998 = vsel %vm2997, %v2993, %v2996
    %vm2999 = vcmp.eq.f32.partialorder %v2993, 0.0
    %v3000 = vand.u32 %v2993, 2147483648
    %v3001 = vsel %vm2999, %v3000, %v2998
    %v3002 = vrsqrt.pop %v2994
    %v3003 = vmul.f32 %v2994, %v3002
    %vm3004 = vcmp.eq.f32.partialorder %v2994, inf
    %v3005 = vsel %vm3004, %v2994, %v3003
    %vm3006 = vcmp.eq.f32.partialorder %v2994, 0.0
    %v3007 = vand.u32 %v2994, 2147483648
    %v3008 = vsel %vm3006, %v3007, %v3005
    %v3009 = vadd.f32 %v3001, 1e-06
    %v3010 = vadd.f32 %v3008, 1e-06
    %v3011 = vrcp.pop %v3009
    %v3012 = vrcp.pop %v3010
    %v3013 = vlaneseq
    %v3014 = vshrl.u32 %v3013, 7
    %v3015 = vsub.s32 0, %v3014
    %v3016 = vrot.slane %v2973, %v3015
    %v3017 = vmul.f32 %v3016, %v2983
    %v3018 = vmul.f32 %v3016, %v2984
    %v3019 = vmul.f32 %v3017, %v3011
    %v3020 = vmul.f32 %v3018, %v3012
    %v3021 = vlaneseq
    %v3022 = vshrl.u32 %v3021, 7
    %v3023 = vsub.s32 0, %v3022
    %v3024 = vrot.slane %v2974, %v3023
    %v3025 = vadd.f32 %v3019, %v3024
    %v3026 = vadd.f32 %v3020, %v3024
    %v3027 = vpack.c.bf16 %v3026, %v3025
    %v3028 = vld [vmem:[#allocation10 + $0x50] sm:$0xf]
    %v3029 = vld [vmem:[#allocation10 + $0x54] sm:$0xf]
    %v3030 = vld [vmem:[#allocation10 + $0x58] sm:$0xf]
    %v3031 = vld [vmem:[#allocation10 + $0x5c] sm:$0xf]
    %v3032 = vld [vmem:[%s5 + $0xb] sm:$0x1]
    %v3033 = vlaneseq
    %v3034 = vshrl.u32 %v3033, 7
    %v3035 = vsub.s32 0, %v3034
    %v3036 = vrot.slane %v3032, %v3035
    %v3041 = vunpack.c.l.b16 %v3028
    %v3042 = vunpack.c.l.b16 %v3029
    %v3043 = vunpack.c.l.b16 %v3030
    %v3044 = vunpack.c.l.b16 %v3031
    %v3045 = vpack.c.b16 %v3042, %v3041
    %v3046 = vpack.c.b16 %v3044, %v3043
    %v3050 = vsel %vm103, %v3027, 0
    %3052 = vmatprep.subr.bf16.mxu0 0
    %3053 = vmatpush1.bf16.msra.mxu0 0
    %3054 = vmatprep.subr.bf16.mxu0 0
    %3055 = vmatpush1.bf16.msra.mxu0 0
    %3056 = vmatprep.subr.bf16.mxu0 0
    %3057 = vmatpush1.bf16.msra.mxu0 0
    %3058 = vmatprep.subr.bf16.mxu0 0
    %3059 = vmatpush1.bf16.msra.mxu0 0
    %3060 = vmatprep.subr.bf16.mxu0 0
    %3061 = vmatpush1.bf16.msra.mxu0 0
    %3062 = vmatprep.subr.bf16.mxu0 0
    %3063 = vmatpush1.bf16.msra.mxu0 0
    %3064 = vmatprep.subr.bf16.mxu0 0
    %3065 = vmatpush1.bf16.msra.mxu0 %v3046
    %3066 = vmatprep.subr.bf16.mxu0 0
    %3067 = vmatpush1.bf16.msra.mxu0 %v3045
    %3068 = vmatprep.subr.bf16.mxu0 0
    %3069 = vmatpush2.bf16.msra.mxu0 0
    %3070 = vmatprep.subr.bf16.mxu0 0
    %3071 = vmatpush2.bf16.msra.mxu0 0
    %3072 = vmatprep.subr.bf16.mxu0 0
    %3073 = vmatpush2.bf16.msra.mxu0 0
    %3074 = vmatprep.subr.bf16.mxu0 0
    %3075 = vmatpush2.bf16.msra.mxu0 0
    %3076 = vmatprep.subr.bf16.mxu0 0
    %3077 = vmatpush2.bf16.msra.mxu0 0
    %3078 = vmatprep.subr.bf16.mxu0 0
    %3079 = vmatpush2.bf16.msra.mxu0 0
    %3080 = vmatprep.subr.bf16.mxu0 0
    %3081 = vmatpush2.bf16.msra.mxu0 0
    %3082 = vmatprep.subr.bf16.mxu0 0
    %3083 = vmatpush2.bf16.msra.mxu0 0
    %3084 = vmatprep.mubr.bf16.mxu0 0
    %3085 = vmatmul.mubr.bf16.gmra.mxu0 %v3050
    %v3086 = vpop.f32.mrf.mxu0
    %v3087 = vadd.f32 %v3036, %v3086
    %v3088 = vpop.f32.mrf.mxu0
    %v3089 = vpop.f32.mrf.mxu0
    %v3090 = vadd.f32 %v3036, %v3089
    %v3091 = vpop.f32.mrf.mxu0
    %3092 = vdwg.mxu0
    %v3093 = vmax.f32 %v3087, 0.0
    %v3094 = vmax.f32 %v3090, 0.0
    %v3095 = vpack.c.bf16 %v3094, %v3093
    %v3096 = vld [vmem:[#allocation10 + $0x60] sm:$0xf]
    %v3097 = vld [vmem:[#allocation10 + $0x64] sm:$0xf]
    %v3098 = vld [vmem:[#allocation10 + $0x68] sm:$0xf]
    %v3099 = vld [vmem:[#allocation10 + $0x6c] sm:$0xf]
    %v3100 = vld [vmem:[#allocation10 + $0x70] sm:$0xf]
    %v3101 = vld [vmem:[#allocation10 + $0x74] sm:$0xf]
    %v3102 = vld [vmem:[#allocation10 + $0x78] sm:$0xf]
    %v3103 = vld [vmem:[#allocation10 + $0x7c] sm:$0xf]
    %v3112 = vunpack.c.l.b16 %v3096
    %v3113 = vunpack.c.l.b16 %v3097
    %v3114 = vunpack.c.l.b16 %v3098
    %v3115 = vunpack.c.l.b16 %v3099
    %v3116 = vunpack.c.l.b16 %v3100
    %v3117 = vunpack.c.l.b16 %v3101
    %v3118 = vunpack.c.l.b16 %v3102
    %v3119 = vunpack.c.l.b16 %v3103
    %v3120 = vpack.c.b16 %v3113, %v3112
    %v3121 = vpack.c.b16 %v3115, %v3114
    %v3122 = vpack.c.b16 %v3117, %v3116
    %v3123 = vpack.c.b16 %v3119, %v3118
    %vm3128 = vcmask 523264
    %v3130 = vsel %vm3128, %v3095, 0
    %3132 = vmatprep.subr.bf16.mxu0 0
    %3133 = vmatpush1.bf16.msra.mxu0 0
    %3134 = vmatprep.subr.bf16.mxu0 0
    %3135 = vmatpush1.bf16.msra.mxu0 0
    %3136 = vmatprep.subr.bf16.mxu0 0
    %3137 = vmatpush1.bf16.msra.mxu0 0
    %3138 = vmatprep.subr.bf16.mxu0 0
    %3139 = vmatpush1.bf16.msra.mxu0 0
    %3140 = vmatprep.subr.bf16.mxu0 0
    %3141 = vmatpush1.bf16.msra.mxu0 %v3123
    %3142 = vmatprep.subr.bf16.mxu0 0
    %3143 = vmatpush1.bf16.msra.mxu0 %v3122
    %3144 = vmatprep.subr.bf16.mxu0 0
    %3145 = vmatpush1.bf16.msra.mxu0 %v3121
    %3146 = vmatprep.subr.bf16.mxu0 0
    %3147 = vmatpush1.bf16.msra.mxu0 %v3120
    %3148 = vmatprep.subr.bf16.mxu0 0
    %3149 = vmatpush2.bf16.msra.mxu0 0
    %3150 = vmatprep.subr.bf16.mxu0 0
    %3151 = vmatpush2.bf16.msra.mxu0 0
    %3152 = vmatprep.subr.bf16.mxu0 0
    %3153 = vmatpush2.bf16.msra.mxu0 0
    %3154 = vmatprep.subr.bf16.mxu0 0
    %3155 = vmatpush2.bf16.msra.mxu0 0
    %3156 = vmatprep.subr.bf16.mxu0 0
    %3157 = vmatpush2.bf16.msra.mxu0 0
    %3158 = vmatprep.subr.bf16.mxu0 0
    %3159 = vmatpush2.bf16.msra.mxu0 0
    %3160 = vmatprep.subr.bf16.mxu0 0
    %3161 = vmatpush2.bf16.msra.mxu0 0
    %3162 = vmatprep.subr.bf16.mxu0 0
    %3163 = vmatpush2.bf16.msra.mxu0 0
    %3164 = vmatprep.mubr.bf16.mxu0 0
    %3165 = vmatmul.mubr.bf16.gmra.mxu0 %v3130
    %v3166 = vpop.f32.mrf.mxu0
    %v3167 = vadd.f32 0.0, %v3166
    %v3168 = vpop.f32.mrf.mxu0
    %v3169 = vpop.f32.mrf.mxu0
    %v3170 = vadd.f32 0.0, %v3169
    %v3171 = vpop.f32.mrf.mxu0
    %3172 = vdwg.mxu0
    %v3173 = vadd.f32 %v2971, %v3167
    %v3174 = vadd.f32 %v2972, %v3170
    %v3175 = vld [vmem:[%s5 + $0xc] sm:$0x1]
    %v3176 = vlaneseq
    %v3177 = vshrl.u32 %v3176, 7
    %v3178 = vsub.s32 0, %v3177
    %v3179 = vrot.slane %v3175, %v3178
    %v3180 = vadd.f32 %v3173, %v3179
    %v3181 = vadd.f32 %v3174, %v3179
    %3182 = vst.msk [vmem:[#allocation11] sm:$0xff] %vm103, %v3180
    %3183 = vst.msk [vmem:[#allocation11 + $0x8] sm:$0xff] %vm103, %v3181
    // Predicated region
    $region46: #{decoder_block.1} parent=1 // pred_check
      _
    $region47: #{decoder_block.1} parent=1 // pred_check_branch
      %3185 = sbr.rel (0) target = $region49
    $region48: #{decoder_block.1} parent=1 // pred_region
      %s3187 = ssub.s32 256, 256
      %3188 = vsyncadd [#allocation4], %s3187
      %s3189 = sshll.u32 [#allocation11], 4
      %s3190 = int_to_ptr.vmem [resolvable:$true] %s3189
      %3195 = dma.vmem_to_hbm [thread:$0]  %s3190, 256, %s6, [#allocation4], 128, 128, 8
    $region49: #{decoder_block.1} parent=1 // pred_fallthru
      _
    // Predicated region
    $region50: #{decoder_block.1} parent=1 // pred_check
      _
    $region51: #{decoder_block.1} parent=1 // pred_check_branch
      %3197 = sbr.rel (0) target = $region53
    $region52: #{decoder_block.1} parent=1 // pred_region
      %3198 = dma.done [#allocation4], 256
    $region53: #{decoder_block.1} parent=1 // pred_fallthru
      _
    %3199 = vsyncpa [#allocation3], 1
    %3200 = vsyncpa [#allocation6], 1
    %3201 = vsyncpa [#allocation9], 1
    %3202 = vsyncpa [#allocation4], 1

</llo_original>
